<compile_context>
chip_gen: v5e
topology: v5e:2x2
jax: 0.10.0
libtpu: 0.0.40
codegen_flags: <defaults>
</compile_context>

<pallas_src>
import functools

import jax
import jax.numpy as jnp
import numpy as np
from jax import lax
from jax.experimental import pallas as pl
from jax.experimental.pallas import tpu as pltpu


def _pixel_shuffle_kernel(x_ref, pw_ref, o_ref, *, scale, mat_dtype, precision):
    """One grid step handles (bc-tile, depth-tile, zd).

    x_ref : (blk_bc, s*s, blk_d, H, W)     channels (zh, zw) for this zd
    pw_ref: (s, W, W*s)                    column scatter, PW[zw, w, w*s+zw] = 1
    o_ref : (blk_bc, blk_d, 1, H, s*W*s)   rows = h, cols = zh*(W*s) + w*s + zw
    """
    s = scale
    blk_bc, _, blk_d, H, W = x_ref.shape
    M = blk_bc * blk_d * H
    Ws = W * s

    for zh in range(s):                      # s iterations (tiny static unroll)
        acc = None
        for zw in range(s):
            plane = x_ref[:, zh * s + zw]    # (blk_bc, blk_d, H, W)
            m2 = plane.reshape(M, W)         # view when H % 8 == 0
            if m2.dtype != mat_dtype:
                m2 = m2.astype(mat_dtype)
            # Batched column scatter on the MXU: (M, W) @ (W, W*s).
            t = jnp.dot(m2, pw_ref[zw],
                        preferred_element_type=jnp.float32,
                        precision=precision)
            # Exact: each output column is hit by exactly one zw (disjoint 0/1
            # columns), so the f32 adds never actually mix values.
            acc = t if acc is None else acc + t
        val = acc.astype(o_ref.dtype).reshape(blk_bc, blk_d, H, Ws)
        # Lane-aligned full-width chunk of the merged (zh, w') output columns.
        o_ref[:, :, 0, :, zh * Ws:(zh + 1) * Ws] = val


def _largest_divisor_leq(n, cap):
    cap = int(max(1, min(n, cap)))
    for d in range(cap, 0, -1):
        if n % d == 0:
            return d
    return 1


def _vmem_capacity_bytes():
    try:
        info = pltpu.get_tpu_info()
        cap = int(getattr(info, "vmem_capacity_bytes", 0) or 0)
        if cap > 0:
            return cap
    except Exception:
        pass
    return 64 * 1024 * 1024  # conservative fallback (v7x per-TensorCore size)


def pixel_shuffle_3d(x, scale):
    B, C, D, H, W = x.shape
    s = int(scale)
    assert C % (s ** 3) == 0, "channels must be divisible by scale**3"
    # TODO(synk): integer dtypes would need a copy/select path (the 0/1-matmul
    # permutation is only exact for floating-point inputs).
    assert jnp.issubdtype(x.dtype, jnp.floating), "float inputs only"
    n_out = C // (s ** 3)
    BC = B * n_out
    Ws = W * s
    itemsize = jnp.dtype(x.dtype).itemsize

    # Keep bf16/f32 native on the MXU; anything else goes through f32.
    if jnp.dtype(x.dtype) in (jnp.dtype(jnp.bfloat16), jnp.dtype(jnp.float32)):
        mat_dtype = x.dtype
    else:
        mat_dtype = jnp.float32
    # f32 needs HIGHEST so the selected values are not bf16-truncated by the
    # default multi-pass f32 matmul path; bf16 is exact at native precision.
    precision = (lax.Precision.HIGHEST
                 if jnp.dtype(mat_dtype) == jnp.dtype(jnp.float32) else None)

    # Exact 0/1 column-scatter matrices: PW[zw, w, w*s+zw] = 1.
    zw_i = jnp.arange(s)[:, None, None]
    w_i = jnp.arange(W)[None, :, None]
    col_i = jnp.arange(Ws)[None, None, :]
    pw = (col_i == w_i * s + zw_i).astype(mat_dtype)

    # ---- Generation-aware block sizing -------------------------------------
    # Budget = half of physical VMEM, capped at 64 MiB:
    #   v5e/v6e (128 MiB VMEM) -> 64 MiB limit, ~8 MiB blocks
    #   v7x     ( 64 MiB VMEM) -> 32 MiB limit, ~4-5 MiB blocks
    budget = int(min(_vmem_capacity_bytes() // 2, 64 * 1024 * 1024))
    # Resident estimate: 2x(in+out) double buffers + the f32 acc/t values
    # (4 bytes each, N = s*W lanes per input element / s) + slack.
    resident_factor = 4.0 + 8.0 / (s * itemsize) + 1.0
    block_target = int(min(8 * 1024 * 1024, budget / resident_factor))
    unit_bytes = s * s * H * W * itemsize            # per (bc, depth-slice)
    units = max(1, int(block_target // unit_bytes))
    blk_d = _largest_divisor_leq(D, units)           # no artificial cap
    blk_bc = _largest_divisor_leq(BC, max(1, units // blk_d))

    # Free re-views (metadata only): fold (B, n_out) -> BC, and present the
    # output as (BC, D, s, H, s*W*s) so zd / zh interleaves become pure DMA
    # addressing via the BlockSpec index_map.
    x2 = x.reshape(BC, s ** 3, D, H, W)
    grid = (BC // blk_bc, D // blk_d, s)

    kernel = functools.partial(_pixel_shuffle_kernel, scale=s,
                               mat_dtype=mat_dtype, precision=precision)

    out = pl.pallas_call(
        kernel,
        out_shape=jax.ShapeDtypeStruct((BC, D, s, H, s * Ws), x.dtype),
        grid_spec=pltpu.PrefetchScalarGridSpec(
            num_scalar_prefetch=0,
            grid=grid,
            in_specs=[
                # s^2 consecutive channels (all zh, zw for this zd),
                # blk_bc (b, co) pairs and blk_d depth slices per step.
                pl.BlockSpec((blk_bc, s * s, blk_d, H, W),
                             lambda i, dt, zd: (i, zd, dt, 0, 0)),
                # Grid-invariant scatter matrices (fetched once).
                pl.BlockSpec((s, W, Ws), lambda i, dt, zd: (0, 0, 0)),
            ],
            out_specs=pl.BlockSpec((blk_bc, blk_d, 1, H, s * Ws),
                                   lambda i, dt, zd: (i, dt, zd, 0, 0)),
        ),
        compiler_params=pltpu.CompilerParams(
            dimension_semantics=("parallel", "parallel", "parallel"),
            vmem_limit_bytes=budget,
        ),
        cost_estimate=pl.CostEstimate(
            flops=2 * x.size * W,            # 0/1 scatter MACs
            transcendentals=0,
            bytes_accessed=2 * x.size * itemsize,
        ),
    )(x2, pw)

    # Free reshape back to the NCDHW pixel-shuffled layout.
    return out.reshape(B, n_out, D * s, H * s, W * s)


def pixel_shuffle_3d_reference(x, scale):
    """Pure-JAX reference mirroring the PyTorch module exactly."""
    B, C, D, H, W = x.shape
    s = int(scale)
    n_out = C // (s ** 3)
    v = x.reshape(B, n_out, s, s, s, D, H, W)
    v = jnp.transpose(v, (0, 1, 5, 2, 6, 3, 7, 4))
    return v.reshape(B, n_out, D * s, H * s, W * s)


if __name__ == "__main__":
    key = jax.random.PRNGKey(0)
    k0, k1 = jax.random.split(key)
    scale = 2

    # f32: (B=2, C=16, D=4, H=8, W=64) -> out (2, 2, 8, 16, 128); W*s = 128 so
    # every store is a full unmasked lane slab.
    x = jax.random.normal(k0, (2, 16, 4, 8, 64), dtype=jnp.float32)
    out = jax.block_until_ready(pixel_shuffle_3d(x, scale))
    ref = jax.block_until_ready(pixel_shuffle_3d_reference(x, scale))
    assert out.shape == ref.shape and out.dtype == ref.dtype
    np.testing.assert_allclose(np.asarray(out), np.asarray(ref),
                               rtol=1e-6, atol=1e-6)

    # bf16 path (native bf16 MXU, f32 accumulation), different blocking.
    xb = jax.random.normal(k1, (1, 8, 2, 16, 64), dtype=jnp.bfloat16)
    outb = jax.block_until_ready(pixel_shuffle_3d(xb, scale))
    refb = jax.block_until_ready(pixel_shuffle_3d_reference(xb, scale))
    assert outb.shape == refb.shape and outb.dtype == refb.dtype
    np.testing.assert_allclose(np.asarray(outb, dtype=np.float32),
                               np.asarray(refb, dtype=np.float32),
                               rtol=1e-6, atol=1e-6)

    print("KERNEL_OK")
</pallas_src>

<mosaic_0001>
module attributes {stable_mosaic.version = 11 : i64} {
  func.func @_pixel_shuffle_kernel(%arg0: i32, %arg1: i32, %arg2: i32, %arg3: memref<4x4x4x8x64xf32, #tpu.memory_space<vmem>>, %arg4: memref<2x64x128xf32, #tpu.memory_space<vmem>>, %arg5: memref<4x4x1x8x256xf32, #tpu.memory_space<vmem>>) attributes {dimension_semantics = [#tpu.dimension_semantics<parallel>, #tpu.dimension_semantics<parallel>, #tpu.dimension_semantics<parallel>], iteration_bounds = array<i64: 1, 1, 2>, scalar_prefetch = 0 : i64, scratch_operands = 0 : i64, tpu.core_type = #tpu.core_type<tc>, window_params = [{transform_indices = @transform_0, window_bounds = array<i64: 4, 4, 4, 8, 64>}, {pipeline_mode = #tpu.pipeline_mode<synchronous>, transform_indices = @transform_1, window_bounds = array<i64: 2, 64, 128>}, {transform_indices = @transform_2, window_bounds = array<i64: 4, 4, 1, 8, 256>}]} {
    %c0 = arith.constant 0 : index
    %c0_0 = arith.constant 0 : index
    %c0_1 = arith.constant 0 : index
    %c0_2 = arith.constant 0 : index
    %c0_3 = arith.constant 0 : index
    %0 = vector.load %arg3[%c0, %c0_0, %c0_1, %c0_2, %c0_3] : memref<4x4x4x8x64xf32, #tpu.memory_space<vmem>>, vector<4x1x4x8x64xf32>
    %1 = vector.shape_cast %0 : vector<4x1x4x8x64xf32> to vector<4x4x8x64xf32>
    %2 = vector.shape_cast %1 : vector<4x4x8x64xf32> to vector<128x64xf32>
    %c0_4 = arith.constant 0 : index
    %c0_5 = arith.constant 0 : index
    %c0_6 = arith.constant 0 : index
    %3 = vector.load %arg4[%c0_4, %c0_5, %c0_6] : memref<2x64x128xf32, #tpu.memory_space<vmem>>, vector<1x64x128xf32>
    %4 = vector.shape_cast %3 : vector<1x64x128xf32> to vector<64x128xf32>
    %cst = arith.constant dense<0.000000e+00> : vector<128x128xf32>
    %5 = tpu.matmul %2, %4, %cst {dimension_numbers = #tpu.dot_dimension_numbers<[1], [0], [0], [1], [0, 0, 1, 1], [], []>, precision = #tpu.contract_precision<fp32>} : vector<128x64xf32>, vector<64x128xf32>, vector<128x128xf32> -> vector<128x128xf32>
    %c0_7 = arith.constant 0 : index
    %c1 = arith.constant 1 : index
    %c0_8 = arith.constant 0 : index
    %c0_9 = arith.constant 0 : index
    %c0_10 = arith.constant 0 : index
    %6 = vector.load %arg3[%c0_7, %c1, %c0_8, %c0_9, %c0_10] : memref<4x4x4x8x64xf32, #tpu.memory_space<vmem>>, vector<4x1x4x8x64xf32>
    %7 = vector.shape_cast %6 : vector<4x1x4x8x64xf32> to vector<4x4x8x64xf32>
    %8 = vector.shape_cast %7 : vector<4x4x8x64xf32> to vector<128x64xf32>
    %c1_11 = arith.constant 1 : index
    %c0_12 = arith.constant 0 : index
    %c0_13 = arith.constant 0 : index
    %9 = vector.load %arg4[%c1_11, %c0_12, %c0_13] : memref<2x64x128xf32, #tpu.memory_space<vmem>>, vector<1x64x128xf32>
    %10 = vector.shape_cast %9 : vector<1x64x128xf32> to vector<64x128xf32>
    %cst_14 = arith.constant dense<0.000000e+00> : vector<128x128xf32>
    %11 = tpu.matmul %8, %10, %cst_14 {dimension_numbers = #tpu.dot_dimension_numbers<[1], [0], [0], [1], [0, 0, 1, 1], [], []>, precision = #tpu.contract_precision<fp32>} : vector<128x64xf32>, vector<64x128xf32>, vector<128x128xf32> -> vector<128x128xf32>
    %12 = arith.addf %5, %11 : vector<128x128xf32>
    %13 = vector.shape_cast %12 : vector<128x128xf32> to vector<4x4x8x128xf32>
    %c0_15 = arith.constant 0 : index
    %c0_16 = arith.constant 0 : index
    %c0_17 = arith.constant 0 : index
    %c0_18 = arith.constant 0 : index
    %c0_19 = arith.constant 0 : index
    %14 = vector.load %arg5[%c0_15, %c0_16, %c0_17, %c0_18, %c0_19] : memref<4x4x1x8x256xf32, #tpu.memory_space<vmem>>, vector<4x4x1x8x128xf32>
    %15 = vector.shape_cast %14 : vector<4x4x1x8x128xf32> to vector<4x4x8x128xf32>
    %16 = vector.shape_cast %13 : vector<4x4x8x128xf32> to vector<4x4x1x8x128xf32>
    tpu.vector_store %arg5[%c0_15, %c0_16, %c0_17, %c0_18, %c0_19], %16 {strides = array<i32>} : memref<4x4x1x8x256xf32, #tpu.memory_space<vmem>>, vector<4x4x1x8x128xf32>,
    %c0_20 = arith.constant 0 : index
    %c2 = arith.constant 2 : index
    %c0_21 = arith.constant 0 : index
    %c0_22 = arith.constant 0 : index
    %c0_23 = arith.constant 0 : index
    %17 = vector.load %arg3[%c0_20, %c2, %c0_21, %c0_22, %c0_23] : memref<4x4x4x8x64xf32, #tpu.memory_space<vmem>>, vector<4x1x4x8x64xf32>
    %18 = vector.shape_cast %17 : vector<4x1x4x8x64xf32> to vector<4x4x8x64xf32>
    %19 = vector.shape_cast %18 : vector<4x4x8x64xf32> to vector<128x64xf32>
    %c0_24 = arith.constant 0 : index
    %c0_25 = arith.constant 0 : index
    %c0_26 = arith.constant 0 : index
    %20 = vector.load %arg4[%c0_24, %c0_25, %c0_26] : memref<2x64x128xf32, #tpu.memory_space<vmem>>, vector<1x64x128xf32>
    %21 = vector.shape_cast %20 : vector<1x64x128xf32> to vector<64x128xf32>
    %cst_27 = arith.constant dense<0.000000e+00> : vector<128x128xf32>
    %22 = tpu.matmul %19, %21, %cst_27 {dimension_numbers = #tpu.dot_dimension_numbers<[1], [0], [0], [1], [0, 0, 1, 1], [], []>, precision = #tpu.contract_precision<fp32>} : vector<128x64xf32>, vector<64x128xf32>, vector<128x128xf32> -> vector<128x128xf32>
    %c0_28 = arith.constant 0 : index
    %c3 = arith.constant 3 : index
    %c0_29 = arith.constant 0 : index
    %c0_30 = arith.constant 0 : index
    %c0_31 = arith.constant 0 : index
    %23 = vector.load %arg3[%c0_28, %c3, %c0_29, %c0_30, %c0_31] : memref<4x4x4x8x64xf32, #tpu.memory_space<vmem>>, vector<4x1x4x8x64xf32>
    %24 = vector.shape_cast %23 : vector<4x1x4x8x64xf32> to vector<4x4x8x64xf32>
    %25 = vector.shape_cast %24 : vector<4x4x8x64xf32> to vector<128x64xf32>
    %c1_32 = arith.constant 1 : index
    %c0_33 = arith.constant 0 : index
    %c0_34 = arith.constant 0 : index
    %26 = vector.load %arg4[%c1_32, %c0_33, %c0_34] : memref<2x64x128xf32, #tpu.memory_space<vmem>>, vector<1x64x128xf32>
    %27 = vector.shape_cast %26 : vector<1x64x128xf32> to vector<64x128xf32>
    %cst_35 = arith.constant dense<0.000000e+00> : vector<128x128xf32>
    %28 = tpu.matmul %25, %27, %cst_35 {dimension_numbers = #tpu.dot_dimension_numbers<[1], [0], [0], [1], [0, 0, 1, 1], [], []>, precision = #tpu.contract_precision<fp32>} : vector<128x64xf32>, vector<64x128xf32>, vector<128x128xf32> -> vector<128x128xf32>
    %29 = arith.addf %22, %28 : vector<128x128xf32>
    %30 = vector.shape_cast %29 : vector<128x128xf32> to vector<4x4x8x128xf32>
    %c0_36 = arith.constant 0 : index
    %c0_37 = arith.constant 0 : index
    %c0_38 = arith.constant 0 : index
    %c0_39 = arith.constant 0 : index
    %c128 = arith.constant 128 : index
    %31 = vector.load %arg5[%c0_36, %c0_37, %c0_38, %c0_39, %c128] : memref<4x4x1x8x256xf32, #tpu.memory_space<vmem>>, vector<4x4x1x8x128xf32>
    %32 = vector.shape_cast %31 : vector<4x4x1x8x128xf32> to vector<4x4x8x128xf32>
    %33 = vector.shape_cast %30 : vector<4x4x8x128xf32> to vector<4x4x1x8x128xf32>
    tpu.vector_store %arg5[%c0_36, %c0_37, %c0_38, %c0_39, %c128], %33 {strides = array<i32>} : memref<4x4x1x8x256xf32, #tpu.memory_space<vmem>>, vector<4x4x1x8x128xf32>,
    return
  }
  func.func @transform_0(%arg0: i32, %arg1: i32, %arg2: i32) -> (i32, i32, i32, i32, i32) {
    %c0_i32 = arith.constant 0 : i32
    %c0_i32_0 = arith.constant 0 : i32
    %c0_i32_1 = arith.constant 0 : i32
    return %arg0, %arg2, %arg1, %c0_i32, %c0_i32_0 : i32, i32, i32, i32, i32
  }
  func.func @transform_1(%arg0: i32, %arg1: i32, %arg2: i32) -> (i32, i32, i32) {
    %c0_i32 = arith.constant 0 : i32
    %c0_i32_0 = arith.constant 0 : i32
    %c0_i32_1 = arith.constant 0 : i32
    %c0_i32_2 = arith.constant 0 : i32
    return %c0_i32, %c0_i32_0, %c0_i32_1 : i32, i32, i32
  }
  func.func @transform_2(%arg0: i32, %arg1: i32, %arg2: i32) -> (i32, i32, i32, i32, i32) {
    %c0_i32 = arith.constant 0 : i32
    %c0_i32_0 = arith.constant 0 : i32
    %c0_i32_1 = arith.constant 0 : i32
    return %arg0, %arg1, %arg2, %c0_i32, %c0_i32_0 : i32, i32, i32, i32, i32
  }
}

</mosaic_0001>

<llo_original>
// kernel: tpu_custom_call.1
$region0: #{tpu_custom_call.1}
  #allocation0 [shape = 'u32[]', space=smem, size = 0x4, offset = 0x4, fixed_abs, tag = 'smem constant byte address 0x4 - core index']
  #allocation1 [shape = 'u32[72,128]{1,0:T(1,128)}', space=vmem, size = 0x9000, scoped, tag = 'internal scratch']
  #allocation8 [shape = 's32[]', space=sflag, size = 0x4, offset = 0, fixed_abs, tag = 'sflag constant byte address 0x0 - dummy sync flag']
  %s0 = inlined_call_operand.hbm [shape: f32[4,8,4,8,64], index: 0, kind: input, shape index: {}]
  %s1 = inlined_call_operand.hbm [shape: f32[2,64,128], index: 1, kind: input, shape index: {}]
  %s2 = inlined_call_operand.hbm [shape: f32[4,4,2,8,256], index: 2, kind: output, shape index: {}]
  %s3 = sld [smem:[#allocation0]]
  $region49: #{tpu_custom_call.1} parent=0
    _
  %s5 = ssub.s32 1, %s3
  %s6 = scalar_select 0, %s5, %s3
  $region1: #{tpu_custom_call.1} parent=0
    #allocation2 [shape = 'u8[524288]{0}', space=vmem, size = 0x80000, scoped, tag = 'input window, operand 0']
    #allocation3 [shape = 's32[2]{0}', space=sflag, size = 0x8, scoped, tag = 'scoped memory for tpu_custom_call.1']
    #allocation4 [shape = 's32[2]{0}', space=sflag, size = 0x8, scoped, tag = 'scoped memory for tpu_custom_call.1']
    #allocation5 [shape = 'u8[65536]{0}', space=vmem, size = 0x10000, scoped, tag = 'input window, operand 1, single buffered']
    #allocation6 [shape = 's32[1]{0}', space=sflag, size = 0x4, scoped, tag = 'scoped memory for tpu_custom_call.1']
    #allocation7 [shape = 'u8[262144]{0}', space=vmem, size = 0x40000, scoped, tag = 'output window, operand 0']
    %7 = vsyncpa [#allocation3], 0
    %s8 = scalar_lea.sflag [#allocation3], 1
    %9 = vsyncpa %s8, 0
    %10 = vsyncpa [#allocation6], 0
    %11 = vsyncpa [#allocation4], 0
    %s12 = scalar_lea.sflag [#allocation4], 1
    %13 = vsyncpa %s12, 0
    loop: start=0, step=1, limit=4
    $region2: #{tpu_custom_call.1} parent=1 // loop_pre_header
      _
    $region3: #{tpu_custom_call.1} parent=1 // loop_header
      %s15 = sphi 0, %s19
      %p16 = scmp.ge.s32.totalorder %s15, 4
      %s22 = sphi 0, %s41
      %s23 = sphi 0, %s37
      %s24 = sphi 0, %s33
      %s25 = sphi 0, %s22
      %s26 = sphi 0, %s23
      %s27 = sphi 0, %s24
      %s28 = sphi 0, %s25
      %s29 = sphi 0, %s26
      %s30 = sphi 0, %s27
      %s48 = sphi 0, %s50
      %s51 = sphi 0, %s48
      %s52 = sphi 0, %s51
      %s68 = sphi 0, %s52
      %s72 = sphi 0, %s72
      %s74 = sphi 0, %s72
      %s75 = sphi 0, %s74
      %s89 = sphi 0, %s75
      %s99 = sphi 0, %s101
      %s102 = sphi 0, %s99
      %s103 = sphi 0, %s102
      %s119 = sphi 0, %s103
    $region4: #{tpu_custom_call.1} parent=1 // loop_header_branch
      %18 = sbr.rel (%p16) target = $region8
    $region5: #{tpu_custom_call.1} parent=1 // loop_body
      %s20 = ssub.s32 %s15, 1
      %s21 = ssub.s32 %s15, 2
      %s31 = sadd.s32 1, %s24
      %p32 = scmp.ge.s32.totalorder %s31, 2
      %s33 = scalar_select %p32, 0, %s31
      %s34 = sadd.s32 1, %s23
      %s35 = scalar_select %p32, %s34, %s23
      %p36 = scmp.ge.s32.totalorder %s35, 1
      %s37 = scalar_select %p36, 0, %s35
      %s38 = sadd.s32 1, %s22
      %s39 = scalar_select %p36, %s38, %s22
      %p40 = scmp.ge.s32.totalorder %s39, 1
      %s41 = scalar_select %p40, 0, %s39
      %s42 = ssub.s32 %s22, %s41
      %s43 = ssub.s32 %s24, %s33
      %s44 = sor.u32 %s42, %s43
      %s45 = ssub.s32 %s23, %s37
      %s46 = sor.u32 %s44, %s45
      %p47 = scmp.eq.s32.totalorder %s46, 0
      %s49 = sadd.s32 %s48, 1
      %s50 = scalar_select %p47, %s48, %s49
      %p53 = pneg %p47
      %p54 = scmp.eq.s32.totalorder %s15, 1
      %p55 = por %p53, %p54
      %p56 = scmp.ne.s32.totalorder %s48, %s51
      %p57 = scmp.eq.s32.totalorder %s15, 0
      %p58 = por %p56, %p57
      %p59 = scmp.ne.s32.totalorder %s48, %s51
      %p60 = scmp.eq.s32.totalorder %s20, 1
      %p61 = por %p59, %p60
      %p62 = scmp.ne.s32.totalorder %s51, %s52
      %p63 = scmp.eq.s32.totalorder %s20, 0
      %p64 = por %p62, %p63
      %p65 = scmp.ne.s32.totalorder %s51, %s52
      %p66 = scmp.eq.s32.totalorder %s21, 1
      %p67 = por %p65, %p66
      %p69 = scmp.ne.s32.totalorder %s52, %s68
      %p70 = scmp.eq.s32.totalorder %s21, 0
      %p71 = por %p69, %p70
      %s73 = sadd.s32 %s72, 1
      %p76 = scmp.eq.s32.totalorder %s15, 1
      %p77 = scmp.ne.s32.totalorder %s72, %s74
      %p78 = scmp.eq.s32.totalorder %s15, 0
      %p79 = por %p77, %p78
      %p80 = scmp.ne.s32.totalorder %s72, %s74
      %p81 = scmp.eq.s32.totalorder %s20, 1
      %p82 = por %p80, %p81
      %p83 = scmp.ne.s32.totalorder %s74, %s75
      %p84 = scmp.eq.s32.totalorder %s20, 0
      %p85 = por %p83, %p84
      %p86 = scmp.ne.s32.totalorder %s74, %s75
      %p87 = scmp.eq.s32.totalorder %s21, 1
      %p88 = por %p86, %p87
      %p90 = scmp.ne.s32.totalorder %s75, %s89
      %p91 = scmp.eq.s32.totalorder %s21, 0
      %p92 = por %p90, %p91
      %s93 = ssub.s32 %s22, %s41
      %s94 = ssub.s32 %s23, %s37
      %s95 = sor.u32 %s93, %s94
      %s96 = ssub.s32 %s24, %s33
      %s97 = sor.u32 %s95, %s96
      %p98 = scmp.eq.s32.totalorder %s97, 0
      %s100 = sadd.s32 %s99, 1
      %s101 = scalar_select %p98, %s99, %s100
      %p104 = pneg %p98
      %p105 = scmp.eq.s32.totalorder %s15, 1
      %p106 = por %p104, %p105
      %p107 = scmp.ne.s32.totalorder %s99, %s102
      %p108 = scmp.eq.s32.totalorder %s15, 0
      %p109 = por %p107, %p108
      %p110 = scmp.ne.s32.totalorder %s99, %s102
      %p111 = scmp.eq.s32.totalorder %s20, 1
      %p112 = por %p110, %p111
      %p113 = scmp.ne.s32.totalorder %s102, %s103
      %p114 = scmp.eq.s32.totalorder %s20, 0
      %p115 = por %p113, %p114
      %p116 = scmp.ne.s32.totalorder %s102, %s103
      %p117 = scmp.eq.s32.totalorder %s21, 1
      %p118 = por %p116, %p117
      %p120 = scmp.ne.s32.totalorder %s103, %s119
      %p121 = scmp.eq.s32.totalorder %s21, 0
      %p122 = por %p120, %p121
      %p123 = scmp.le.s32.totalorder 1, %s15
      %p124 = scmp.lt.s32.totalorder %s15, 3
      %p125 = pnand %p123, %p124
      %p126 = pneg %p125
      // Predicated region
      $region9: #{tpu_custom_call.1} parent=5 // pred_check
        _
      $region10: #{tpu_custom_call.1} parent=5 // pred_check_branch
        %128 = sbr.rel (%p125) target = $region12
      $region11: #{tpu_custom_call.1} parent=5 // pred_region
        %s129 = ssub.s32 %s15, 1
        // Predicated region
        $region13: #{tpu_custom_call.1} parent=11 // pred_check
          %p130 = pneg %p85
        $region14: #{tpu_custom_call.1} parent=11 // pred_check_branch
          %132 = sbr.rel (%p130) target = $region16
        $region15: #{tpu_custom_call.1} parent=11 // pred_region
          %134 = vsyncadd [#allocation6], 0
          %s135 = sshll.u32 %s1, 4
          %s136 = int_to_ptr.hbm [resolvable:$true] %s135
          %s137 = sshll.u32 [#allocation5], 4
          %s138 = int_to_ptr.vmem [resolvable:$true] %s137
          %143 = dma.hbm_to_vmem [thread:$0]  %s136, 2048, %s138, [#allocation6], 128, 128, 8
        $region16: #{tpu_custom_call.1} parent=11 // pred_fallthru
          _
      $region12: #{tpu_custom_call.1} parent=5 // pred_fallthru
        _
      %p144 = scmp.lt.s32.totalorder %s15, 2
      // Predicated region
      $region17: #{tpu_custom_call.1} parent=5 // pred_check
        %p145 = pneg %p144
      $region18: #{tpu_custom_call.1} parent=5 // pred_check_branch
        %147 = sbr.rel (%p145) target = $region20
      $region19: #{tpu_custom_call.1} parent=5 // pred_region
        // Predicated region
        $region21: #{tpu_custom_call.1} parent=19 // pred_check
          %p148 = pneg %p58
        $region22: #{tpu_custom_call.1} parent=19 // pred_check_branch
          %150 = sbr.rel (%p148) target = $region24
        $region23: #{tpu_custom_call.1} parent=19 // pred_region
          #allocation9 [shape = 'u32[6]{0}', space=smem, size = 0x18, scoped, tag = 'DMA stride descriptor']
          %s151 = sand.u32 %s48, 1
          %s152 = scalar_lea.sflag [#allocation3], %s151
          %s153 = sand.u32 %s48, 1
          %s154 = smul.addr %s153, 512
          %s155 = scalar_lea.vmem [#allocation2], %s154
          %s156 = smul.u32 4, %s22
          %s157 = smul.u32 4, %s24
          %s158 = smul.u32 4, %s23
          %160 = vsyncadd %s152, 0
          %s161 = smul.addr %s157, 4
          %s162 = sadd.s32 %s158, %s161
          %s163 = smul.addr %s156, 32
          %s164 = sadd.s32 %s162, %s163
          %s165 = smul.addr %s164, 8
          %s166 = scalar_lea.hbm %s0, %s165
          %s168 = sshll.u32 1, 14
          %s169 = sxor.u32 4294967295, %s168
          %s171 = sld [smem:[#allocation0]]
          %s172 = sadd.s32 2, %s171
          %s174 = sshll.u32 7, 26
          %s175 = sxor.u32 4294967295, %s174
          %s176 = sand.u32 0, %s175
          %s177 = sshll.u32 %s172, 26
          %s178 = sor.u32 %s176, %s177
          %s179 = sshll.u32 %s166, 4
          %s180 = int_to_ptr.hbm [resolvable:$true] %s179
          %s181 = sshll.u32 %s155, 4
          %s182 = int_to_ptr.vmem [resolvable:$true] %s181
          %188 = sst [smem:[#allocation9]] 4096
          %s189 = scalar_lea.smem [#allocation9], 1
          %190 = sst [smem:[%s189]] 2048
          %s191 = scalar_lea.smem [#allocation9], 2
          %192 = sst [smem:[%s191]] 16
          %s193 = scalar_lea.smem [#allocation9], 3
          %194 = sst [smem:[%s193]] 128
          %s195 = scalar_lea.smem [#allocation9], 4
          %196 = sst [smem:[%s195]] 128
          %s197 = scalar_lea.smem [#allocation9], 5
          %198 = sst [smem:[%s197]] 8
          %200 = dma.general %s180, 8192, %s182, %s152, [#allocation8], [#allocation9], %s178, 0
        $region24: #{tpu_custom_call.1} parent=19 // pred_fallthru
          _
      $region20: #{tpu_custom_call.1} parent=5 // pred_fallthru
        _
      %p201 = scmp.le.s32.totalorder 1, %s15
      %p202 = scmp.lt.s32.totalorder %s15, 3
      %p203 = pnand %p201, %p202
      %p204 = pneg %p203
      // Predicated region
      $region25: #{tpu_custom_call.1} parent=5 // pred_check
        _
      $region26: #{tpu_custom_call.1} parent=5 // pred_check_branch
        %206 = sbr.rel (%p203) target = $region28
      $region27: #{tpu_custom_call.1} parent=5 // pred_region
        %s207 = ssub.s32 %s15, 1
        %s208 = sand.u32 %s51, 1
        %s209 = scalar_lea.sflag [#allocation3], %s208
        %s210 = sand.u32 %s51, 1
        %s211 = smul.addr %s210, 512
        %s212 = scalar_lea.vmem [#allocation2], %s211
        // Predicated region
        $region29: #{tpu_custom_call.1} parent=27 // pred_check
          %p213 = pneg %p64
        $region30: #{tpu_custom_call.1} parent=27 // pred_check_branch
          %215 = sbr.rel (%p213) target = $region32
        $region31: #{tpu_custom_call.1} parent=27 // pred_region
          %217 = dma.done %s209, 8192
        $region32: #{tpu_custom_call.1} parent=27 // pred_fallthru
          _
        // Predicated region
        $region33: #{tpu_custom_call.1} parent=27 // pred_check
          %p218 = pneg %p85
        $region34: #{tpu_custom_call.1} parent=27 // pred_check_branch
          %220 = sbr.rel (%p218) target = $region36
        $region35: #{tpu_custom_call.1} parent=27 // pred_region
          %222 = dma.done [#allocation6], 2048
        $region36: #{tpu_custom_call.1} parent=27 // pred_fallthru
          _
        %s223 = sand.u32 %s51, 1
        %s224 = scalar_lea.sflag [#allocation3], %s223
        %s225 = sand.u32 %s51, 1
        %s226 = smul.addr %s225, 512
        %s227 = scalar_lea.vmem [#allocation2], %s226
        %p228 = pneg %p64
        %p229 = pneg %p61
        %p230 = pneg %p85
        %p231 = pneg %p82
        %p232 = pneg %p115
        %p233 = pneg %p112
        %s234 = sand.u32 %s102, 1
        %s235 = scalar_lea.sflag [#allocation4], %s234
        %s236 = sand.u32 %s102, 1
        %s237 = smul.addr %s236, 256
        %s238 = scalar_lea.vmem [#allocation7], %s237
        %s239 = smul.u32 4, %s25
        %s240 = smul.u32 4, %s27
        %s241 = smul.u32 4, %s26
        %s242 = smul.u32 4, %s25
        %s243 = smul.u32 4, %s26
        %v244 = vld [vmem:[%s212] sm:$0xff]
        %v245 = vld [vmem:[%s212 + $0x8] sm:$0xff]
        %v246 = vld [vmem:[%s212 + $0x10] sm:$0xff]
        %v247 = vld [vmem:[%s212 + $0x18] sm:$0xff]
        %v248 = vld [vmem:[%s212 + $0x80] sm:$0xff]
        %v249 = vld [vmem:[%s212 + $0x88] sm:$0xff]
        %v250 = vld [vmem:[%s212 + $0x90] sm:$0xff]
        %v251 = vld [vmem:[%s212 + $0x98] sm:$0xff]
        %v252 = vld [vmem:[%s212 + $0x100] sm:$0xff]
        %v253 = vld [vmem:[%s212 + $0x108] sm:$0xff]
        %v254 = vld [vmem:[%s212 + $0x110] sm:$0xff]
        %v255 = vld [vmem:[%s212 + $0x118] sm:$0xff]
        %v256 = vld [vmem:[%s212 + $0x180] sm:$0xff]
        %v257 = vld [vmem:[%s212 + $0x188] sm:$0xff]
        %v258 = vld [vmem:[%s212 + $0x190] sm:$0xff]
        %v259 = vld [vmem:[%s212 + $0x198] sm:$0xff]
        %v260 = vld [vmem:[#allocation5] sm:$0xff]
        %v261 = vld [vmem:[#allocation5 + $0x8] sm:$0xff]
        %v262 = vld [vmem:[#allocation5 + $0x10] sm:$0xff]
        %v263 = vld [vmem:[#allocation5 + $0x18] sm:$0xff]
        %v264 = vld [vmem:[#allocation5 + $0x20] sm:$0xff]
        %v265 = vld [vmem:[#allocation5 + $0x28] sm:$0xff]
        %v266 = vld [vmem:[#allocation5 + $0x30] sm:$0xff]
        %v267 = vld [vmem:[#allocation5 + $0x38] sm:$0xff]
        %s268 = scalar_lea.vmem %s212, 32 [#allocation2]
        %v269 = vld [vmem:[%s268] sm:$0xff]
        %v270 = vld [vmem:[%s268 + $0x8] sm:$0xff]
        %v271 = vld [vmem:[%s268 + $0x10] sm:$0xff]
        %v272 = vld [vmem:[%s268 + $0x18] sm:$0xff]
        %v273 = vld [vmem:[%s268 + $0x80] sm:$0xff]
        %v274 = vld [vmem:[%s268 + $0x88] sm:$0xff]
        %v275 = vld [vmem:[%s268 + $0x90] sm:$0xff]
        %v276 = vld [vmem:[%s268 + $0x98] sm:$0xff]
        %v277 = vld [vmem:[%s268 + $0x100] sm:$0xff]
        %v278 = vld [vmem:[%s268 + $0x108] sm:$0xff]
        %v279 = vld [vmem:[%s268 + $0x110] sm:$0xff]
        %v280 = vld [vmem:[%s268 + $0x118] sm:$0xff]
        %v281 = vld [vmem:[%s268 + $0x180] sm:$0xff]
        %v282 = vld [vmem:[%s268 + $0x188] sm:$0xff]
        %v283 = vld [vmem:[%s268 + $0x190] sm:$0xff]
        %v284 = vld [vmem:[%s268 + $0x198] sm:$0xff]
        %s285 = scalar_lea.vmem [#allocation5], 64
        %v286 = vld [vmem:[%s285] sm:$0xff]
        %v287 = vld [vmem:[%s285 + $0x8] sm:$0xff]
        %v288 = vld [vmem:[%s285 + $0x10] sm:$0xff]
        %v289 = vld [vmem:[%s285 + $0x18] sm:$0xff]
        %v290 = vld [vmem:[%s285 + $0x20] sm:$0xff]
        %v291 = vld [vmem:[%s285 + $0x28] sm:$0xff]
        %v292 = vld [vmem:[%s285 + $0x30] sm:$0xff]
        %v293 = vld [vmem:[%s285 + $0x38] sm:$0xff]
        %vm294 = vcmask 523264
        %v296 = vsel %vm294, %v269, 0
        %v299 = vsel %vm294, %v270, 0
        %v302 = vsel %vm294, %v271, 0
        %v305 = vsel %vm294, %v272, 0
        %v308 = vsel %vm294, %v273, 0
        %v311 = vsel %vm294, %v274, 0
        %v314 = vsel %vm294, %v275, 0
        %v317 = vsel %vm294, %v276, 0
        %v320 = vsel %vm294, %v277, 0
        %v323 = vsel %vm294, %v278, 0
        %v326 = vsel %vm294, %v279, 0
        %v329 = vsel %vm294, %v280, 0
        %v332 = vsel %vm294, %v281, 0
        %v335 = vsel %vm294, %v282, 0
        %v338 = vsel %vm294, %v283, 0
        %v341 = vsel %vm294, %v284, 0
        %343 = vmatpush.msra.mxu0 0.0
        %344 = vmatpush.msra.mxu0 0.0
        %345 = vmatpush.msra.mxu0 0.0
        %346 = vmatpush.msra.mxu0 0.0
        %347 = vmatpush.msra.mxu0 0.0
        %348 = vmatpush.msra.mxu0 0.0
        %349 = vmatpush.msra.mxu0 0.0
        %350 = vmatpush.msra.mxu0 0.0
        %v351 = vand.u32 %v293, 4294901760
        %352 = vmatpush.msra.mxu0 %v351
        %v353 = vand.u32 %v292, 4294901760
        %354 = vmatpush.msra.mxu0 %v353
        %v355 = vand.u32 %v291, 4294901760
        %356 = vmatpush.msra.mxu0 %v355
        %v357 = vand.u32 %v290, 4294901760
        %358 = vmatpush.msra.mxu0 %v357
        %v359 = vand.u32 %v289, 4294901760
        %360 = vmatpush.msra.mxu0 %v359
        %v361 = vand.u32 %v288, 4294901760
        %362 = vmatpush.msra.mxu0 %v361
        %v363 = vand.u32 %v287, 4294901760
        %364 = vmatpush.msra.mxu0 %v363
        %v365 = vand.u32 %v286, 4294901760
        %366 = vmatpush.msra.mxu0 %v365
        %v367 = vand.u32 %v296, 4294901760
        %v368 = vsub.f32 %v296, %v367
        %v369 = vand.u32 %v368, 4294901760
        %v370 = vsub.f32 %v368, %v369
        %v371 = vand.u32 %v370, 4294901760
        %372 = vmatmul.f32.gmra.mxu0 %v371
        %v373 = vpop.f32.mrf.mxu0
        %v374 = vadd.f32 0.0, %v373
        %v375 = vand.u32 %v299, 4294901760
        %v376 = vsub.f32 %v299, %v375
        %v377 = vand.u32 %v376, 4294901760
        %v378 = vsub.f32 %v376, %v377
        %v379 = vand.u32 %v378, 4294901760
        %380 = vmatmul.f32.gmra.mxu0 %v379
        %v381 = vpop.f32.mrf.mxu0
        %v382 = vadd.f32 0.0, %v381
        %v383 = vand.u32 %v302, 4294901760
        %v384 = vsub.f32 %v302, %v383
        %v385 = vand.u32 %v384, 4294901760
        %v386 = vsub.f32 %v384, %v385
        %v387 = vand.u32 %v386, 4294901760
        %388 = vmatmul.f32.gmra.mxu0 %v387
        %v389 = vpop.f32.mrf.mxu0
        %v390 = vadd.f32 0.0, %v389
        %v391 = vand.u32 %v305, 4294901760
        %v392 = vsub.f32 %v305, %v391
        %v393 = vand.u32 %v392, 4294901760
        %v394 = vsub.f32 %v392, %v393
        %v395 = vand.u32 %v394, 4294901760
        %396 = vmatmul.f32.gmra.mxu0 %v395
        %v397 = vpop.f32.mrf.mxu0
        %v398 = vadd.f32 0.0, %v397
        %v399 = vand.u32 %v308, 4294901760
        %v400 = vsub.f32 %v308, %v399
        %v401 = vand.u32 %v400, 4294901760
        %v402 = vsub.f32 %v400, %v401
        %v403 = vand.u32 %v402, 4294901760
        %404 = vmatmul.f32.gmra.mxu0 %v403
        %v405 = vpop.f32.mrf.mxu0
        %v406 = vadd.f32 0.0, %v405
        %v407 = vand.u32 %v311, 4294901760
        %v408 = vsub.f32 %v311, %v407
        %v409 = vand.u32 %v408, 4294901760
        %v410 = vsub.f32 %v408, %v409
        %v411 = vand.u32 %v410, 4294901760
        %412 = vmatmul.f32.gmra.mxu0 %v411
        %v413 = vpop.f32.mrf.mxu0
        %v414 = vadd.f32 0.0, %v413
        %v415 = vand.u32 %v314, 4294901760
        %v416 = vsub.f32 %v314, %v415
        %v417 = vand.u32 %v416, 4294901760
        %v418 = vsub.f32 %v416, %v417
        %v419 = vand.u32 %v418, 4294901760
        %420 = vmatmul.f32.gmra.mxu0 %v419
        %v421 = vpop.f32.mrf.mxu0
        %v422 = vadd.f32 0.0, %v421
        %v423 = vand.u32 %v317, 4294901760
        %v424 = vsub.f32 %v317, %v423
        %v425 = vand.u32 %v424, 4294901760
        %v426 = vsub.f32 %v424, %v425
        %v427 = vand.u32 %v426, 4294901760
        %428 = vmatmul.f32.gmra.mxu0 %v427
        %v429 = vpop.f32.mrf.mxu0
        %v430 = vadd.f32 0.0, %v429
        %v431 = vand.u32 %v320, 4294901760
        %v432 = vsub.f32 %v320, %v431
        %v433 = vand.u32 %v432, 4294901760
        %v434 = vsub.f32 %v432, %v433
        %v435 = vand.u32 %v434, 4294901760
        %436 = vmatmul.f32.gmra.mxu0 %v435
        %v437 = vpop.f32.mrf.mxu0
        %v438 = vadd.f32 0.0, %v437
        %v439 = vand.u32 %v323, 4294901760
        %v440 = vsub.f32 %v323, %v439
        %v441 = vand.u32 %v440, 4294901760
        %v442 = vsub.f32 %v440, %v441
        %v443 = vand.u32 %v442, 4294901760
        %444 = vmatmul.f32.gmra.mxu0 %v443
        %v445 = vpop.f32.mrf.mxu0
        %v446 = vadd.f32 0.0, %v445
        %v447 = vand.u32 %v326, 4294901760
        %v448 = vsub.f32 %v326, %v447
        %v449 = vand.u32 %v448, 4294901760
        %v450 = vsub.f32 %v448, %v449
        %v451 = vand.u32 %v450, 4294901760
        %452 = vmatmul.f32.gmra.mxu0 %v451
        %v453 = vpop.f32.mrf.mxu0
        %v454 = vadd.f32 0.0, %v453
        %v455 = vand.u32 %v329, 4294901760
        %v456 = vsub.f32 %v329, %v455
        %v457 = vand.u32 %v456, 4294901760
        %v458 = vsub.f32 %v456, %v457
        %v459 = vand.u32 %v458, 4294901760
        %460 = vmatmul.f32.gmra.mxu0 %v459
        %v461 = vpop.f32.mrf.mxu0
        %v462 = vadd.f32 0.0, %v461
        %v463 = vand.u32 %v332, 4294901760
        %v464 = vsub.f32 %v332, %v463
        %v465 = vand.u32 %v464, 4294901760
        %v466 = vsub.f32 %v464, %v465
        %v467 = vand.u32 %v466, 4294901760
        %468 = vmatmul.f32.gmra.mxu0 %v467
        %v469 = vpop.f32.mrf.mxu0
        %v470 = vadd.f32 0.0, %v469
        %v471 = vand.u32 %v335, 4294901760
        %v472 = vsub.f32 %v335, %v471
        %v473 = vand.u32 %v472, 4294901760
        %v474 = vsub.f32 %v472, %v473
        %v475 = vand.u32 %v474, 4294901760
        %476 = vmatmul.f32.gmra.mxu0 %v475
        %v477 = vpop.f32.mrf.mxu0
        %v478 = vadd.f32 0.0, %v477
        %v479 = vand.u32 %v338, 4294901760
        %v480 = vsub.f32 %v338, %v479
        %v481 = vand.u32 %v480, 4294901760
        %v482 = vsub.f32 %v480, %v481
        %v483 = vand.u32 %v482, 4294901760
        %484 = vmatmul.f32.gmra.mxu0 %v483
        %v485 = vpop.f32.mrf.mxu0
        %v486 = vadd.f32 0.0, %v485
        %v487 = vand.u32 %v341, 4294901760
        %v488 = vsub.f32 %v341, %v487
        %v489 = vand.u32 %v488, 4294901760
        %v490 = vsub.f32 %v488, %v489
        %v491 = vand.u32 %v490, 4294901760
        %492 = vmatmul.f32.gmra.mxu0 %v491
        %v493 = vpop.f32.mrf.mxu0
        %v494 = vadd.f32 0.0, %v493
        %495 = vdwg.mxu0
        %496 = vmatpush.msra.mxu0 0.0
        %497 = vmatpush.msra.mxu0 0.0
        %498 = vmatpush.msra.mxu0 0.0
        %499 = vmatpush.msra.mxu0 0.0
        %500 = vmatpush.msra.mxu0 0.0
        %501 = vmatpush.msra.mxu0 0.0
        %502 = vmatpush.msra.mxu0 0.0
        %503 = vmatpush.msra.mxu0 0.0
        %v504 = vand.u32 %v293, 4294901760
        %v505 = vsub.f32 %v293, %v504
        %v506 = vand.u32 %v505, 4294901760
        %v507 = vsub.f32 %v505, %v506
        %v508 = vand.u32 %v507, 4294901760
        %509 = vmatpush.msra.mxu0 %v508
        %v510 = vand.u32 %v292, 4294901760
        %v511 = vsub.f32 %v292, %v510
        %v512 = vand.u32 %v511, 4294901760
        %v513 = vsub.f32 %v511, %v512
        %v514 = vand.u32 %v513, 4294901760
        %515 = vmatpush.msra.mxu0 %v514
        %v516 = vand.u32 %v291, 4294901760
        %v517 = vsub.f32 %v291, %v516
        %v518 = vand.u32 %v517, 4294901760
        %v519 = vsub.f32 %v517, %v518
        %v520 = vand.u32 %v519, 4294901760
        %521 = vmatpush.msra.mxu0 %v520
        %v522 = vand.u32 %v290, 4294901760
        %v523 = vsub.f32 %v290, %v522
        %v524 = vand.u32 %v523, 4294901760
        %v525 = vsub.f32 %v523, %v524
        %v526 = vand.u32 %v525, 4294901760
        %527 = vmatpush.msra.mxu0 %v526
        %v528 = vand.u32 %v289, 4294901760
        %v529 = vsub.f32 %v289, %v528
        %v530 = vand.u32 %v529, 4294901760
        %v531 = vsub.f32 %v529, %v530
        %v532 = vand.u32 %v531, 4294901760
        %533 = vmatpush.msra.mxu0 %v532
        %v534 = vand.u32 %v288, 4294901760
        %v535 = vsub.f32 %v288, %v534
        %v536 = vand.u32 %v535, 4294901760
        %v537 = vsub.f32 %v535, %v536
        %v538 = vand.u32 %v537, 4294901760
        %539 = vmatpush.msra.mxu0 %v538
        %v540 = vand.u32 %v287, 4294901760
        %v541 = vsub.f32 %v287, %v540
        %v542 = vand.u32 %v541, 4294901760
        %v543 = vsub.f32 %v541, %v542
        %v544 = vand.u32 %v543, 4294901760
        %545 = vmatpush.msra.mxu0 %v544
        %v546 = vand.u32 %v286, 4294901760
        %v547 = vsub.f32 %v286, %v546
        %v548 = vand.u32 %v547, 4294901760
        %v549 = vsub.f32 %v547, %v548
        %v550 = vand.u32 %v549, 4294901760
        %551 = vmatpush.msra.mxu0 %v550
        %v552 = vand.u32 %v296, 4294901760
        %553 = vmatmul.f32.gmra.mxu0 %v552
        %v554 = vpop.f32.mrf.mxu0
        %v555 = vadd.f32 %v374, %v554
        %v556 = vand.u32 %v299, 4294901760
        %557 = vmatmul.f32.gmra.mxu0 %v556
        %v558 = vpop.f32.mrf.mxu0
        %v559 = vadd.f32 %v382, %v558
        %v560 = vand.u32 %v302, 4294901760
        %561 = vmatmul.f32.gmra.mxu0 %v560
        %v562 = vpop.f32.mrf.mxu0
        %v563 = vadd.f32 %v390, %v562
        %v564 = vand.u32 %v305, 4294901760
        %565 = vmatmul.f32.gmra.mxu0 %v564
        %v566 = vpop.f32.mrf.mxu0
        %v567 = vadd.f32 %v398, %v566
        %v568 = vand.u32 %v308, 4294901760
        %569 = vmatmul.f32.gmra.mxu0 %v568
        %v570 = vpop.f32.mrf.mxu0
        %v571 = vadd.f32 %v406, %v570
        %v572 = vand.u32 %v311, 4294901760
        %573 = vmatmul.f32.gmra.mxu0 %v572
        %v574 = vpop.f32.mrf.mxu0
        %v575 = vadd.f32 %v414, %v574
        %v576 = vand.u32 %v314, 4294901760
        %577 = vmatmul.f32.gmra.mxu0 %v576
        %v578 = vpop.f32.mrf.mxu0
        %v579 = vadd.f32 %v422, %v578
        %v580 = vand.u32 %v317, 4294901760
        %581 = vmatmul.f32.gmra.mxu0 %v580
        %v582 = vpop.f32.mrf.mxu0
        %v583 = vadd.f32 %v430, %v582
        %v584 = vand.u32 %v320, 4294901760
        %585 = vmatmul.f32.gmra.mxu0 %v584
        %v586 = vpop.f32.mrf.mxu0
        %v587 = vadd.f32 %v438, %v586
        %v588 = vand.u32 %v323, 4294901760
        %589 = vmatmul.f32.gmra.mxu0 %v588
        %v590 = vpop.f32.mrf.mxu0
        %v591 = vadd.f32 %v446, %v590
        %v592 = vand.u32 %v326, 4294901760
        %593 = vmatmul.f32.gmra.mxu0 %v592
        %v594 = vpop.f32.mrf.mxu0
        %v595 = vadd.f32 %v454, %v594
        %v596 = vand.u32 %v329, 4294901760
        %597 = vmatmul.f32.gmra.mxu0 %v596
        %v598 = vpop.f32.mrf.mxu0
        %v599 = vadd.f32 %v462, %v598
        %v600 = vand.u32 %v332, 4294901760
        %601 = vmatmul.f32.gmra.mxu0 %v600
        %v602 = vpop.f32.mrf.mxu0
        %v603 = vadd.f32 %v470, %v602
        %v604 = vand.u32 %v335, 4294901760
        %605 = vmatmul.f32.gmra.mxu0 %v604
        %v606 = vpop.f32.mrf.mxu0
        %v607 = vadd.f32 %v478, %v606
        %v608 = vand.u32 %v338, 4294901760
        %609 = vmatmul.f32.gmra.mxu0 %v608
        %v610 = vpop.f32.mrf.mxu0
        %v611 = vadd.f32 %v486, %v610
        %v612 = vand.u32 %v341, 4294901760
        %613 = vmatmul.f32.gmra.mxu0 %v612
        %v614 = vpop.f32.mrf.mxu0
        %v615 = vadd.f32 %v494, %v614
        %616 = vdwg.mxu0
        %617 = vmatpush.msra.mxu0 0.0
        %618 = vmatpush.msra.mxu0 0.0
        %619 = vmatpush.msra.mxu0 0.0
        %620 = vmatpush.msra.mxu0 0.0
        %621 = vmatpush.msra.mxu0 0.0
        %622 = vmatpush.msra.mxu0 0.0
        %623 = vmatpush.msra.mxu0 0.0
        %624 = vmatpush.msra.mxu0 0.0
        %v625 = vand.u32 %v293, 4294901760
        %v626 = vsub.f32 %v293, %v625
        %627 = vmatpush.msra.mxu0 %v626
        %v628 = vand.u32 %v292, 4294901760
        %v629 = vsub.f32 %v292, %v628
        %630 = vmatpush.msra.mxu0 %v629
        %v631 = vand.u32 %v291, 4294901760
        %v632 = vsub.f32 %v291, %v631
        %633 = vmatpush.msra.mxu0 %v632
        %v634 = vand.u32 %v290, 4294901760
        %v635 = vsub.f32 %v290, %v634
        %636 = vmatpush.msra.mxu0 %v635
        %v637 = vand.u32 %v289, 4294901760
        %v638 = vsub.f32 %v289, %v637
        %639 = vmatpush.msra.mxu0 %v638
        %v640 = vand.u32 %v288, 4294901760
        %v641 = vsub.f32 %v288, %v640
        %642 = vmatpush.msra.mxu0 %v641
        %v643 = vand.u32 %v287, 4294901760
        %v644 = vsub.f32 %v287, %v643
        %645 = vmatpush.msra.mxu0 %v644
        %v646 = vand.u32 %v286, 4294901760
        %v647 = vsub.f32 %v286, %v646
        %648 = vmatpush.msra.mxu0 %v647
        %v649 = vand.u32 %v296, 4294901760
        %v650 = vsub.f32 %v296, %v649
        %651 = vmatmul.f32.gmra.mxu0 %v650
        %v652 = vpop.f32.mrf.mxu0
        %v653 = vadd.f32 %v555, %v652
        %v654 = vand.u32 %v299, 4294901760
        %v655 = vsub.f32 %v299, %v654
        %656 = vmatmul.f32.gmra.mxu0 %v655
        %v657 = vpop.f32.mrf.mxu0
        %v658 = vadd.f32 %v559, %v657
        %v659 = vand.u32 %v302, 4294901760
        %v660 = vsub.f32 %v302, %v659
        %661 = vmatmul.f32.gmra.mxu0 %v660
        %v662 = vpop.f32.mrf.mxu0
        %v663 = vadd.f32 %v563, %v662
        %v664 = vand.u32 %v305, 4294901760
        %v665 = vsub.f32 %v305, %v664
        %666 = vmatmul.f32.gmra.mxu0 %v665
        %v667 = vpop.f32.mrf.mxu0
        %v668 = vadd.f32 %v567, %v667
        %v669 = vand.u32 %v308, 4294901760
        %v670 = vsub.f32 %v308, %v669
        %671 = vmatmul.f32.gmra.mxu0 %v670
        %v672 = vpop.f32.mrf.mxu0
        %v673 = vadd.f32 %v571, %v672
        %v674 = vand.u32 %v311, 4294901760
        %v675 = vsub.f32 %v311, %v674
        %676 = vmatmul.f32.gmra.mxu0 %v675
        %v677 = vpop.f32.mrf.mxu0
        %v678 = vadd.f32 %v575, %v677
        %v679 = vand.u32 %v314, 4294901760
        %v680 = vsub.f32 %v314, %v679
        %681 = vmatmul.f32.gmra.mxu0 %v680
        %v682 = vpop.f32.mrf.mxu0
        %v683 = vadd.f32 %v579, %v682
        %v684 = vand.u32 %v317, 4294901760
        %v685 = vsub.f32 %v317, %v684
        %686 = vmatmul.f32.gmra.mxu0 %v685
        %v687 = vpop.f32.mrf.mxu0
        %v688 = vadd.f32 %v583, %v687
        %v689 = vand.u32 %v320, 4294901760
        %v690 = vsub.f32 %v320, %v689
        %691 = vmatmul.f32.gmra.mxu0 %v690
        %v692 = vpop.f32.mrf.mxu0
        %v693 = vadd.f32 %v587, %v692
        %v694 = vand.u32 %v323, 4294901760
        %v695 = vsub.f32 %v323, %v694
        %696 = vmatmul.f32.gmra.mxu0 %v695
        %v697 = vpop.f32.mrf.mxu0
        %v698 = vadd.f32 %v591, %v697
        %v699 = vand.u32 %v326, 4294901760
        %v700 = vsub.f32 %v326, %v699
        %701 = vmatmul.f32.gmra.mxu0 %v700
        %v702 = vpop.f32.mrf.mxu0
        %v703 = vadd.f32 %v595, %v702
        %v704 = vand.u32 %v329, 4294901760
        %v705 = vsub.f32 %v329, %v704
        %706 = vmatmul.f32.gmra.mxu0 %v705
        %v707 = vpop.f32.mrf.mxu0
        %v708 = vadd.f32 %v599, %v707
        %v709 = vand.u32 %v332, 4294901760
        %v710 = vsub.f32 %v332, %v709
        %711 = vmatmul.f32.gmra.mxu0 %v710
        %v712 = vpop.f32.mrf.mxu0
        %v713 = vadd.f32 %v603, %v712
        %v714 = vand.u32 %v335, 4294901760
        %v715 = vsub.f32 %v335, %v714
        %716 = vmatmul.f32.gmra.mxu0 %v715
        %v717 = vpop.f32.mrf.mxu0
        %v718 = vadd.f32 %v607, %v717
        %v719 = vand.u32 %v338, 4294901760
        %v720 = vsub.f32 %v338, %v719
        %721 = vmatmul.f32.gmra.mxu0 %v720
        %v722 = vpop.f32.mrf.mxu0
        %v723 = vadd.f32 %v611, %v722
        %v724 = vand.u32 %v341, 4294901760
        %v725 = vsub.f32 %v341, %v724
        %726 = vmatmul.f32.gmra.mxu0 %v725
        %v727 = vpop.f32.mrf.mxu0
        %v728 = vadd.f32 %v615, %v727
        %729 = vdwg.mxu0
        %730 = vmatpush.msra.mxu0 0.0
        %731 = vmatpush.msra.mxu0 0.0
        %732 = vmatpush.msra.mxu0 0.0
        %733 = vmatpush.msra.mxu0 0.0
        %734 = vmatpush.msra.mxu0 0.0
        %735 = vmatpush.msra.mxu0 0.0
        %736 = vmatpush.msra.mxu0 0.0
        %737 = vmatpush.msra.mxu0 0.0
        %v738 = vand.u32 %v293, 4294901760
        %739 = vmatpush.msra.mxu0 %v738
        %v740 = vand.u32 %v292, 4294901760
        %741 = vmatpush.msra.mxu0 %v740
        %v742 = vand.u32 %v291, 4294901760
        %743 = vmatpush.msra.mxu0 %v742
        %v744 = vand.u32 %v290, 4294901760
        %745 = vmatpush.msra.mxu0 %v744
        %v746 = vand.u32 %v289, 4294901760
        %747 = vmatpush.msra.mxu0 %v746
        %v748 = vand.u32 %v288, 4294901760
        %749 = vmatpush.msra.mxu0 %v748
        %v750 = vand.u32 %v287, 4294901760
        %751 = vmatpush.msra.mxu0 %v750
        %v752 = vand.u32 %v286, 4294901760
        %753 = vmatpush.msra.mxu0 %v752
        %v754 = vand.u32 %v296, 4294901760
        %v755 = vsub.f32 %v296, %v754
        %v756 = vand.u32 %v755, 4294901760
        %757 = vmatmul.f32.gmra.mxu0 %v756
        %v758 = vpop.f32.mrf.mxu0
        %v759 = vadd.f32 %v653, %v758
        %v760 = vand.u32 %v299, 4294901760
        %v761 = vsub.f32 %v299, %v760
        %v762 = vand.u32 %v761, 4294901760
        %763 = vmatmul.f32.gmra.mxu0 %v762
        %v764 = vpop.f32.mrf.mxu0
        %v765 = vadd.f32 %v658, %v764
        %v766 = vand.u32 %v302, 4294901760
        %v767 = vsub.f32 %v302, %v766
        %v768 = vand.u32 %v767, 4294901760
        %769 = vmatmul.f32.gmra.mxu0 %v768
        %v770 = vpop.f32.mrf.mxu0
        %v771 = vadd.f32 %v663, %v770
        %v772 = vand.u32 %v305, 4294901760
        %v773 = vsub.f32 %v305, %v772
        %v774 = vand.u32 %v773, 4294901760
        %775 = vmatmul.f32.gmra.mxu0 %v774
        %v776 = vpop.f32.mrf.mxu0
        %v777 = vadd.f32 %v668, %v776
        %v778 = vand.u32 %v308, 4294901760
        %v779 = vsub.f32 %v308, %v778
        %v780 = vand.u32 %v779, 4294901760
        %781 = vmatmul.f32.gmra.mxu0 %v780
        %v782 = vpop.f32.mrf.mxu0
        %v783 = vadd.f32 %v673, %v782
        %v784 = vand.u32 %v311, 4294901760
        %v785 = vsub.f32 %v311, %v784
        %v786 = vand.u32 %v785, 4294901760
        %787 = vmatmul.f32.gmra.mxu0 %v786
        %v788 = vpop.f32.mrf.mxu0
        %v789 = vadd.f32 %v678, %v788
        %v790 = vand.u32 %v314, 4294901760
        %v791 = vsub.f32 %v314, %v790
        %v792 = vand.u32 %v791, 4294901760
        %793 = vmatmul.f32.gmra.mxu0 %v792
        %v794 = vpop.f32.mrf.mxu0
        %v795 = vadd.f32 %v683, %v794
        %v796 = vand.u32 %v317, 4294901760
        %v797 = vsub.f32 %v317, %v796
        %v798 = vand.u32 %v797, 4294901760
        %799 = vmatmul.f32.gmra.mxu0 %v798
        %v800 = vpop.f32.mrf.mxu0
        %v801 = vadd.f32 %v688, %v800
        %v802 = vand.u32 %v320, 4294901760
        %v803 = vsub.f32 %v320, %v802
        %v804 = vand.u32 %v803, 4294901760
        %805 = vmatmul.f32.gmra.mxu0 %v804
        %v806 = vpop.f32.mrf.mxu0
        %v807 = vadd.f32 %v693, %v806
        %v808 = vand.u32 %v323, 4294901760
        %v809 = vsub.f32 %v323, %v808
        %v810 = vand.u32 %v809, 4294901760
        %811 = vmatmul.f32.gmra.mxu0 %v810
        %v812 = vpop.f32.mrf.mxu0
        %v813 = vadd.f32 %v698, %v812
        %v814 = vand.u32 %v326, 4294901760
        %v815 = vsub.f32 %v326, %v814
        %v816 = vand.u32 %v815, 4294901760
        %817 = vmatmul.f32.gmra.mxu0 %v816
        %v818 = vpop.f32.mrf.mxu0
        %v819 = vadd.f32 %v703, %v818
        %v820 = vand.u32 %v329, 4294901760
        %v821 = vsub.f32 %v329, %v820
        %v822 = vand.u32 %v821, 4294901760
        %823 = vmatmul.f32.gmra.mxu0 %v822
        %v824 = vpop.f32.mrf.mxu0
        %v825 = vadd.f32 %v708, %v824
        %v826 = vand.u32 %v332, 4294901760
        %v827 = vsub.f32 %v332, %v826
        %v828 = vand.u32 %v827, 4294901760
        %829 = vmatmul.f32.gmra.mxu0 %v828
        %v830 = vpop.f32.mrf.mxu0
        %v831 = vadd.f32 %v713, %v830
        %v832 = vand.u32 %v335, 4294901760
        %v833 = vsub.f32 %v335, %v832
        %v834 = vand.u32 %v833, 4294901760
        %835 = vmatmul.f32.gmra.mxu0 %v834
        %v836 = vpop.f32.mrf.mxu0
        %v837 = vadd.f32 %v718, %v836
        %v838 = vand.u32 %v338, 4294901760
        %v839 = vsub.f32 %v338, %v838
        %v840 = vand.u32 %v839, 4294901760
        %841 = vmatmul.f32.gmra.mxu0 %v840
        %v842 = vpop.f32.mrf.mxu0
        %v843 = vadd.f32 %v723, %v842
        %v844 = vand.u32 %v341, 4294901760
        %v845 = vsub.f32 %v341, %v844
        %v846 = vand.u32 %v845, 4294901760
        %847 = vmatmul.f32.gmra.mxu0 %v846
        %v848 = vpop.f32.mrf.mxu0
        %v849 = vadd.f32 %v728, %v848
        %850 = vdwg.mxu0
        %851 = vmatpush.msra.mxu0 0.0
        %852 = vmatpush.msra.mxu0 0.0
        %853 = vmatpush.msra.mxu0 0.0
        %854 = vmatpush.msra.mxu0 0.0
        %855 = vmatpush.msra.mxu0 0.0
        %856 = vmatpush.msra.mxu0 0.0
        %857 = vmatpush.msra.mxu0 0.0
        %858 = vmatpush.msra.mxu0 0.0
        %v859 = vand.u32 %v293, 4294901760
        %v860 = vsub.f32 %v293, %v859
        %v861 = vand.u32 %v860, 4294901760
        %862 = vmatpush.msra.mxu0 %v861
        %v863 = vand.u32 %v292, 4294901760
        %v864 = vsub.f32 %v292, %v863
        %v865 = vand.u32 %v864, 4294901760
        %866 = vmatpush.msra.mxu0 %v865
        %v867 = vand.u32 %v291, 4294901760
        %v868 = vsub.f32 %v291, %v867
        %v869 = vand.u32 %v868, 4294901760
        %870 = vmatpush.msra.mxu0 %v869
        %v871 = vand.u32 %v290, 4294901760
        %v872 = vsub.f32 %v290, %v871
        %v873 = vand.u32 %v872, 4294901760
        %874 = vmatpush.msra.mxu0 %v873
        %v875 = vand.u32 %v289, 4294901760
        %v876 = vsub.f32 %v289, %v875
        %v877 = vand.u32 %v876, 4294901760
        %878 = vmatpush.msra.mxu0 %v877
        %v879 = vand.u32 %v288, 4294901760
        %v880 = vsub.f32 %v288, %v879
        %v881 = vand.u32 %v880, 4294901760
        %882 = vmatpush.msra.mxu0 %v881
        %v883 = vand.u32 %v287, 4294901760
        %v884 = vsub.f32 %v287, %v883
        %v885 = vand.u32 %v884, 4294901760
        %886 = vmatpush.msra.mxu0 %v885
        %v887 = vand.u32 %v286, 4294901760
        %v888 = vsub.f32 %v286, %v887
        %v889 = vand.u32 %v888, 4294901760
        %890 = vmatpush.msra.mxu0 %v889
        %v891 = vand.u32 %v296, 4294901760
        %892 = vmatmul.f32.gmra.mxu0 %v891
        %v893 = vpop.f32.mrf.mxu0
        %v894 = vadd.f32 %v759, %v893
        %v895 = vand.u32 %v299, 4294901760
        %896 = vmatmul.f32.gmra.mxu0 %v895
        %v897 = vpop.f32.mrf.mxu0
        %v898 = vadd.f32 %v765, %v897
        %v899 = vand.u32 %v302, 4294901760
        %900 = vmatmul.f32.gmra.mxu0 %v899
        %v901 = vpop.f32.mrf.mxu0
        %v902 = vadd.f32 %v771, %v901
        %v903 = vand.u32 %v305, 4294901760
        %904 = vmatmul.f32.gmra.mxu0 %v903
        %v905 = vpop.f32.mrf.mxu0
        %v906 = vadd.f32 %v777, %v905
        %v907 = vand.u32 %v308, 4294901760
        %908 = vmatmul.f32.gmra.mxu0 %v907
        %v909 = vpop.f32.mrf.mxu0
        %v910 = vadd.f32 %v783, %v909
        %v911 = vand.u32 %v311, 4294901760
        %912 = vmatmul.f32.gmra.mxu0 %v911
        %v913 = vpop.f32.mrf.mxu0
        %v914 = vadd.f32 %v789, %v913
        %v915 = vand.u32 %v314, 4294901760
        %916 = vmatmul.f32.gmra.mxu0 %v915
        %v917 = vpop.f32.mrf.mxu0
        %v918 = vadd.f32 %v795, %v917
        %v919 = vand.u32 %v317, 4294901760
        %920 = vmatmul.f32.gmra.mxu0 %v919
        %v921 = vpop.f32.mrf.mxu0
        %v922 = vadd.f32 %v801, %v921
        %v923 = vand.u32 %v320, 4294901760
        %924 = vmatmul.f32.gmra.mxu0 %v923
        %v925 = vpop.f32.mrf.mxu0
        %v926 = vadd.f32 %v807, %v925
        %v927 = vand.u32 %v323, 4294901760
        %928 = vmatmul.f32.gmra.mxu0 %v927
        %v929 = vpop.f32.mrf.mxu0
        %v930 = vadd.f32 %v813, %v929
        %v931 = vand.u32 %v326, 4294901760
        %932 = vmatmul.f32.gmra.mxu0 %v931
        %v933 = vpop.f32.mrf.mxu0
        %v934 = vadd.f32 %v819, %v933
        %v935 = vand.u32 %v329, 4294901760
        %936 = vmatmul.f32.gmra.mxu0 %v935
        %v937 = vpop.f32.mrf.mxu0
        %v938 = vadd.f32 %v825, %v937
        %v939 = vand.u32 %v332, 4294901760
        %940 = vmatmul.f32.gmra.mxu0 %v939
        %v941 = vpop.f32.mrf.mxu0
        %v942 = vadd.f32 %v831, %v941
        %v943 = vand.u32 %v335, 4294901760
        %944 = vmatmul.f32.gmra.mxu0 %v943
        %v945 = vpop.f32.mrf.mxu0
        %v946 = vadd.f32 %v837, %v945
        %v947 = vand.u32 %v338, 4294901760
        %948 = vmatmul.f32.gmra.mxu0 %v947
        %v949 = vpop.f32.mrf.mxu0
        %v950 = vadd.f32 %v843, %v949
        %v951 = vand.u32 %v341, 4294901760
        %952 = vmatmul.f32.gmra.mxu0 %v951
        %v953 = vpop.f32.mrf.mxu0
        %v954 = vadd.f32 %v849, %v953
        %955 = vdwg.mxu0
        %956 = vmatpush.msra.mxu0 0.0
        %957 = vmatpush.msra.mxu0 0.0
        %958 = vmatpush.msra.mxu0 0.0
        %959 = vmatpush.msra.mxu0 0.0
        %960 = vmatpush.msra.mxu0 0.0
        %961 = vmatpush.msra.mxu0 0.0
        %962 = vmatpush.msra.mxu0 0.0
        %963 = vmatpush.msra.mxu0 0.0
        %v964 = vand.u32 %v293, 4294901760
        %965 = vmatpush.msra.mxu0 %v964
        %v966 = vand.u32 %v292, 4294901760
        %967 = vmatpush.msra.mxu0 %v966
        %v968 = vand.u32 %v291, 4294901760
        %969 = vmatpush.msra.mxu0 %v968
        %v970 = vand.u32 %v290, 4294901760
        %971 = vmatpush.msra.mxu0 %v970
        %v972 = vand.u32 %v289, 4294901760
        %973 = vmatpush.msra.mxu0 %v972
        %v974 = vand.u32 %v288, 4294901760
        %975 = vmatpush.msra.mxu0 %v974
        %v976 = vand.u32 %v287, 4294901760
        %977 = vmatpush.msra.mxu0 %v976
        %v978 = vand.u32 %v286, 4294901760
        %979 = vmatpush.msra.mxu0 %v978
        %v980 = vand.u32 %v296, 4294901760
        %981 = vmatmul.f32.gmra.mxu0 %v980
        %v982 = vpop.f32.mrf.mxu0
        %v983 = vadd.f32 %v894, %v982
        %v984 = vand.u32 %v299, 4294901760
        %985 = vmatmul.f32.gmra.mxu0 %v984
        %v986 = vpop.f32.mrf.mxu0
        %v987 = vadd.f32 %v898, %v986
        %v988 = vand.u32 %v302, 4294901760
        %989 = vmatmul.f32.gmra.mxu0 %v988
        %v990 = vpop.f32.mrf.mxu0
        %v991 = vadd.f32 %v902, %v990
        %v992 = vand.u32 %v305, 4294901760
        %993 = vmatmul.f32.gmra.mxu0 %v992
        %v994 = vpop.f32.mrf.mxu0
        %v995 = vadd.f32 %v906, %v994
        %v996 = vand.u32 %v308, 4294901760
        %997 = vmatmul.f32.gmra.mxu0 %v996
        %v998 = vpop.f32.mrf.mxu0
        %v999 = vadd.f32 %v910, %v998
        %v1000 = vand.u32 %v311, 4294901760
        %1001 = vmatmul.f32.gmra.mxu0 %v1000
        %v1002 = vpop.f32.mrf.mxu0
        %v1003 = vadd.f32 %v914, %v1002
        %v1004 = vand.u32 %v314, 4294901760
        %1005 = vmatmul.f32.gmra.mxu0 %v1004
        %v1006 = vpop.f32.mrf.mxu0
        %v1007 = vadd.f32 %v918, %v1006
        %v1008 = vand.u32 %v317, 4294901760
        %1009 = vmatmul.f32.gmra.mxu0 %v1008
        %v1010 = vpop.f32.mrf.mxu0
        %v1011 = vadd.f32 %v922, %v1010
        %v1012 = vand.u32 %v320, 4294901760
        %1013 = vmatmul.f32.gmra.mxu0 %v1012
        %v1014 = vpop.f32.mrf.mxu0
        %v1015 = vadd.f32 %v926, %v1014
        %v1016 = vand.u32 %v323, 4294901760
        %1017 = vmatmul.f32.gmra.mxu0 %v1016
        %v1018 = vpop.f32.mrf.mxu0
        %v1019 = vadd.f32 %v930, %v1018
        %v1020 = vand.u32 %v326, 4294901760
        %1021 = vmatmul.f32.gmra.mxu0 %v1020
        %v1022 = vpop.f32.mrf.mxu0
        %v1023 = vadd.f32 %v934, %v1022
        %v1024 = vand.u32 %v329, 4294901760
        %1025 = vmatmul.f32.gmra.mxu0 %v1024
        %v1026 = vpop.f32.mrf.mxu0
        %v1027 = vadd.f32 %v938, %v1026
        %v1028 = vand.u32 %v332, 4294901760
        %1029 = vmatmul.f32.gmra.mxu0 %v1028
        %v1030 = vpop.f32.mrf.mxu0
        %v1031 = vadd.f32 %v942, %v1030
        %v1032 = vand.u32 %v335, 4294901760
        %1033 = vmatmul.f32.gmra.mxu0 %v1032
        %v1034 = vpop.f32.mrf.mxu0
        %v1035 = vadd.f32 %v946, %v1034
        %v1036 = vand.u32 %v338, 4294901760
        %1037 = vmatmul.f32.gmra.mxu0 %v1036
        %v1038 = vpop.f32.mrf.mxu0
        %v1039 = vadd.f32 %v950, %v1038
        %v1040 = vand.u32 %v341, 4294901760
        %1041 = vmatmul.f32.gmra.mxu0 %v1040
        %v1042 = vpop.f32.mrf.mxu0
        %v1043 = vadd.f32 %v954, %v1042
        %1044 = vdwg.mxu0
        %v1046 = vsel %vm294, %v244, 0
        %v1049 = vsel %vm294, %v245, 0
        %v1052 = vsel %vm294, %v246, 0
        %v1055 = vsel %vm294, %v247, 0
        %v1058 = vsel %vm294, %v248, 0
        %v1061 = vsel %vm294, %v249, 0
        %v1064 = vsel %vm294, %v250, 0
        %v1067 = vsel %vm294, %v251, 0
        %v1070 = vsel %vm294, %v252, 0
        %v1073 = vsel %vm294, %v253, 0
        %v1076 = vsel %vm294, %v254, 0
        %v1079 = vsel %vm294, %v255, 0
        %v1082 = vsel %vm294, %v256, 0
        %v1085 = vsel %vm294, %v257, 0
        %v1088 = vsel %vm294, %v258, 0
        %v1091 = vsel %vm294, %v259, 0
        %1093 = vmatpush.msra.mxu0 0.0
        %1094 = vmatpush.msra.mxu0 0.0
        %1095 = vmatpush.msra.mxu0 0.0
        %1096 = vmatpush.msra.mxu0 0.0
        %1097 = vmatpush.msra.mxu0 0.0
        %1098 = vmatpush.msra.mxu0 0.0
        %1099 = vmatpush.msra.mxu0 0.0
        %1100 = vmatpush.msra.mxu0 0.0
        %v1101 = vand.u32 %v267, 4294901760
        %1102 = vmatpush.msra.mxu0 %v1101
        %v1103 = vand.u32 %v266, 4294901760
        %1104 = vmatpush.msra.mxu0 %v1103
        %v1105 = vand.u32 %v265, 4294901760
        %1106 = vmatpush.msra.mxu0 %v1105
        %v1107 = vand.u32 %v264, 4294901760
        %1108 = vmatpush.msra.mxu0 %v1107
        %v1109 = vand.u32 %v263, 4294901760
        %1110 = vmatpush.msra.mxu0 %v1109
        %v1111 = vand.u32 %v262, 4294901760
        %1112 = vmatpush.msra.mxu0 %v1111
        %v1113 = vand.u32 %v261, 4294901760
        %1114 = vmatpush.msra.mxu0 %v1113
        %v1115 = vand.u32 %v260, 4294901760
        %1116 = vmatpush.msra.mxu0 %v1115
        %v1117 = vand.u32 %v1046, 4294901760
        %v1118 = vsub.f32 %v1046, %v1117
        %v1119 = vand.u32 %v1118, 4294901760
        %v1120 = vsub.f32 %v1118, %v1119
        %v1121 = vand.u32 %v1120, 4294901760
        %1122 = vmatmul.f32.gmra.mxu0 %v1121
        %v1123 = vpop.f32.mrf.mxu0
        %v1124 = vadd.f32 %v983, %v1123
        %v1125 = vand.u32 %v1049, 4294901760
        %v1126 = vsub.f32 %v1049, %v1125
        %v1127 = vand.u32 %v1126, 4294901760
        %v1128 = vsub.f32 %v1126, %v1127
        %v1129 = vand.u32 %v1128, 4294901760
        %1130 = vmatmul.f32.gmra.mxu0 %v1129
        %v1131 = vpop.f32.mrf.mxu0
        %v1132 = vadd.f32 %v987, %v1131
        %v1133 = vand.u32 %v1052, 4294901760
        %v1134 = vsub.f32 %v1052, %v1133
        %v1135 = vand.u32 %v1134, 4294901760
        %v1136 = vsub.f32 %v1134, %v1135
        %v1137 = vand.u32 %v1136, 4294901760
        %1138 = vmatmul.f32.gmra.mxu0 %v1137
        %v1139 = vpop.f32.mrf.mxu0
        %v1140 = vadd.f32 %v991, %v1139
        %v1141 = vand.u32 %v1055, 4294901760
        %v1142 = vsub.f32 %v1055, %v1141
        %v1143 = vand.u32 %v1142, 4294901760
        %v1144 = vsub.f32 %v1142, %v1143
        %v1145 = vand.u32 %v1144, 4294901760
        %1146 = vmatmul.f32.gmra.mxu0 %v1145
        %v1147 = vpop.f32.mrf.mxu0
        %v1148 = vadd.f32 %v995, %v1147
        %v1149 = vand.u32 %v1058, 4294901760
        %v1150 = vsub.f32 %v1058, %v1149
        %v1151 = vand.u32 %v1150, 4294901760
        %v1152 = vsub.f32 %v1150, %v1151
        %v1153 = vand.u32 %v1152, 4294901760
        %1154 = vmatmul.f32.gmra.mxu0 %v1153
        %v1155 = vpop.f32.mrf.mxu0
        %v1156 = vadd.f32 %v999, %v1155
        %v1157 = vand.u32 %v1061, 4294901760
        %v1158 = vsub.f32 %v1061, %v1157
        %v1159 = vand.u32 %v1158, 4294901760
        %v1160 = vsub.f32 %v1158, %v1159
        %v1161 = vand.u32 %v1160, 4294901760
        %1162 = vmatmul.f32.gmra.mxu0 %v1161
        %v1163 = vpop.f32.mrf.mxu0
        %v1164 = vadd.f32 %v1003, %v1163
        %v1165 = vand.u32 %v1064, 4294901760
        %v1166 = vsub.f32 %v1064, %v1165
        %v1167 = vand.u32 %v1166, 4294901760
        %v1168 = vsub.f32 %v1166, %v1167
        %v1169 = vand.u32 %v1168, 4294901760
        %1170 = vmatmul.f32.gmra.mxu0 %v1169
        %v1171 = vpop.f32.mrf.mxu0
        %v1172 = vadd.f32 %v1007, %v1171
        %v1173 = vand.u32 %v1067, 4294901760
        %v1174 = vsub.f32 %v1067, %v1173
        %v1175 = vand.u32 %v1174, 4294901760
        %v1176 = vsub.f32 %v1174, %v1175
        %v1177 = vand.u32 %v1176, 4294901760
        %1178 = vmatmul.f32.gmra.mxu0 %v1177
        %v1179 = vpop.f32.mrf.mxu0
        %v1180 = vadd.f32 %v1011, %v1179
        %v1181 = vand.u32 %v1070, 4294901760
        %v1182 = vsub.f32 %v1070, %v1181
        %v1183 = vand.u32 %v1182, 4294901760
        %v1184 = vsub.f32 %v1182, %v1183
        %v1185 = vand.u32 %v1184, 4294901760
        %1186 = vmatmul.f32.gmra.mxu0 %v1185
        %v1187 = vpop.f32.mrf.mxu0
        %v1188 = vadd.f32 %v1015, %v1187
        %v1189 = vand.u32 %v1073, 4294901760
        %v1190 = vsub.f32 %v1073, %v1189
        %v1191 = vand.u32 %v1190, 4294901760
        %v1192 = vsub.f32 %v1190, %v1191
        %v1193 = vand.u32 %v1192, 4294901760
        %1194 = vmatmul.f32.gmra.mxu0 %v1193
        %v1195 = vpop.f32.mrf.mxu0
        %v1196 = vadd.f32 %v1019, %v1195
        %v1197 = vand.u32 %v1076, 4294901760
        %v1198 = vsub.f32 %v1076, %v1197
        %v1199 = vand.u32 %v1198, 4294901760
        %v1200 = vsub.f32 %v1198, %v1199
        %v1201 = vand.u32 %v1200, 4294901760
        %1202 = vmatmul.f32.gmra.mxu0 %v1201
        %v1203 = vpop.f32.mrf.mxu0
        %v1204 = vadd.f32 %v1023, %v1203
        %v1205 = vand.u32 %v1079, 4294901760
        %v1206 = vsub.f32 %v1079, %v1205
        %v1207 = vand.u32 %v1206, 4294901760
        %v1208 = vsub.f32 %v1206, %v1207
        %v1209 = vand.u32 %v1208, 4294901760
        %1210 = vmatmul.f32.gmra.mxu0 %v1209
        %v1211 = vpop.f32.mrf.mxu0
        %v1212 = vadd.f32 %v1027, %v1211
        %v1213 = vand.u32 %v1082, 4294901760
        %v1214 = vsub.f32 %v1082, %v1213
        %v1215 = vand.u32 %v1214, 4294901760
        %v1216 = vsub.f32 %v1214, %v1215
        %v1217 = vand.u32 %v1216, 4294901760
        %1218 = vmatmul.f32.gmra.mxu0 %v1217
        %v1219 = vpop.f32.mrf.mxu0
        %v1220 = vadd.f32 %v1031, %v1219
        %v1221 = vand.u32 %v1085, 4294901760
        %v1222 = vsub.f32 %v1085, %v1221
        %v1223 = vand.u32 %v1222, 4294901760
        %v1224 = vsub.f32 %v1222, %v1223
        %v1225 = vand.u32 %v1224, 4294901760
        %1226 = vmatmul.f32.gmra.mxu0 %v1225
        %v1227 = vpop.f32.mrf.mxu0
        %v1228 = vadd.f32 %v1035, %v1227
        %v1229 = vand.u32 %v1088, 4294901760
        %v1230 = vsub.f32 %v1088, %v1229
        %v1231 = vand.u32 %v1230, 4294901760
        %v1232 = vsub.f32 %v1230, %v1231
        %v1233 = vand.u32 %v1232, 4294901760
        %1234 = vmatmul.f32.gmra.mxu0 %v1233
        %v1235 = vpop.f32.mrf.mxu0
        %v1236 = vadd.f32 %v1039, %v1235
        %v1237 = vand.u32 %v1091, 4294901760
        %v1238 = vsub.f32 %v1091, %v1237
        %v1239 = vand.u32 %v1238, 4294901760
        %v1240 = vsub.f32 %v1238, %v1239
        %v1241 = vand.u32 %v1240, 4294901760
        %1242 = vmatmul.f32.gmra.mxu0 %v1241
        %v1243 = vpop.f32.mrf.mxu0
        %v1244 = vadd.f32 %v1043, %v1243
        %1245 = vdwg.mxu0
        %1246 = vmatpush.msra.mxu0 0.0
        %1247 = vmatpush.msra.mxu0 0.0
        %1248 = vmatpush.msra.mxu0 0.0
        %1249 = vmatpush.msra.mxu0 0.0
        %1250 = vmatpush.msra.mxu0 0.0
        %1251 = vmatpush.msra.mxu0 0.0
        %1252 = vmatpush.msra.mxu0 0.0
        %1253 = vmatpush.msra.mxu0 0.0
        %v1254 = vand.u32 %v267, 4294901760
        %v1255 = vsub.f32 %v267, %v1254
        %v1256 = vand.u32 %v1255, 4294901760
        %v1257 = vsub.f32 %v1255, %v1256
        %v1258 = vand.u32 %v1257, 4294901760
        %1259 = vmatpush.msra.mxu0 %v1258
        %v1260 = vand.u32 %v266, 4294901760
        %v1261 = vsub.f32 %v266, %v1260
        %v1262 = vand.u32 %v1261, 4294901760
        %v1263 = vsub.f32 %v1261, %v1262
        %v1264 = vand.u32 %v1263, 4294901760
        %1265 = vmatpush.msra.mxu0 %v1264
        %v1266 = vand.u32 %v265, 4294901760
        %v1267 = vsub.f32 %v265, %v1266
        %v1268 = vand.u32 %v1267, 4294901760
        %v1269 = vsub.f32 %v1267, %v1268
        %v1270 = vand.u32 %v1269, 4294901760
        %1271 = vmatpush.msra.mxu0 %v1270
        %v1272 = vand.u32 %v264, 4294901760
        %v1273 = vsub.f32 %v264, %v1272
        %v1274 = vand.u32 %v1273, 4294901760
        %v1275 = vsub.f32 %v1273, %v1274
        %v1276 = vand.u32 %v1275, 4294901760
        %1277 = vmatpush.msra.mxu0 %v1276
        %v1278 = vand.u32 %v263, 4294901760
        %v1279 = vsub.f32 %v263, %v1278
        %v1280 = vand.u32 %v1279, 4294901760
        %v1281 = vsub.f32 %v1279, %v1280
        %v1282 = vand.u32 %v1281, 4294901760
        %1283 = vmatpush.msra.mxu0 %v1282
        %v1284 = vand.u32 %v262, 4294901760
        %v1285 = vsub.f32 %v262, %v1284
        %v1286 = vand.u32 %v1285, 4294901760
        %v1287 = vsub.f32 %v1285, %v1286
        %v1288 = vand.u32 %v1287, 4294901760
        %1289 = vmatpush.msra.mxu0 %v1288
        %v1290 = vand.u32 %v261, 4294901760
        %v1291 = vsub.f32 %v261, %v1290
        %v1292 = vand.u32 %v1291, 4294901760
        %v1293 = vsub.f32 %v1291, %v1292
        %v1294 = vand.u32 %v1293, 4294901760
        %1295 = vmatpush.msra.mxu0 %v1294
        %v1296 = vand.u32 %v260, 4294901760
        %v1297 = vsub.f32 %v260, %v1296
        %v1298 = vand.u32 %v1297, 4294901760
        %v1299 = vsub.f32 %v1297, %v1298
        %v1300 = vand.u32 %v1299, 4294901760
        %1301 = vmatpush.msra.mxu0 %v1300
        %v1302 = vand.u32 %v1046, 4294901760
        %1303 = vmatmul.f32.gmra.mxu0 %v1302
        %v1304 = vpop.f32.mrf.mxu0
        %v1305 = vadd.f32 %v1124, %v1304
        %v1306 = vand.u32 %v1049, 4294901760
        %1307 = vmatmul.f32.gmra.mxu0 %v1306
        %v1308 = vpop.f32.mrf.mxu0
        %v1309 = vadd.f32 %v1132, %v1308
        %v1310 = vand.u32 %v1052, 4294901760
        %1311 = vmatmul.f32.gmra.mxu0 %v1310
        %v1312 = vpop.f32.mrf.mxu0
        %v1313 = vadd.f32 %v1140, %v1312
        %v1314 = vand.u32 %v1055, 4294901760
        %1315 = vmatmul.f32.gmra.mxu0 %v1314
        %v1316 = vpop.f32.mrf.mxu0
        %v1317 = vadd.f32 %v1148, %v1316
        %v1318 = vand.u32 %v1058, 4294901760
        %1319 = vmatmul.f32.gmra.mxu0 %v1318
        %v1320 = vpop.f32.mrf.mxu0
        %v1321 = vadd.f32 %v1156, %v1320
        %v1322 = vand.u32 %v1061, 4294901760
        %1323 = vmatmul.f32.gmra.mxu0 %v1322
        %v1324 = vpop.f32.mrf.mxu0
        %v1325 = vadd.f32 %v1164, %v1324
        %v1326 = vand.u32 %v1064, 4294901760
        %1327 = vmatmul.f32.gmra.mxu0 %v1326
        %v1328 = vpop.f32.mrf.mxu0
        %v1329 = vadd.f32 %v1172, %v1328
        %v1330 = vand.u32 %v1067, 4294901760
        %1331 = vmatmul.f32.gmra.mxu0 %v1330
        %v1332 = vpop.f32.mrf.mxu0
        %v1333 = vadd.f32 %v1180, %v1332
        %v1334 = vand.u32 %v1070, 4294901760
        %1335 = vmatmul.f32.gmra.mxu0 %v1334
        %v1336 = vpop.f32.mrf.mxu0
        %v1337 = vadd.f32 %v1188, %v1336
        %v1338 = vand.u32 %v1073, 4294901760
        %1339 = vmatmul.f32.gmra.mxu0 %v1338
        %v1340 = vpop.f32.mrf.mxu0
        %v1341 = vadd.f32 %v1196, %v1340
        %v1342 = vand.u32 %v1076, 4294901760
        %1343 = vmatmul.f32.gmra.mxu0 %v1342
        %v1344 = vpop.f32.mrf.mxu0
        %v1345 = vadd.f32 %v1204, %v1344
        %v1346 = vand.u32 %v1079, 4294901760
        %1347 = vmatmul.f32.gmra.mxu0 %v1346
        %v1348 = vpop.f32.mrf.mxu0
        %v1349 = vadd.f32 %v1212, %v1348
        %v1350 = vand.u32 %v1082, 4294901760
        %1351 = vmatmul.f32.gmra.mxu0 %v1350
        %v1352 = vpop.f32.mrf.mxu0
        %v1353 = vadd.f32 %v1220, %v1352
        %v1354 = vand.u32 %v1085, 4294901760
        %1355 = vmatmul.f32.gmra.mxu0 %v1354
        %v1356 = vpop.f32.mrf.mxu0
        %v1357 = vadd.f32 %v1228, %v1356
        %v1358 = vand.u32 %v1088, 4294901760
        %1359 = vmatmul.f32.gmra.mxu0 %v1358
        %v1360 = vpop.f32.mrf.mxu0
        %v1361 = vadd.f32 %v1236, %v1360
        %v1362 = vand.u32 %v1091, 4294901760
        %1363 = vmatmul.f32.gmra.mxu0 %v1362
        %v1364 = vpop.f32.mrf.mxu0
        %v1365 = vadd.f32 %v1244, %v1364
        %1366 = vdwg.mxu0
        %1367 = vmatpush.msra.mxu0 0.0
        %1368 = vmatpush.msra.mxu0 0.0
        %1369 = vmatpush.msra.mxu0 0.0
        %1370 = vmatpush.msra.mxu0 0.0
        %1371 = vmatpush.msra.mxu0 0.0
        %1372 = vmatpush.msra.mxu0 0.0
        %1373 = vmatpush.msra.mxu0 0.0
        %1374 = vmatpush.msra.mxu0 0.0
        %v1375 = vand.u32 %v267, 4294901760
        %v1376 = vsub.f32 %v267, %v1375
        %1377 = vmatpush.msra.mxu0 %v1376
        %v1378 = vand.u32 %v266, 4294901760
        %v1379 = vsub.f32 %v266, %v1378
        %1380 = vmatpush.msra.mxu0 %v1379
        %v1381 = vand.u32 %v265, 4294901760
        %v1382 = vsub.f32 %v265, %v1381
        %1383 = vmatpush.msra.mxu0 %v1382
        %v1384 = vand.u32 %v264, 4294901760
        %v1385 = vsub.f32 %v264, %v1384
        %1386 = vmatpush.msra.mxu0 %v1385
        %v1387 = vand.u32 %v263, 4294901760
        %v1388 = vsub.f32 %v263, %v1387
        %1389 = vmatpush.msra.mxu0 %v1388
        %v1390 = vand.u32 %v262, 4294901760
        %v1391 = vsub.f32 %v262, %v1390
        %1392 = vmatpush.msra.mxu0 %v1391
        %v1393 = vand.u32 %v261, 4294901760
        %v1394 = vsub.f32 %v261, %v1393
        %1395 = vmatpush.msra.mxu0 %v1394
        %v1396 = vand.u32 %v260, 4294901760
        %v1397 = vsub.f32 %v260, %v1396
        %1398 = vmatpush.msra.mxu0 %v1397
        %v1399 = vand.u32 %v1046, 4294901760
        %v1400 = vsub.f32 %v1046, %v1399
        %1401 = vmatmul.f32.gmra.mxu0 %v1400
        %v1402 = vpop.f32.mrf.mxu0
        %v1403 = vadd.f32 %v1305, %v1402
        %v1404 = vand.u32 %v1049, 4294901760
        %v1405 = vsub.f32 %v1049, %v1404
        %1406 = vmatmul.f32.gmra.mxu0 %v1405
        %v1407 = vpop.f32.mrf.mxu0
        %v1408 = vadd.f32 %v1309, %v1407
        %v1409 = vand.u32 %v1052, 4294901760
        %v1410 = vsub.f32 %v1052, %v1409
        %1411 = vmatmul.f32.gmra.mxu0 %v1410
        %v1412 = vpop.f32.mrf.mxu0
        %v1413 = vadd.f32 %v1313, %v1412
        %v1414 = vand.u32 %v1055, 4294901760
        %v1415 = vsub.f32 %v1055, %v1414
        %1416 = vmatmul.f32.gmra.mxu0 %v1415
        %v1417 = vpop.f32.mrf.mxu0
        %v1418 = vadd.f32 %v1317, %v1417
        %v1419 = vand.u32 %v1058, 4294901760
        %v1420 = vsub.f32 %v1058, %v1419
        %1421 = vmatmul.f32.gmra.mxu0 %v1420
        %v1422 = vpop.f32.mrf.mxu0
        %v1423 = vadd.f32 %v1321, %v1422
        %v1424 = vand.u32 %v1061, 4294901760
        %v1425 = vsub.f32 %v1061, %v1424
        %1426 = vmatmul.f32.gmra.mxu0 %v1425
        %v1427 = vpop.f32.mrf.mxu0
        %v1428 = vadd.f32 %v1325, %v1427
        %v1429 = vand.u32 %v1064, 4294901760
        %v1430 = vsub.f32 %v1064, %v1429
        %1431 = vmatmul.f32.gmra.mxu0 %v1430
        %v1432 = vpop.f32.mrf.mxu0
        %v1433 = vadd.f32 %v1329, %v1432
        %v1434 = vand.u32 %v1067, 4294901760
        %v1435 = vsub.f32 %v1067, %v1434
        %1436 = vmatmul.f32.gmra.mxu0 %v1435
        %v1437 = vpop.f32.mrf.mxu0
        %v1438 = vadd.f32 %v1333, %v1437
        %v1439 = vand.u32 %v1070, 4294901760
        %v1440 = vsub.f32 %v1070, %v1439
        %1441 = vmatmul.f32.gmra.mxu0 %v1440
        %v1442 = vpop.f32.mrf.mxu0
        %v1443 = vadd.f32 %v1337, %v1442
        %v1444 = vand.u32 %v1073, 4294901760
        %v1445 = vsub.f32 %v1073, %v1444
        %1446 = vmatmul.f32.gmra.mxu0 %v1445
        %v1447 = vpop.f32.mrf.mxu0
        %v1448 = vadd.f32 %v1341, %v1447
        %v1449 = vand.u32 %v1076, 4294901760
        %v1450 = vsub.f32 %v1076, %v1449
        %1451 = vmatmul.f32.gmra.mxu0 %v1450
        %v1452 = vpop.f32.mrf.mxu0
        %v1453 = vadd.f32 %v1345, %v1452
        %v1454 = vand.u32 %v1079, 4294901760
        %v1455 = vsub.f32 %v1079, %v1454
        %1456 = vmatmul.f32.gmra.mxu0 %v1455
        %v1457 = vpop.f32.mrf.mxu0
        %v1458 = vadd.f32 %v1349, %v1457
        %v1459 = vand.u32 %v1082, 4294901760
        %v1460 = vsub.f32 %v1082, %v1459
        %1461 = vmatmul.f32.gmra.mxu0 %v1460
        %v1462 = vpop.f32.mrf.mxu0
        %v1463 = vadd.f32 %v1353, %v1462
        %v1464 = vand.u32 %v1085, 4294901760
        %v1465 = vsub.f32 %v1085, %v1464
        %1466 = vmatmul.f32.gmra.mxu0 %v1465
        %v1467 = vpop.f32.mrf.mxu0
        %v1468 = vadd.f32 %v1357, %v1467
        %v1469 = vand.u32 %v1088, 4294901760
        %v1470 = vsub.f32 %v1088, %v1469
        %1471 = vmatmul.f32.gmra.mxu0 %v1470
        %v1472 = vpop.f32.mrf.mxu0
        %v1473 = vadd.f32 %v1361, %v1472
        %v1474 = vand.u32 %v1091, 4294901760
        %v1475 = vsub.f32 %v1091, %v1474
        %1476 = vmatmul.f32.gmra.mxu0 %v1475
        %v1477 = vpop.f32.mrf.mxu0
        %v1478 = vadd.f32 %v1365, %v1477
        %1479 = vdwg.mxu0
        %1480 = vmatpush.msra.mxu0 0.0
        %1481 = vmatpush.msra.mxu0 0.0
        %1482 = vmatpush.msra.mxu0 0.0
        %1483 = vmatpush.msra.mxu0 0.0
        %1484 = vmatpush.msra.mxu0 0.0
        %1485 = vmatpush.msra.mxu0 0.0
        %1486 = vmatpush.msra.mxu0 0.0
        %1487 = vmatpush.msra.mxu0 0.0
        %v1488 = vand.u32 %v267, 4294901760
        %1489 = vmatpush.msra.mxu0 %v1488
        %v1490 = vand.u32 %v266, 4294901760
        %1491 = vmatpush.msra.mxu0 %v1490
        %v1492 = vand.u32 %v265, 4294901760
        %1493 = vmatpush.msra.mxu0 %v1492
        %v1494 = vand.u32 %v264, 4294901760
        %1495 = vmatpush.msra.mxu0 %v1494
        %v1496 = vand.u32 %v263, 4294901760
        %1497 = vmatpush.msra.mxu0 %v1496
        %v1498 = vand.u32 %v262, 4294901760
        %1499 = vmatpush.msra.mxu0 %v1498
        %v1500 = vand.u32 %v261, 4294901760
        %1501 = vmatpush.msra.mxu0 %v1500
        %v1502 = vand.u32 %v260, 4294901760
        %1503 = vmatpush.msra.mxu0 %v1502
        %v1504 = vand.u32 %v1046, 4294901760
        %v1505 = vsub.f32 %v1046, %v1504
        %v1506 = vand.u32 %v1505, 4294901760
        %1507 = vmatmul.f32.gmra.mxu0 %v1506
        %v1508 = vpop.f32.mrf.mxu0
        %v1509 = vadd.f32 %v1403, %v1508
        %v1510 = vand.u32 %v1049, 4294901760
        %v1511 = vsub.f32 %v1049, %v1510
        %v1512 = vand.u32 %v1511, 4294901760
        %1513 = vmatmul.f32.gmra.mxu0 %v1512
        %v1514 = vpop.f32.mrf.mxu0
        %v1515 = vadd.f32 %v1408, %v1514
        %v1516 = vand.u32 %v1052, 4294901760
        %v1517 = vsub.f32 %v1052, %v1516
        %v1518 = vand.u32 %v1517, 4294901760
        %1519 = vmatmul.f32.gmra.mxu0 %v1518
        %v1520 = vpop.f32.mrf.mxu0
        %v1521 = vadd.f32 %v1413, %v1520
        %v1522 = vand.u32 %v1055, 4294901760
        %v1523 = vsub.f32 %v1055, %v1522
        %v1524 = vand.u32 %v1523, 4294901760
        %1525 = vmatmul.f32.gmra.mxu0 %v1524
        %v1526 = vpop.f32.mrf.mxu0
        %v1527 = vadd.f32 %v1418, %v1526
        %v1528 = vand.u32 %v1058, 4294901760
        %v1529 = vsub.f32 %v1058, %v1528
        %v1530 = vand.u32 %v1529, 4294901760
        %1531 = vmatmul.f32.gmra.mxu0 %v1530
        %v1532 = vpop.f32.mrf.mxu0
        %v1533 = vadd.f32 %v1423, %v1532
        %v1534 = vand.u32 %v1061, 4294901760
        %v1535 = vsub.f32 %v1061, %v1534
        %v1536 = vand.u32 %v1535, 4294901760
        %1537 = vmatmul.f32.gmra.mxu0 %v1536
        %v1538 = vpop.f32.mrf.mxu0
        %v1539 = vadd.f32 %v1428, %v1538
        %v1540 = vand.u32 %v1064, 4294901760
        %v1541 = vsub.f32 %v1064, %v1540
        %v1542 = vand.u32 %v1541, 4294901760
        %1543 = vmatmul.f32.gmra.mxu0 %v1542
        %v1544 = vpop.f32.mrf.mxu0
        %v1545 = vadd.f32 %v1433, %v1544
        %v1546 = vand.u32 %v1067, 4294901760
        %v1547 = vsub.f32 %v1067, %v1546
        %v1548 = vand.u32 %v1547, 4294901760
        %1549 = vmatmul.f32.gmra.mxu0 %v1548
        %v1550 = vpop.f32.mrf.mxu0
        %v1551 = vadd.f32 %v1438, %v1550
        %v1552 = vand.u32 %v1070, 4294901760
        %v1553 = vsub.f32 %v1070, %v1552
        %v1554 = vand.u32 %v1553, 4294901760
        %1555 = vmatmul.f32.gmra.mxu0 %v1554
        %v1556 = vpop.f32.mrf.mxu0
        %v1557 = vadd.f32 %v1443, %v1556
        %v1558 = vand.u32 %v1073, 4294901760
        %v1559 = vsub.f32 %v1073, %v1558
        %v1560 = vand.u32 %v1559, 4294901760
        %1561 = vmatmul.f32.gmra.mxu0 %v1560
        %v1562 = vpop.f32.mrf.mxu0
        %v1563 = vadd.f32 %v1448, %v1562
        %v1564 = vand.u32 %v1076, 4294901760
        %v1565 = vsub.f32 %v1076, %v1564
        %v1566 = vand.u32 %v1565, 4294901760
        %1567 = vmatmul.f32.gmra.mxu0 %v1566
        %v1568 = vpop.f32.mrf.mxu0
        %v1569 = vadd.f32 %v1453, %v1568
        %v1570 = vand.u32 %v1079, 4294901760
        %v1571 = vsub.f32 %v1079, %v1570
        %v1572 = vand.u32 %v1571, 4294901760
        %1573 = vmatmul.f32.gmra.mxu0 %v1572
        %v1574 = vpop.f32.mrf.mxu0
        %v1575 = vadd.f32 %v1458, %v1574
        %v1576 = vand.u32 %v1082, 4294901760
        %v1577 = vsub.f32 %v1082, %v1576
        %v1578 = vand.u32 %v1577, 4294901760
        %1579 = vmatmul.f32.gmra.mxu0 %v1578
        %v1580 = vpop.f32.mrf.mxu0
        %v1581 = vadd.f32 %v1463, %v1580
        %v1582 = vand.u32 %v1085, 4294901760
        %v1583 = vsub.f32 %v1085, %v1582
        %v1584 = vand.u32 %v1583, 4294901760
        %1585 = vmatmul.f32.gmra.mxu0 %v1584
        %v1586 = vpop.f32.mrf.mxu0
        %v1587 = vadd.f32 %v1468, %v1586
        %v1588 = vand.u32 %v1088, 4294901760
        %v1589 = vsub.f32 %v1088, %v1588
        %v1590 = vand.u32 %v1589, 4294901760
        %1591 = vmatmul.f32.gmra.mxu0 %v1590
        %v1592 = vpop.f32.mrf.mxu0
        %v1593 = vadd.f32 %v1473, %v1592
        %v1594 = vand.u32 %v1091, 4294901760
        %v1595 = vsub.f32 %v1091, %v1594
        %v1596 = vand.u32 %v1595, 4294901760
        %1597 = vmatmul.f32.gmra.mxu0 %v1596
        %v1598 = vpop.f32.mrf.mxu0
        %v1599 = vadd.f32 %v1478, %v1598
        %1600 = vdwg.mxu0
        %1601 = vmatpush.msra.mxu0 0.0
        %1602 = vmatpush.msra.mxu0 0.0
        %1603 = vmatpush.msra.mxu0 0.0
        %1604 = vmatpush.msra.mxu0 0.0
        %1605 = vmatpush.msra.mxu0 0.0
        %1606 = vmatpush.msra.mxu0 0.0
        %1607 = vmatpush.msra.mxu0 0.0
        %1608 = vmatpush.msra.mxu0 0.0
        %v1609 = vand.u32 %v267, 4294901760
        %v1610 = vsub.f32 %v267, %v1609
        %v1611 = vand.u32 %v1610, 4294901760
        %1612 = vmatpush.msra.mxu0 %v1611
        %v1613 = vand.u32 %v266, 4294901760
        %v1614 = vsub.f32 %v266, %v1613
        %v1615 = vand.u32 %v1614, 4294901760
        %1616 = vmatpush.msra.mxu0 %v1615
        %v1617 = vand.u32 %v265, 4294901760
        %v1618 = vsub.f32 %v265, %v1617
        %v1619 = vand.u32 %v1618, 4294901760
        %1620 = vmatpush.msra.mxu0 %v1619
        %v1621 = vand.u32 %v264, 4294901760
        %v1622 = vsub.f32 %v264, %v1621
        %v1623 = vand.u32 %v1622, 4294901760
        %1624 = vmatpush.msra.mxu0 %v1623
        %v1625 = vand.u32 %v263, 4294901760
        %v1626 = vsub.f32 %v263, %v1625
        %v1627 = vand.u32 %v1626, 4294901760
        %1628 = vmatpush.msra.mxu0 %v1627
        %v1629 = vand.u32 %v262, 4294901760
        %v1630 = vsub.f32 %v262, %v1629
        %v1631 = vand.u32 %v1630, 4294901760
        %1632 = vmatpush.msra.mxu0 %v1631
        %v1633 = vand.u32 %v261, 4294901760
        %v1634 = vsub.f32 %v261, %v1633
        %v1635 = vand.u32 %v1634, 4294901760
        %1636 = vmatpush.msra.mxu0 %v1635
        %v1637 = vand.u32 %v260, 4294901760
        %v1638 = vsub.f32 %v260, %v1637
        %v1639 = vand.u32 %v1638, 4294901760
        %1640 = vmatpush.msra.mxu0 %v1639
        %v1641 = vand.u32 %v1046, 4294901760
        %1642 = vmatmul.f32.gmra.mxu0 %v1641
        %v1643 = vpop.f32.mrf.mxu0
        %v1644 = vadd.f32 %v1509, %v1643
        %v1645 = vand.u32 %v1049, 4294901760
        %1646 = vmatmul.f32.gmra.mxu0 %v1645
        %v1647 = vpop.f32.mrf.mxu0
        %v1648 = vadd.f32 %v1515, %v1647
        %v1649 = vand.u32 %v1052, 4294901760
        %1650 = vmatmul.f32.gmra.mxu0 %v1649
        %v1651 = vpop.f32.mrf.mxu0
        %v1652 = vadd.f32 %v1521, %v1651
        %v1653 = vand.u32 %v1055, 4294901760
        %1654 = vmatmul.f32.gmra.mxu0 %v1653
        %v1655 = vpop.f32.mrf.mxu0
        %v1656 = vadd.f32 %v1527, %v1655
        %v1657 = vand.u32 %v1058, 4294901760
        %1658 = vmatmul.f32.gmra.mxu0 %v1657
        %v1659 = vpop.f32.mrf.mxu0
        %v1660 = vadd.f32 %v1533, %v1659
        %v1661 = vand.u32 %v1061, 4294901760
        %1662 = vmatmul.f32.gmra.mxu0 %v1661
        %v1663 = vpop.f32.mrf.mxu0
        %v1664 = vadd.f32 %v1539, %v1663
        %v1665 = vand.u32 %v1064, 4294901760
        %1666 = vmatmul.f32.gmra.mxu0 %v1665
        %v1667 = vpop.f32.mrf.mxu0
        %v1668 = vadd.f32 %v1545, %v1667
        %v1669 = vand.u32 %v1067, 4294901760
        %1670 = vmatmul.f32.gmra.mxu0 %v1669
        %v1671 = vpop.f32.mrf.mxu0
        %v1672 = vadd.f32 %v1551, %v1671
        %v1673 = vand.u32 %v1070, 4294901760
        %1674 = vmatmul.f32.gmra.mxu0 %v1673
        %v1675 = vpop.f32.mrf.mxu0
        %v1676 = vadd.f32 %v1557, %v1675
        %v1677 = vand.u32 %v1073, 4294901760
        %1678 = vmatmul.f32.gmra.mxu0 %v1677
        %v1679 = vpop.f32.mrf.mxu0
        %v1680 = vadd.f32 %v1563, %v1679
        %v1681 = vand.u32 %v1076, 4294901760
        %1682 = vmatmul.f32.gmra.mxu0 %v1681
        %v1683 = vpop.f32.mrf.mxu0
        %v1684 = vadd.f32 %v1569, %v1683
        %v1685 = vand.u32 %v1079, 4294901760
        %1686 = vmatmul.f32.gmra.mxu0 %v1685
        %v1687 = vpop.f32.mrf.mxu0
        %v1688 = vadd.f32 %v1575, %v1687
        %v1689 = vand.u32 %v1082, 4294901760
        %1690 = vmatmul.f32.gmra.mxu0 %v1689
        %v1691 = vpop.f32.mrf.mxu0
        %v1692 = vadd.f32 %v1581, %v1691
        %v1693 = vand.u32 %v1085, 4294901760
        %1694 = vmatmul.f32.gmra.mxu0 %v1693
        %v1695 = vpop.f32.mrf.mxu0
        %v1696 = vadd.f32 %v1587, %v1695
        %v1697 = vand.u32 %v1088, 4294901760
        %1698 = vmatmul.f32.gmra.mxu0 %v1697
        %v1699 = vpop.f32.mrf.mxu0
        %v1700 = vadd.f32 %v1593, %v1699
        %v1701 = vand.u32 %v1091, 4294901760
        %1702 = vmatmul.f32.gmra.mxu0 %v1701
        %v1703 = vpop.f32.mrf.mxu0
        %v1704 = vadd.f32 %v1599, %v1703
        %1705 = vdwg.mxu0
        %1706 = vmatpush.msra.mxu0 0.0
        %1707 = vmatpush.msra.mxu0 0.0
        %1708 = vmatpush.msra.mxu0 0.0
        %1709 = vmatpush.msra.mxu0 0.0
        %1710 = vmatpush.msra.mxu0 0.0
        %1711 = vmatpush.msra.mxu0 0.0
        %1712 = vmatpush.msra.mxu0 0.0
        %1713 = vmatpush.msra.mxu0 0.0
        %v1714 = vand.u32 %v267, 4294901760
        %1715 = vmatpush.msra.mxu0 %v1714
        %v1716 = vand.u32 %v266, 4294901760
        %1717 = vmatpush.msra.mxu0 %v1716
        %v1718 = vand.u32 %v265, 4294901760
        %1719 = vmatpush.msra.mxu0 %v1718
        %v1720 = vand.u32 %v264, 4294901760
        %1721 = vmatpush.msra.mxu0 %v1720
        %v1722 = vand.u32 %v263, 4294901760
        %1723 = vmatpush.msra.mxu0 %v1722
        %v1724 = vand.u32 %v262, 4294901760
        %1725 = vmatpush.msra.mxu0 %v1724
        %v1726 = vand.u32 %v261, 4294901760
        %1727 = vmatpush.msra.mxu0 %v1726
        %v1728 = vand.u32 %v260, 4294901760
        %1729 = vmatpush.msra.mxu0 %v1728
        %v1730 = vand.u32 %v1046, 4294901760
        %1731 = vmatmul.f32.gmra.mxu0 %v1730
        %v1732 = vpop.f32.mrf.mxu0
        %v1733 = vadd.f32 %v1644, %v1732
        %v1734 = vand.u32 %v1049, 4294901760
        %1735 = vmatmul.f32.gmra.mxu0 %v1734
        %v1736 = vpop.f32.mrf.mxu0
        %v1737 = vadd.f32 %v1648, %v1736
        %v1738 = vand.u32 %v1052, 4294901760
        %1739 = vmatmul.f32.gmra.mxu0 %v1738
        %v1740 = vpop.f32.mrf.mxu0
        %v1741 = vadd.f32 %v1652, %v1740
        %v1742 = vand.u32 %v1055, 4294901760
        %1743 = vmatmul.f32.gmra.mxu0 %v1742
        %v1744 = vpop.f32.mrf.mxu0
        %v1745 = vadd.f32 %v1656, %v1744
        %v1746 = vand.u32 %v1058, 4294901760
        %1747 = vmatmul.f32.gmra.mxu0 %v1746
        %v1748 = vpop.f32.mrf.mxu0
        %v1749 = vadd.f32 %v1660, %v1748
        %v1750 = vand.u32 %v1061, 4294901760
        %1751 = vmatmul.f32.gmra.mxu0 %v1750
        %v1752 = vpop.f32.mrf.mxu0
        %v1753 = vadd.f32 %v1664, %v1752
        %v1754 = vand.u32 %v1064, 4294901760
        %1755 = vmatmul.f32.gmra.mxu0 %v1754
        %v1756 = vpop.f32.mrf.mxu0
        %v1757 = vadd.f32 %v1668, %v1756
        %v1758 = vand.u32 %v1067, 4294901760
        %1759 = vmatmul.f32.gmra.mxu0 %v1758
        %v1760 = vpop.f32.mrf.mxu0
        %v1761 = vadd.f32 %v1672, %v1760
        %v1762 = vand.u32 %v1070, 4294901760
        %1763 = vmatmul.f32.gmra.mxu0 %v1762
        %v1764 = vpop.f32.mrf.mxu0
        %v1765 = vadd.f32 %v1676, %v1764
        %v1766 = vand.u32 %v1073, 4294901760
        %1767 = vmatmul.f32.gmra.mxu0 %v1766
        %v1768 = vpop.f32.mrf.mxu0
        %v1769 = vadd.f32 %v1680, %v1768
        %v1770 = vand.u32 %v1076, 4294901760
        %1771 = vmatmul.f32.gmra.mxu0 %v1770
        %v1772 = vpop.f32.mrf.mxu0
        %v1773 = vadd.f32 %v1684, %v1772
        %v1774 = vand.u32 %v1079, 4294901760
        %1775 = vmatmul.f32.gmra.mxu0 %v1774
        %v1776 = vpop.f32.mrf.mxu0
        %v1777 = vadd.f32 %v1688, %v1776
        %v1778 = vand.u32 %v1082, 4294901760
        %1779 = vmatmul.f32.gmra.mxu0 %v1778
        %v1780 = vpop.f32.mrf.mxu0
        %v1781 = vadd.f32 %v1692, %v1780
        %v1782 = vand.u32 %v1085, 4294901760
        %1783 = vmatmul.f32.gmra.mxu0 %v1782
        %v1784 = vpop.f32.mrf.mxu0
        %v1785 = vadd.f32 %v1696, %v1784
        %v1786 = vand.u32 %v1088, 4294901760
        %1787 = vmatmul.f32.gmra.mxu0 %v1786
        %v1788 = vpop.f32.mrf.mxu0
        %v1789 = vadd.f32 %v1700, %v1788
        %v1790 = vand.u32 %v1091, 4294901760
        %1791 = vmatmul.f32.gmra.mxu0 %v1790
        %v1792 = vpop.f32.mrf.mxu0
        %v1793 = vadd.f32 %v1704, %v1792
        %1794 = vdwg.mxu0
        %1795 = vst [vmem:[%s238] sm:$0xff] %v1733
        %1796 = vst [vmem:[%s238 + $0x10] sm:$0xff] %v1737
        %1797 = vst [vmem:[%s238 + $0x20] sm:$0xff] %v1741
        %1798 = vst [vmem:[%s238 + $0x30] sm:$0xff] %v1745
        %1799 = vst [vmem:[%s238 + $0x40] sm:$0xff] %v1749
        %1800 = vst [vmem:[%s238 + $0x50] sm:$0xff] %v1753
        %1801 = vst [vmem:[%s238 + $0x60] sm:$0xff] %v1757
        %1802 = vst [vmem:[%s238 + $0x70] sm:$0xff] %v1761
        %1803 = vst [vmem:[%s238 + $0x80] sm:$0xff] %v1765
        %1804 = vst [vmem:[%s238 + $0x90] sm:$0xff] %v1769
        %1805 = vst [vmem:[%s238 + $0xa0] sm:$0xff] %v1773
        %1806 = vst [vmem:[%s238 + $0xb0] sm:$0xff] %v1777
        %1807 = vst [vmem:[%s238 + $0xc0] sm:$0xff] %v1781
        %1808 = vst [vmem:[%s238 + $0xd0] sm:$0xff] %v1785
        %1809 = vst [vmem:[%s238 + $0xe0] sm:$0xff] %v1789
        %1810 = vst [vmem:[%s238 + $0xf0] sm:$0xff] %v1793
        %s1811 = scalar_lea.vmem %s212, 64 [#allocation2]
        %v1812 = vld [vmem:[%s1811] sm:$0xff]
        %v1813 = vld [vmem:[%s1811 + $0x8] sm:$0xff]
        %v1814 = vld [vmem:[%s1811 + $0x10] sm:$0xff]
        %v1815 = vld [vmem:[%s1811 + $0x18] sm:$0xff]
        %v1816 = vld [vmem:[%s1811 + $0x80] sm:$0xff]
        %v1817 = vld [vmem:[%s1811 + $0x88] sm:$0xff]
        %v1818 = vld [vmem:[%s1811 + $0x90] sm:$0xff]
        %v1819 = vld [vmem:[%s1811 + $0x98] sm:$0xff]
        %v1820 = vld [vmem:[%s1811 + $0x100] sm:$0xff]
        %v1821 = vld [vmem:[%s1811 + $0x108] sm:$0xff]
        %v1822 = vld [vmem:[%s1811 + $0x110] sm:$0xff]
        %v1823 = vld [vmem:[%s1811 + $0x118] sm:$0xff]
        %v1824 = vld [vmem:[%s1811 + $0x180] sm:$0xff]
        %v1825 = vld [vmem:[%s1811 + $0x188] sm:$0xff]
        %v1826 = vld [vmem:[%s1811 + $0x190] sm:$0xff]
        %v1827 = vld [vmem:[%s1811 + $0x198] sm:$0xff]
        %v1828 = vld [vmem:[#allocation5] sm:$0xff]
        %v1829 = vld [vmem:[#allocation5 + $0x8] sm:$0xff]
        %v1830 = vld [vmem:[#allocation5 + $0x10] sm:$0xff]
        %v1831 = vld [vmem:[#allocation5 + $0x18] sm:$0xff]
        %v1832 = vld [vmem:[#allocation5 + $0x20] sm:$0xff]
        %v1833 = vld [vmem:[#allocation5 + $0x28] sm:$0xff]
        %v1834 = vld [vmem:[#allocation5 + $0x30] sm:$0xff]
        %v1835 = vld [vmem:[#allocation5 + $0x38] sm:$0xff]
        %s1836 = scalar_lea.vmem %s212, 96 [#allocation2]
        %v1837 = vld [vmem:[%s1836] sm:$0xff]
        %v1838 = vld [vmem:[%s1836 + $0x8] sm:$0xff]
        %v1839 = vld [vmem:[%s1836 + $0x10] sm:$0xff]
        %v1840 = vld [vmem:[%s1836 + $0x18] sm:$0xff]
        %v1841 = vld [vmem:[%s1836 + $0x80] sm:$0xff]
        %v1842 = vld [vmem:[%s1836 + $0x88] sm:$0xff]
        %v1843 = vld [vmem:[%s1836 + $0x90] sm:$0xff]
        %v1844 = vld [vmem:[%s1836 + $0x98] sm:$0xff]
        %v1845 = vld [vmem:[%s1836 + $0x100] sm:$0xff]
        %v1846 = vld [vmem:[%s1836 + $0x108] sm:$0xff]
        %v1847 = vld [vmem:[%s1836 + $0x110] sm:$0xff]
        %v1848 = vld [vmem:[%s1836 + $0x118] sm:$0xff]
        %v1849 = vld [vmem:[%s1836 + $0x180] sm:$0xff]
        %v1850 = vld [vmem:[%s1836 + $0x188] sm:$0xff]
        %v1851 = vld [vmem:[%s1836 + $0x190] sm:$0xff]
        %v1852 = vld [vmem:[%s1836 + $0x198] sm:$0xff]
        %v1853 = vld [vmem:[%s285] sm:$0xff]
        %v1854 = vld [vmem:[%s285 + $0x8] sm:$0xff]
        %v1855 = vld [vmem:[%s285 + $0x10] sm:$0xff]
        %v1856 = vld [vmem:[%s285 + $0x18] sm:$0xff]
        %v1857 = vld [vmem:[%s285 + $0x20] sm:$0xff]
        %v1858 = vld [vmem:[%s285 + $0x28] sm:$0xff]
        %v1859 = vld [vmem:[%s285 + $0x30] sm:$0xff]
        %v1860 = vld [vmem:[%s285 + $0x38] sm:$0xff]
        %v1862 = vsel %vm294, %v1837, 0
        %v1865 = vsel %vm294, %v1838, 0
        %v1868 = vsel %vm294, %v1839, 0
        %v1871 = vsel %vm294, %v1840, 0
        %v1874 = vsel %vm294, %v1841, 0
        %v1877 = vsel %vm294, %v1842, 0
        %v1880 = vsel %vm294, %v1843, 0
        %v1883 = vsel %vm294, %v1844, 0
        %v1886 = vsel %vm294, %v1845, 0
        %v1889 = vsel %vm294, %v1846, 0
        %v1892 = vsel %vm294, %v1847, 0
        %v1895 = vsel %vm294, %v1848, 0
        %v1898 = vsel %vm294, %v1849, 0
        %v1901 = vsel %vm294, %v1850, 0
        %v1904 = vsel %vm294, %v1851, 0
        %v1907 = vsel %vm294, %v1852, 0
        %1909 = vmatpush.msra.mxu0 0.0
        %1910 = vmatpush.msra.mxu0 0.0
        %1911 = vmatpush.msra.mxu0 0.0
        %1912 = vmatpush.msra.mxu0 0.0
        %1913 = vmatpush.msra.mxu0 0.0
        %1914 = vmatpush.msra.mxu0 0.0
        %1915 = vmatpush.msra.mxu0 0.0
        %1916 = vmatpush.msra.mxu0 0.0
        %v1917 = vand.u32 %v1860, 4294901760
        %1918 = vmatpush.msra.mxu0 %v1917
        %v1919 = vand.u32 %v1859, 4294901760
        %1920 = vmatpush.msra.mxu0 %v1919
        %v1921 = vand.u32 %v1858, 4294901760
        %1922 = vmatpush.msra.mxu0 %v1921
        %v1923 = vand.u32 %v1857, 4294901760
        %1924 = vmatpush.msra.mxu0 %v1923
        %v1925 = vand.u32 %v1856, 4294901760
        %1926 = vmatpush.msra.mxu0 %v1925
        %v1927 = vand.u32 %v1855, 4294901760
        %1928 = vmatpush.msra.mxu0 %v1927
        %v1929 = vand.u32 %v1854, 4294901760
        %1930 = vmatpush.msra.mxu0 %v1929
        %v1931 = vand.u32 %v1853, 4294901760
        %1932 = vmatpush.msra.mxu0 %v1931
        %v1933 = vand.u32 %v1862, 4294901760
        %v1934 = vsub.f32 %v1862, %v1933
        %v1935 = vand.u32 %v1934, 4294901760
        %v1936 = vsub.f32 %v1934, %v1935
        %v1937 = vand.u32 %v1936, 4294901760
        %1938 = vmatmul.f32.gmra.mxu0 %v1937
        %v1939 = vpop.f32.mrf.mxu0
        %v1940 = vadd.f32 0.0, %v1939
        %v1941 = vand.u32 %v1865, 4294901760
        %v1942 = vsub.f32 %v1865, %v1941
        %v1943 = vand.u32 %v1942, 4294901760
        %v1944 = vsub.f32 %v1942, %v1943
        %v1945 = vand.u32 %v1944, 4294901760
        %1946 = vmatmul.f32.gmra.mxu0 %v1945
        %v1947 = vpop.f32.mrf.mxu0
        %v1948 = vadd.f32 0.0, %v1947
        %v1949 = vand.u32 %v1868, 4294901760
        %v1950 = vsub.f32 %v1868, %v1949
        %v1951 = vand.u32 %v1950, 4294901760
        %v1952 = vsub.f32 %v1950, %v1951
        %v1953 = vand.u32 %v1952, 4294901760
        %1954 = vmatmul.f32.gmra.mxu0 %v1953
        %v1955 = vpop.f32.mrf.mxu0
        %v1956 = vadd.f32 0.0, %v1955
        %v1957 = vand.u32 %v1871, 4294901760
        %v1958 = vsub.f32 %v1871, %v1957
        %v1959 = vand.u32 %v1958, 4294901760
        %v1960 = vsub.f32 %v1958, %v1959
        %v1961 = vand.u32 %v1960, 4294901760
        %1962 = vmatmul.f32.gmra.mxu0 %v1961
        %v1963 = vpop.f32.mrf.mxu0
        %v1964 = vadd.f32 0.0, %v1963
        %v1965 = vand.u32 %v1874, 4294901760
        %v1966 = vsub.f32 %v1874, %v1965
        %v1967 = vand.u32 %v1966, 4294901760
        %v1968 = vsub.f32 %v1966, %v1967
        %v1969 = vand.u32 %v1968, 4294901760
        %1970 = vmatmul.f32.gmra.mxu0 %v1969
        %v1971 = vpop.f32.mrf.mxu0
        %v1972 = vadd.f32 0.0, %v1971
        %v1973 = vand.u32 %v1877, 4294901760
        %v1974 = vsub.f32 %v1877, %v1973
        %v1975 = vand.u32 %v1974, 4294901760
        %v1976 = vsub.f32 %v1974, %v1975
        %v1977 = vand.u32 %v1976, 4294901760
        %1978 = vmatmul.f32.gmra.mxu0 %v1977
        %v1979 = vpop.f32.mrf.mxu0
        %v1980 = vadd.f32 0.0, %v1979
        %v1981 = vand.u32 %v1880, 4294901760
        %v1982 = vsub.f32 %v1880, %v1981
        %v1983 = vand.u32 %v1982, 4294901760
        %v1984 = vsub.f32 %v1982, %v1983
        %v1985 = vand.u32 %v1984, 4294901760
        %1986 = vmatmul.f32.gmra.mxu0 %v1985
        %v1987 = vpop.f32.mrf.mxu0
        %v1988 = vadd.f32 0.0, %v1987
        %v1989 = vand.u32 %v1883, 4294901760
        %v1990 = vsub.f32 %v1883, %v1989
        %v1991 = vand.u32 %v1990, 4294901760
        %v1992 = vsub.f32 %v1990, %v1991
        %v1993 = vand.u32 %v1992, 4294901760
        %1994 = vmatmul.f32.gmra.mxu0 %v1993
        %v1995 = vpop.f32.mrf.mxu0
        %v1996 = vadd.f32 0.0, %v1995
        %v1997 = vand.u32 %v1886, 4294901760
        %v1998 = vsub.f32 %v1886, %v1997
        %v1999 = vand.u32 %v1998, 4294901760
        %v2000 = vsub.f32 %v1998, %v1999
        %v2001 = vand.u32 %v2000, 4294901760
        %2002 = vmatmul.f32.gmra.mxu0 %v2001
        %v2003 = vpop.f32.mrf.mxu0
        %v2004 = vadd.f32 0.0, %v2003
        %v2005 = vand.u32 %v1889, 4294901760
        %v2006 = vsub.f32 %v1889, %v2005
        %v2007 = vand.u32 %v2006, 4294901760
        %v2008 = vsub.f32 %v2006, %v2007
        %v2009 = vand.u32 %v2008, 4294901760
        %2010 = vmatmul.f32.gmra.mxu0 %v2009
        %v2011 = vpop.f32.mrf.mxu0
        %v2012 = vadd.f32 0.0, %v2011
        %v2013 = vand.u32 %v1892, 4294901760
        %v2014 = vsub.f32 %v1892, %v2013
        %v2015 = vand.u32 %v2014, 4294901760
        %v2016 = vsub.f32 %v2014, %v2015
        %v2017 = vand.u32 %v2016, 4294901760
        %2018 = vmatmul.f32.gmra.mxu0 %v2017
        %v2019 = vpop.f32.mrf.mxu0
        %v2020 = vadd.f32 0.0, %v2019
        %v2021 = vand.u32 %v1895, 4294901760
        %v2022 = vsub.f32 %v1895, %v2021
        %v2023 = vand.u32 %v2022, 4294901760
        %v2024 = vsub.f32 %v2022, %v2023
        %v2025 = vand.u32 %v2024, 4294901760
        %2026 = vmatmul.f32.gmra.mxu0 %v2025
        %v2027 = vpop.f32.mrf.mxu0
        %v2028 = vadd.f32 0.0, %v2027
        %v2029 = vand.u32 %v1898, 4294901760
        %v2030 = vsub.f32 %v1898, %v2029
        %v2031 = vand.u32 %v2030, 4294901760
        %v2032 = vsub.f32 %v2030, %v2031
        %v2033 = vand.u32 %v2032, 4294901760
        %2034 = vmatmul.f32.gmra.mxu0 %v2033
        %v2035 = vpop.f32.mrf.mxu0
        %v2036 = vadd.f32 0.0, %v2035
        %v2037 = vand.u32 %v1901, 4294901760
        %v2038 = vsub.f32 %v1901, %v2037
        %v2039 = vand.u32 %v2038, 4294901760
        %v2040 = vsub.f32 %v2038, %v2039
        %v2041 = vand.u32 %v2040, 4294901760
        %2042 = vmatmul.f32.gmra.mxu0 %v2041
        %v2043 = vpop.f32.mrf.mxu0
        %v2044 = vadd.f32 0.0, %v2043
        %v2045 = vand.u32 %v1904, 4294901760
        %v2046 = vsub.f32 %v1904, %v2045
        %v2047 = vand.u32 %v2046, 4294901760
        %v2048 = vsub.f32 %v2046, %v2047
        %v2049 = vand.u32 %v2048, 4294901760
        %2050 = vmatmul.f32.gmra.mxu0 %v2049
        %v2051 = vpop.f32.mrf.mxu0
        %v2052 = vadd.f32 0.0, %v2051
        %v2053 = vand.u32 %v1907, 4294901760
        %v2054 = vsub.f32 %v1907, %v2053
        %v2055 = vand.u32 %v2054, 4294901760
        %v2056 = vsub.f32 %v2054, %v2055
        %v2057 = vand.u32 %v2056, 4294901760
        %2058 = vmatmul.f32.gmra.mxu0 %v2057
        %v2059 = vpop.f32.mrf.mxu0
        %v2060 = vadd.f32 0.0, %v2059
        %2061 = vdwg.mxu0
        %2062 = vmatpush.msra.mxu0 0.0
        %2063 = vmatpush.msra.mxu0 0.0
        %2064 = vmatpush.msra.mxu0 0.0
        %2065 = vmatpush.msra.mxu0 0.0
        %2066 = vmatpush.msra.mxu0 0.0
        %2067 = vmatpush.msra.mxu0 0.0
        %2068 = vmatpush.msra.mxu0 0.0
        %2069 = vmatpush.msra.mxu0 0.0
        %v2070 = vand.u32 %v1860, 4294901760
        %v2071 = vsub.f32 %v1860, %v2070
        %v2072 = vand.u32 %v2071, 4294901760
        %v2073 = vsub.f32 %v2071, %v2072
        %v2074 = vand.u32 %v2073, 4294901760
        %2075 = vmatpush.msra.mxu0 %v2074
        %v2076 = vand.u32 %v1859, 4294901760
        %v2077 = vsub.f32 %v1859, %v2076
        %v2078 = vand.u32 %v2077, 4294901760
        %v2079 = vsub.f32 %v2077, %v2078
        %v2080 = vand.u32 %v2079, 4294901760
        %2081 = vmatpush.msra.mxu0 %v2080
        %v2082 = vand.u32 %v1858, 4294901760
        %v2083 = vsub.f32 %v1858, %v2082
        %v2084 = vand.u32 %v2083, 4294901760
        %v2085 = vsub.f32 %v2083, %v2084
        %v2086 = vand.u32 %v2085, 4294901760
        %2087 = vmatpush.msra.mxu0 %v2086
        %v2088 = vand.u32 %v1857, 4294901760
        %v2089 = vsub.f32 %v1857, %v2088
        %v2090 = vand.u32 %v2089, 4294901760
        %v2091 = vsub.f32 %v2089, %v2090
        %v2092 = vand.u32 %v2091, 4294901760
        %2093 = vmatpush.msra.mxu0 %v2092
        %v2094 = vand.u32 %v1856, 4294901760
        %v2095 = vsub.f32 %v1856, %v2094
        %v2096 = vand.u32 %v2095, 4294901760
        %v2097 = vsub.f32 %v2095, %v2096
        %v2098 = vand.u32 %v2097, 4294901760
        %2099 = vmatpush.msra.mxu0 %v2098
        %v2100 = vand.u32 %v1855, 4294901760
        %v2101 = vsub.f32 %v1855, %v2100
        %v2102 = vand.u32 %v2101, 4294901760
        %v2103 = vsub.f32 %v2101, %v2102
        %v2104 = vand.u32 %v2103, 4294901760
        %2105 = vmatpush.msra.mxu0 %v2104
        %v2106 = vand.u32 %v1854, 4294901760
        %v2107 = vsub.f32 %v1854, %v2106
        %v2108 = vand.u32 %v2107, 4294901760
        %v2109 = vsub.f32 %v2107, %v2108
        %v2110 = vand.u32 %v2109, 4294901760
        %2111 = vmatpush.msra.mxu0 %v2110
        %v2112 = vand.u32 %v1853, 4294901760
        %v2113 = vsub.f32 %v1853, %v2112
        %v2114 = vand.u32 %v2113, 4294901760
        %v2115 = vsub.f32 %v2113, %v2114
        %v2116 = vand.u32 %v2115, 4294901760
        %2117 = vmatpush.msra.mxu0 %v2116
        %v2118 = vand.u32 %v1862, 4294901760
        %2119 = vmatmul.f32.gmra.mxu0 %v2118
        %v2120 = vpop.f32.mrf.mxu0
        %v2121 = vadd.f32 %v1940, %v2120
        %v2122 = vand.u32 %v1865, 4294901760
        %2123 = vmatmul.f32.gmra.mxu0 %v2122
        %v2124 = vpop.f32.mrf.mxu0
        %v2125 = vadd.f32 %v1948, %v2124
        %v2126 = vand.u32 %v1868, 4294901760
        %2127 = vmatmul.f32.gmra.mxu0 %v2126
        %v2128 = vpop.f32.mrf.mxu0
        %v2129 = vadd.f32 %v1956, %v2128
        %v2130 = vand.u32 %v1871, 4294901760
        %2131 = vmatmul.f32.gmra.mxu0 %v2130
        %v2132 = vpop.f32.mrf.mxu0
        %v2133 = vadd.f32 %v1964, %v2132
        %v2134 = vand.u32 %v1874, 4294901760
        %2135 = vmatmul.f32.gmra.mxu0 %v2134
        %v2136 = vpop.f32.mrf.mxu0
        %v2137 = vadd.f32 %v1972, %v2136
        %v2138 = vand.u32 %v1877, 4294901760
        %2139 = vmatmul.f32.gmra.mxu0 %v2138
        %v2140 = vpop.f32.mrf.mxu0
        %v2141 = vadd.f32 %v1980, %v2140
        %v2142 = vand.u32 %v1880, 4294901760
        %2143 = vmatmul.f32.gmra.mxu0 %v2142
        %v2144 = vpop.f32.mrf.mxu0
        %v2145 = vadd.f32 %v1988, %v2144
        %v2146 = vand.u32 %v1883, 4294901760
        %2147 = vmatmul.f32.gmra.mxu0 %v2146
        %v2148 = vpop.f32.mrf.mxu0
        %v2149 = vadd.f32 %v1996, %v2148
        %v2150 = vand.u32 %v1886, 4294901760
        %2151 = vmatmul.f32.gmra.mxu0 %v2150
        %v2152 = vpop.f32.mrf.mxu0
        %v2153 = vadd.f32 %v2004, %v2152
        %v2154 = vand.u32 %v1889, 4294901760
        %2155 = vmatmul.f32.gmra.mxu0 %v2154
        %v2156 = vpop.f32.mrf.mxu0
        %v2157 = vadd.f32 %v2012, %v2156
        %v2158 = vand.u32 %v1892, 4294901760
        %2159 = vmatmul.f32.gmra.mxu0 %v2158
        %v2160 = vpop.f32.mrf.mxu0
        %v2161 = vadd.f32 %v2020, %v2160
        %v2162 = vand.u32 %v1895, 4294901760
        %2163 = vmatmul.f32.gmra.mxu0 %v2162
        %v2164 = vpop.f32.mrf.mxu0
        %v2165 = vadd.f32 %v2028, %v2164
        %v2166 = vand.u32 %v1898, 4294901760
        %2167 = vmatmul.f32.gmra.mxu0 %v2166
        %v2168 = vpop.f32.mrf.mxu0
        %v2169 = vadd.f32 %v2036, %v2168
        %v2170 = vand.u32 %v1901, 4294901760
        %2171 = vmatmul.f32.gmra.mxu0 %v2170
        %v2172 = vpop.f32.mrf.mxu0
        %v2173 = vadd.f32 %v2044, %v2172
        %v2174 = vand.u32 %v1904, 4294901760
        %2175 = vmatmul.f32.gmra.mxu0 %v2174
        %v2176 = vpop.f32.mrf.mxu0
        %v2177 = vadd.f32 %v2052, %v2176
        %v2178 = vand.u32 %v1907, 4294901760
        %2179 = vmatmul.f32.gmra.mxu0 %v2178
        %v2180 = vpop.f32.mrf.mxu0
        %v2181 = vadd.f32 %v2060, %v2180
        %2182 = vdwg.mxu0
        %2183 = vmatpush.msra.mxu0 0.0
        %2184 = vmatpush.msra.mxu0 0.0
        %2185 = vmatpush.msra.mxu0 0.0
        %2186 = vmatpush.msra.mxu0 0.0
        %2187 = vmatpush.msra.mxu0 0.0
        %2188 = vmatpush.msra.mxu0 0.0
        %2189 = vmatpush.msra.mxu0 0.0
        %2190 = vmatpush.msra.mxu0 0.0
        %v2191 = vand.u32 %v1860, 4294901760
        %v2192 = vsub.f32 %v1860, %v2191
        %2193 = vmatpush.msra.mxu0 %v2192
        %v2194 = vand.u32 %v1859, 4294901760
        %v2195 = vsub.f32 %v1859, %v2194
        %2196 = vmatpush.msra.mxu0 %v2195
        %v2197 = vand.u32 %v1858, 4294901760
        %v2198 = vsub.f32 %v1858, %v2197
        %2199 = vmatpush.msra.mxu0 %v2198
        %v2200 = vand.u32 %v1857, 4294901760
        %v2201 = vsub.f32 %v1857, %v2200
        %2202 = vmatpush.msra.mxu0 %v2201
        %v2203 = vand.u32 %v1856, 4294901760
        %v2204 = vsub.f32 %v1856, %v2203
        %2205 = vmatpush.msra.mxu0 %v2204
        %v2206 = vand.u32 %v1855, 4294901760
        %v2207 = vsub.f32 %v1855, %v2206
        %2208 = vmatpush.msra.mxu0 %v2207
        %v2209 = vand.u32 %v1854, 4294901760
        %v2210 = vsub.f32 %v1854, %v2209
        %2211 = vmatpush.msra.mxu0 %v2210
        %v2212 = vand.u32 %v1853, 4294901760
        %v2213 = vsub.f32 %v1853, %v2212
        %2214 = vmatpush.msra.mxu0 %v2213
        %v2215 = vand.u32 %v1862, 4294901760
        %v2216 = vsub.f32 %v1862, %v2215
        %2217 = vmatmul.f32.gmra.mxu0 %v2216
        %v2218 = vpop.f32.mrf.mxu0
        %v2219 = vadd.f32 %v2121, %v2218
        %v2220 = vand.u32 %v1865, 4294901760
        %v2221 = vsub.f32 %v1865, %v2220
        %2222 = vmatmul.f32.gmra.mxu0 %v2221
        %v2223 = vpop.f32.mrf.mxu0
        %v2224 = vadd.f32 %v2125, %v2223
        %v2225 = vand.u32 %v1868, 4294901760
        %v2226 = vsub.f32 %v1868, %v2225
        %2227 = vmatmul.f32.gmra.mxu0 %v2226
        %v2228 = vpop.f32.mrf.mxu0
        %v2229 = vadd.f32 %v2129, %v2228
        %v2230 = vand.u32 %v1871, 4294901760
        %v2231 = vsub.f32 %v1871, %v2230
        %2232 = vmatmul.f32.gmra.mxu0 %v2231
        %v2233 = vpop.f32.mrf.mxu0
        %v2234 = vadd.f32 %v2133, %v2233
        %v2235 = vand.u32 %v1874, 4294901760
        %v2236 = vsub.f32 %v1874, %v2235
        %2237 = vmatmul.f32.gmra.mxu0 %v2236
        %v2238 = vpop.f32.mrf.mxu0
        %v2239 = vadd.f32 %v2137, %v2238
        %v2240 = vand.u32 %v1877, 4294901760
        %v2241 = vsub.f32 %v1877, %v2240
        %2242 = vmatmul.f32.gmra.mxu0 %v2241
        %v2243 = vpop.f32.mrf.mxu0
        %v2244 = vadd.f32 %v2141, %v2243
        %v2245 = vand.u32 %v1880, 4294901760
        %v2246 = vsub.f32 %v1880, %v2245
        %2247 = vmatmul.f32.gmra.mxu0 %v2246
        %v2248 = vpop.f32.mrf.mxu0
        %v2249 = vadd.f32 %v2145, %v2248
        %v2250 = vand.u32 %v1883, 4294901760
        %v2251 = vsub.f32 %v1883, %v2250
        %2252 = vmatmul.f32.gmra.mxu0 %v2251
        %v2253 = vpop.f32.mrf.mxu0
        %v2254 = vadd.f32 %v2149, %v2253
        %v2255 = vand.u32 %v1886, 4294901760
        %v2256 = vsub.f32 %v1886, %v2255
        %2257 = vmatmul.f32.gmra.mxu0 %v2256
        %v2258 = vpop.f32.mrf.mxu0
        %v2259 = vadd.f32 %v2153, %v2258
        %v2260 = vand.u32 %v1889, 4294901760
        %v2261 = vsub.f32 %v1889, %v2260
        %2262 = vmatmul.f32.gmra.mxu0 %v2261
        %v2263 = vpop.f32.mrf.mxu0
        %v2264 = vadd.f32 %v2157, %v2263
        %v2265 = vand.u32 %v1892, 4294901760
        %v2266 = vsub.f32 %v1892, %v2265
        %2267 = vmatmul.f32.gmra.mxu0 %v2266
        %v2268 = vpop.f32.mrf.mxu0
        %v2269 = vadd.f32 %v2161, %v2268
        %v2270 = vand.u32 %v1895, 4294901760
        %v2271 = vsub.f32 %v1895, %v2270
        %2272 = vmatmul.f32.gmra.mxu0 %v2271
        %v2273 = vpop.f32.mrf.mxu0
        %v2274 = vadd.f32 %v2165, %v2273
        %v2275 = vand.u32 %v1898, 4294901760
        %v2276 = vsub.f32 %v1898, %v2275
        %2277 = vmatmul.f32.gmra.mxu0 %v2276
        %v2278 = vpop.f32.mrf.mxu0
        %v2279 = vadd.f32 %v2169, %v2278
        %v2280 = vand.u32 %v1901, 4294901760
        %v2281 = vsub.f32 %v1901, %v2280
        %2282 = vmatmul.f32.gmra.mxu0 %v2281
        %v2283 = vpop.f32.mrf.mxu0
        %v2284 = vadd.f32 %v2173, %v2283
        %v2285 = vand.u32 %v1904, 4294901760
        %v2286 = vsub.f32 %v1904, %v2285
        %2287 = vmatmul.f32.gmra.mxu0 %v2286
        %v2288 = vpop.f32.mrf.mxu0
        %v2289 = vadd.f32 %v2177, %v2288
        %v2290 = vand.u32 %v1907, 4294901760
        %v2291 = vsub.f32 %v1907, %v2290
        %2292 = vmatmul.f32.gmra.mxu0 %v2291
        %v2293 = vpop.f32.mrf.mxu0
        %v2294 = vadd.f32 %v2181, %v2293
        %2295 = vdwg.mxu0
        %2296 = vmatpush.msra.mxu0 0.0
        %2297 = vmatpush.msra.mxu0 0.0
        %2298 = vmatpush.msra.mxu0 0.0
        %2299 = vmatpush.msra.mxu0 0.0
        %2300 = vmatpush.msra.mxu0 0.0
        %2301 = vmatpush.msra.mxu0 0.0
        %2302 = vmatpush.msra.mxu0 0.0
        %2303 = vmatpush.msra.mxu0 0.0
        %v2304 = vand.u32 %v1860, 4294901760
        %2305 = vmatpush.msra.mxu0 %v2304
        %v2306 = vand.u32 %v1859, 4294901760
        %2307 = vmatpush.msra.mxu0 %v2306
        %v2308 = vand.u32 %v1858, 4294901760
        %2309 = vmatpush.msra.mxu0 %v2308
        %v2310 = vand.u32 %v1857, 4294901760
        %2311 = vmatpush.msra.mxu0 %v2310
        %v2312 = vand.u32 %v1856, 4294901760
        %2313 = vmatpush.msra.mxu0 %v2312
        %v2314 = vand.u32 %v1855, 4294901760
        %2315 = vmatpush.msra.mxu0 %v2314
        %v2316 = vand.u32 %v1854, 4294901760
        %2317 = vmatpush.msra.mxu0 %v2316
        %v2318 = vand.u32 %v1853, 4294901760
        %2319 = vmatpush.msra.mxu0 %v2318
        %v2320 = vand.u32 %v1862, 4294901760
        %v2321 = vsub.f32 %v1862, %v2320
        %v2322 = vand.u32 %v2321, 4294901760
        %2323 = vmatmul.f32.gmra.mxu0 %v2322
        %v2324 = vpop.f32.mrf.mxu0
        %v2325 = vadd.f32 %v2219, %v2324
        %v2326 = vand.u32 %v1865, 4294901760
        %v2327 = vsub.f32 %v1865, %v2326
        %v2328 = vand.u32 %v2327, 4294901760
        %2329 = vmatmul.f32.gmra.mxu0 %v2328
        %v2330 = vpop.f32.mrf.mxu0
        %v2331 = vadd.f32 %v2224, %v2330
        %v2332 = vand.u32 %v1868, 4294901760
        %v2333 = vsub.f32 %v1868, %v2332
        %v2334 = vand.u32 %v2333, 4294901760
        %2335 = vmatmul.f32.gmra.mxu0 %v2334
        %v2336 = vpop.f32.mrf.mxu0
        %v2337 = vadd.f32 %v2229, %v2336
        %v2338 = vand.u32 %v1871, 4294901760
        %v2339 = vsub.f32 %v1871, %v2338
        %v2340 = vand.u32 %v2339, 4294901760
        %2341 = vmatmul.f32.gmra.mxu0 %v2340
        %v2342 = vpop.f32.mrf.mxu0
        %v2343 = vadd.f32 %v2234, %v2342
        %v2344 = vand.u32 %v1874, 4294901760
        %v2345 = vsub.f32 %v1874, %v2344
        %v2346 = vand.u32 %v2345, 4294901760
        %2347 = vmatmul.f32.gmra.mxu0 %v2346
        %v2348 = vpop.f32.mrf.mxu0
        %v2349 = vadd.f32 %v2239, %v2348
        %v2350 = vand.u32 %v1877, 4294901760
        %v2351 = vsub.f32 %v1877, %v2350
        %v2352 = vand.u32 %v2351, 4294901760
        %2353 = vmatmul.f32.gmra.mxu0 %v2352
        %v2354 = vpop.f32.mrf.mxu0
        %v2355 = vadd.f32 %v2244, %v2354
        %v2356 = vand.u32 %v1880, 4294901760
        %v2357 = vsub.f32 %v1880, %v2356
        %v2358 = vand.u32 %v2357, 4294901760
        %2359 = vmatmul.f32.gmra.mxu0 %v2358
        %v2360 = vpop.f32.mrf.mxu0
        %v2361 = vadd.f32 %v2249, %v2360
        %v2362 = vand.u32 %v1883, 4294901760
        %v2363 = vsub.f32 %v1883, %v2362
        %v2364 = vand.u32 %v2363, 4294901760
        %2365 = vmatmul.f32.gmra.mxu0 %v2364
        %v2366 = vpop.f32.mrf.mxu0
        %v2367 = vadd.f32 %v2254, %v2366
        %v2368 = vand.u32 %v1886, 4294901760
        %v2369 = vsub.f32 %v1886, %v2368
        %v2370 = vand.u32 %v2369, 4294901760
        %2371 = vmatmul.f32.gmra.mxu0 %v2370
        %v2372 = vpop.f32.mrf.mxu0
        %v2373 = vadd.f32 %v2259, %v2372
        %v2374 = vand.u32 %v1889, 4294901760
        %v2375 = vsub.f32 %v1889, %v2374
        %v2376 = vand.u32 %v2375, 4294901760
        %2377 = vmatmul.f32.gmra.mxu0 %v2376
        %v2378 = vpop.f32.mrf.mxu0
        %v2379 = vadd.f32 %v2264, %v2378
        %v2380 = vand.u32 %v1892, 4294901760
        %v2381 = vsub.f32 %v1892, %v2380
        %v2382 = vand.u32 %v2381, 4294901760
        %2383 = vmatmul.f32.gmra.mxu0 %v2382
        %v2384 = vpop.f32.mrf.mxu0
        %v2385 = vadd.f32 %v2269, %v2384
        %v2386 = vand.u32 %v1895, 4294901760
        %v2387 = vsub.f32 %v1895, %v2386
        %v2388 = vand.u32 %v2387, 4294901760
        %2389 = vmatmul.f32.gmra.mxu0 %v2388
        %v2390 = vpop.f32.mrf.mxu0
        %v2391 = vadd.f32 %v2274, %v2390
        %v2392 = vand.u32 %v1898, 4294901760
        %v2393 = vsub.f32 %v1898, %v2392
        %v2394 = vand.u32 %v2393, 4294901760
        %2395 = vmatmul.f32.gmra.mxu0 %v2394
        %v2396 = vpop.f32.mrf.mxu0
        %v2397 = vadd.f32 %v2279, %v2396
        %v2398 = vand.u32 %v1901, 4294901760
        %v2399 = vsub.f32 %v1901, %v2398
        %v2400 = vand.u32 %v2399, 4294901760
        %2401 = vmatmul.f32.gmra.mxu0 %v2400
        %v2402 = vpop.f32.mrf.mxu0
        %v2403 = vadd.f32 %v2284, %v2402
        %v2404 = vand.u32 %v1904, 4294901760
        %v2405 = vsub.f32 %v1904, %v2404
        %v2406 = vand.u32 %v2405, 4294901760
        %2407 = vmatmul.f32.gmra.mxu0 %v2406
        %v2408 = vpop.f32.mrf.mxu0
        %v2409 = vadd.f32 %v2289, %v2408
        %v2410 = vand.u32 %v1907, 4294901760
        %v2411 = vsub.f32 %v1907, %v2410
        %v2412 = vand.u32 %v2411, 4294901760
        %2413 = vmatmul.f32.gmra.mxu0 %v2412
        %v2414 = vpop.f32.mrf.mxu0
        %v2415 = vadd.f32 %v2294, %v2414
        %2416 = vdwg.mxu0
        %2417 = vmatpush.msra.mxu0 0.0
        %2418 = vmatpush.msra.mxu0 0.0
        %2419 = vmatpush.msra.mxu0 0.0
        %2420 = vmatpush.msra.mxu0 0.0
        %2421 = vmatpush.msra.mxu0 0.0
        %2422 = vmatpush.msra.mxu0 0.0
        %2423 = vmatpush.msra.mxu0 0.0
        %2424 = vmatpush.msra.mxu0 0.0
        %v2425 = vand.u32 %v1860, 4294901760
        %v2426 = vsub.f32 %v1860, %v2425
        %v2427 = vand.u32 %v2426, 4294901760
        %2428 = vmatpush.msra.mxu0 %v2427
        %v2429 = vand.u32 %v1859, 4294901760
        %v2430 = vsub.f32 %v1859, %v2429
        %v2431 = vand.u32 %v2430, 4294901760
        %2432 = vmatpush.msra.mxu0 %v2431
        %v2433 = vand.u32 %v1858, 4294901760
        %v2434 = vsub.f32 %v1858, %v2433
        %v2435 = vand.u32 %v2434, 4294901760
        %2436 = vmatpush.msra.mxu0 %v2435
        %v2437 = vand.u32 %v1857, 4294901760
        %v2438 = vsub.f32 %v1857, %v2437
        %v2439 = vand.u32 %v2438, 4294901760
        %2440 = vmatpush.msra.mxu0 %v2439
        %v2441 = vand.u32 %v1856, 4294901760
        %v2442 = vsub.f32 %v1856, %v2441
        %v2443 = vand.u32 %v2442, 4294901760
        %2444 = vmatpush.msra.mxu0 %v2443
        %v2445 = vand.u32 %v1855, 4294901760
        %v2446 = vsub.f32 %v1855, %v2445
        %v2447 = vand.u32 %v2446, 4294901760
        %2448 = vmatpush.msra.mxu0 %v2447
        %v2449 = vand.u32 %v1854, 4294901760
        %v2450 = vsub.f32 %v1854, %v2449
        %v2451 = vand.u32 %v2450, 4294901760
        %2452 = vmatpush.msra.mxu0 %v2451
        %v2453 = vand.u32 %v1853, 4294901760
        %v2454 = vsub.f32 %v1853, %v2453
        %v2455 = vand.u32 %v2454, 4294901760
        %2456 = vmatpush.msra.mxu0 %v2455
        %v2457 = vand.u32 %v1862, 4294901760
        %2458 = vmatmul.f32.gmra.mxu0 %v2457
        %v2459 = vpop.f32.mrf.mxu0
        %v2460 = vadd.f32 %v2325, %v2459
        %v2461 = vand.u32 %v1865, 4294901760
        %2462 = vmatmul.f32.gmra.mxu0 %v2461
        %v2463 = vpop.f32.mrf.mxu0
        %v2464 = vadd.f32 %v2331, %v2463
        %v2465 = vand.u32 %v1868, 4294901760
        %2466 = vmatmul.f32.gmra.mxu0 %v2465
        %v2467 = vpop.f32.mrf.mxu0
        %v2468 = vadd.f32 %v2337, %v2467
        %v2469 = vand.u32 %v1871, 4294901760
        %2470 = vmatmul.f32.gmra.mxu0 %v2469
        %v2471 = vpop.f32.mrf.mxu0
        %v2472 = vadd.f32 %v2343, %v2471
        %v2473 = vand.u32 %v1874, 4294901760
        %2474 = vmatmul.f32.gmra.mxu0 %v2473
        %v2475 = vpop.f32.mrf.mxu0
        %v2476 = vadd.f32 %v2349, %v2475
        %v2477 = vand.u32 %v1877, 4294901760
        %2478 = vmatmul.f32.gmra.mxu0 %v2477
        %v2479 = vpop.f32.mrf.mxu0
        %v2480 = vadd.f32 %v2355, %v2479
        %v2481 = vand.u32 %v1880, 4294901760
        %2482 = vmatmul.f32.gmra.mxu0 %v2481
        %v2483 = vpop.f32.mrf.mxu0
        %v2484 = vadd.f32 %v2361, %v2483
        %v2485 = vand.u32 %v1883, 4294901760
        %2486 = vmatmul.f32.gmra.mxu0 %v2485
        %v2487 = vpop.f32.mrf.mxu0
        %v2488 = vadd.f32 %v2367, %v2487
        %v2489 = vand.u32 %v1886, 4294901760
        %2490 = vmatmul.f32.gmra.mxu0 %v2489
        %v2491 = vpop.f32.mrf.mxu0
        %v2492 = vadd.f32 %v2373, %v2491
        %v2493 = vand.u32 %v1889, 4294901760
        %2494 = vmatmul.f32.gmra.mxu0 %v2493
        %v2495 = vpop.f32.mrf.mxu0
        %v2496 = vadd.f32 %v2379, %v2495
        %v2497 = vand.u32 %v1892, 4294901760
        %2498 = vmatmul.f32.gmra.mxu0 %v2497
        %v2499 = vpop.f32.mrf.mxu0
        %v2500 = vadd.f32 %v2385, %v2499
        %v2501 = vand.u32 %v1895, 4294901760
        %2502 = vmatmul.f32.gmra.mxu0 %v2501
        %v2503 = vpop.f32.mrf.mxu0
        %v2504 = vadd.f32 %v2391, %v2503
        %v2505 = vand.u32 %v1898, 4294901760
        %2506 = vmatmul.f32.gmra.mxu0 %v2505
        %v2507 = vpop.f32.mrf.mxu0
        %v2508 = vadd.f32 %v2397, %v2507
        %v2509 = vand.u32 %v1901, 4294901760
        %2510 = vmatmul.f32.gmra.mxu0 %v2509
        %v2511 = vpop.f32.mrf.mxu0
        %v2512 = vadd.f32 %v2403, %v2511
        %v2513 = vand.u32 %v1904, 4294901760
        %2514 = vmatmul.f32.gmra.mxu0 %v2513
        %v2515 = vpop.f32.mrf.mxu0
        %v2516 = vadd.f32 %v2409, %v2515
        %v2517 = vand.u32 %v1907, 4294901760
        %2518 = vmatmul.f32.gmra.mxu0 %v2517
        %v2519 = vpop.f32.mrf.mxu0
        %v2520 = vadd.f32 %v2415, %v2519
        %2521 = vdwg.mxu0
        %2522 = vmatpush.msra.mxu0 0.0
        %2523 = vmatpush.msra.mxu0 0.0
        %2524 = vmatpush.msra.mxu0 0.0
        %2525 = vmatpush.msra.mxu0 0.0
        %2526 = vmatpush.msra.mxu0 0.0
        %2527 = vmatpush.msra.mxu0 0.0
        %2528 = vmatpush.msra.mxu0 0.0
        %2529 = vmatpush.msra.mxu0 0.0
        %v2530 = vand.u32 %v1860, 4294901760
        %2531 = vmatpush.msra.mxu0 %v2530
        %v2532 = vand.u32 %v1859, 4294901760
        %2533 = vmatpush.msra.mxu0 %v2532
        %v2534 = vand.u32 %v1858, 4294901760
        %2535 = vmatpush.msra.mxu0 %v2534
        %v2536 = vand.u32 %v1857, 4294901760
        %2537 = vmatpush.msra.mxu0 %v2536
        %v2538 = vand.u32 %v1856, 4294901760
        %2539 = vmatpush.msra.mxu0 %v2538
        %v2540 = vand.u32 %v1855, 4294901760
        %2541 = vmatpush.msra.mxu0 %v2540
        %v2542 = vand.u32 %v1854, 4294901760
        %2543 = vmatpush.msra.mxu0 %v2542
        %v2544 = vand.u32 %v1853, 4294901760
        %2545 = vmatpush.msra.mxu0 %v2544
        %v2546 = vand.u32 %v1862, 4294901760
        %2547 = vmatmul.f32.gmra.mxu0 %v2546
        %v2548 = vpop.f32.mrf.mxu0
        %v2549 = vadd.f32 %v2460, %v2548
        %v2550 = vand.u32 %v1865, 4294901760
        %2551 = vmatmul.f32.gmra.mxu0 %v2550
        %v2552 = vpop.f32.mrf.mxu0
        %v2553 = vadd.f32 %v2464, %v2552
        %v2554 = vand.u32 %v1868, 4294901760
        %2555 = vmatmul.f32.gmra.mxu0 %v2554
        %v2556 = vpop.f32.mrf.mxu0
        %v2557 = vadd.f32 %v2468, %v2556
        %v2558 = vand.u32 %v1871, 4294901760
        %2559 = vmatmul.f32.gmra.mxu0 %v2558
        %v2560 = vpop.f32.mrf.mxu0
        %v2561 = vadd.f32 %v2472, %v2560
        %v2562 = vand.u32 %v1874, 4294901760
        %2563 = vmatmul.f32.gmra.mxu0 %v2562
        %v2564 = vpop.f32.mrf.mxu0
        %v2565 = vadd.f32 %v2476, %v2564
        %v2566 = vand.u32 %v1877, 4294901760
        %2567 = vmatmul.f32.gmra.mxu0 %v2566
        %v2568 = vpop.f32.mrf.mxu0
        %v2569 = vadd.f32 %v2480, %v2568
        %v2570 = vand.u32 %v1880, 4294901760
        %2571 = vmatmul.f32.gmra.mxu0 %v2570
        %v2572 = vpop.f32.mrf.mxu0
        %v2573 = vadd.f32 %v2484, %v2572
        %v2574 = vand.u32 %v1883, 4294901760
        %2575 = vmatmul.f32.gmra.mxu0 %v2574
        %v2576 = vpop.f32.mrf.mxu0
        %v2577 = vadd.f32 %v2488, %v2576
        %v2578 = vand.u32 %v1886, 4294901760
        %2579 = vmatmul.f32.gmra.mxu0 %v2578
        %v2580 = vpop.f32.mrf.mxu0
        %v2581 = vadd.f32 %v2492, %v2580
        %v2582 = vand.u32 %v1889, 4294901760
        %2583 = vmatmul.f32.gmra.mxu0 %v2582
        %v2584 = vpop.f32.mrf.mxu0
        %v2585 = vadd.f32 %v2496, %v2584
        %v2586 = vand.u32 %v1892, 4294901760
        %2587 = vmatmul.f32.gmra.mxu0 %v2586
        %v2588 = vpop.f32.mrf.mxu0
        %v2589 = vadd.f32 %v2500, %v2588
        %v2590 = vand.u32 %v1895, 4294901760
        %2591 = vmatmul.f32.gmra.mxu0 %v2590
        %v2592 = vpop.f32.mrf.mxu0
        %v2593 = vadd.f32 %v2504, %v2592
        %v2594 = vand.u32 %v1898, 4294901760
        %2595 = vmatmul.f32.gmra.mxu0 %v2594
        %v2596 = vpop.f32.mrf.mxu0
        %v2597 = vadd.f32 %v2508, %v2596
        %v2598 = vand.u32 %v1901, 4294901760
        %2599 = vmatmul.f32.gmra.mxu0 %v2598
        %v2600 = vpop.f32.mrf.mxu0
        %v2601 = vadd.f32 %v2512, %v2600
        %v2602 = vand.u32 %v1904, 4294901760
        %2603 = vmatmul.f32.gmra.mxu0 %v2602
        %v2604 = vpop.f32.mrf.mxu0
        %v2605 = vadd.f32 %v2516, %v2604
        %v2606 = vand.u32 %v1907, 4294901760
        %2607 = vmatmul.f32.gmra.mxu0 %v2606
        %v2608 = vpop.f32.mrf.mxu0
        %v2609 = vadd.f32 %v2520, %v2608
        %2610 = vdwg.mxu0
        %v2612 = vsel %vm294, %v1812, 0
        %v2615 = vsel %vm294, %v1813, 0
        %v2618 = vsel %vm294, %v1814, 0
        %v2621 = vsel %vm294, %v1815, 0
        %v2624 = vsel %vm294, %v1816, 0
        %v2627 = vsel %vm294, %v1817, 0
        %v2630 = vsel %vm294, %v1818, 0
        %v2633 = vsel %vm294, %v1819, 0
        %v2636 = vsel %vm294, %v1820, 0
        %v2639 = vsel %vm294, %v1821, 0
        %v2642 = vsel %vm294, %v1822, 0
        %v2645 = vsel %vm294, %v1823, 0
        %v2648 = vsel %vm294, %v1824, 0
        %v2651 = vsel %vm294, %v1825, 0
        %v2654 = vsel %vm294, %v1826, 0
        %v2657 = vsel %vm294, %v1827, 0
        %2659 = vmatpush.msra.mxu0 0.0
        %2660 = vmatpush.msra.mxu0 0.0
        %2661 = vmatpush.msra.mxu0 0.0
        %2662 = vmatpush.msra.mxu0 0.0
        %2663 = vmatpush.msra.mxu0 0.0
        %2664 = vmatpush.msra.mxu0 0.0
        %2665 = vmatpush.msra.mxu0 0.0
        %2666 = vmatpush.msra.mxu0 0.0
        %v2667 = vand.u32 %v1835, 4294901760
        %2668 = vmatpush.msra.mxu0 %v2667
        %v2669 = vand.u32 %v1834, 4294901760
        %2670 = vmatpush.msra.mxu0 %v2669
        %v2671 = vand.u32 %v1833, 4294901760
        %2672 = vmatpush.msra.mxu0 %v2671
        %v2673 = vand.u32 %v1832, 4294901760
        %2674 = vmatpush.msra.mxu0 %v2673
        %v2675 = vand.u32 %v1831, 4294901760
        %2676 = vmatpush.msra.mxu0 %v2675
        %v2677 = vand.u32 %v1830, 4294901760
        %2678 = vmatpush.msra.mxu0 %v2677
        %v2679 = vand.u32 %v1829, 4294901760
        %2680 = vmatpush.msra.mxu0 %v2679
        %v2681 = vand.u32 %v1828, 4294901760
        %2682 = vmatpush.msra.mxu0 %v2681
        %v2683 = vand.u32 %v2612, 4294901760
        %v2684 = vsub.f32 %v2612, %v2683
        %v2685 = vand.u32 %v2684, 4294901760
        %v2686 = vsub.f32 %v2684, %v2685
        %v2687 = vand.u32 %v2686, 4294901760
        %2688 = vmatmul.f32.gmra.mxu0 %v2687
        %v2689 = vpop.f32.mrf.mxu0
        %v2690 = vadd.f32 %v2549, %v2689
        %v2691 = vand.u32 %v2615, 4294901760
        %v2692 = vsub.f32 %v2615, %v2691
        %v2693 = vand.u32 %v2692, 4294901760
        %v2694 = vsub.f32 %v2692, %v2693
        %v2695 = vand.u32 %v2694, 4294901760
        %2696 = vmatmul.f32.gmra.mxu0 %v2695
        %v2697 = vpop.f32.mrf.mxu0
        %v2698 = vadd.f32 %v2553, %v2697
        %v2699 = vand.u32 %v2618, 4294901760
        %v2700 = vsub.f32 %v2618, %v2699
        %v2701 = vand.u32 %v2700, 4294901760
        %v2702 = vsub.f32 %v2700, %v2701
        %v2703 = vand.u32 %v2702, 4294901760
        %2704 = vmatmul.f32.gmra.mxu0 %v2703
        %v2705 = vpop.f32.mrf.mxu0
        %v2706 = vadd.f32 %v2557, %v2705
        %v2707 = vand.u32 %v2621, 4294901760
        %v2708 = vsub.f32 %v2621, %v2707
        %v2709 = vand.u32 %v2708, 4294901760
        %v2710 = vsub.f32 %v2708, %v2709
        %v2711 = vand.u32 %v2710, 4294901760
        %2712 = vmatmul.f32.gmra.mxu0 %v2711
        %v2713 = vpop.f32.mrf.mxu0
        %v2714 = vadd.f32 %v2561, %v2713
        %v2715 = vand.u32 %v2624, 4294901760
        %v2716 = vsub.f32 %v2624, %v2715
        %v2717 = vand.u32 %v2716, 4294901760
        %v2718 = vsub.f32 %v2716, %v2717
        %v2719 = vand.u32 %v2718, 4294901760
        %2720 = vmatmul.f32.gmra.mxu0 %v2719
        %v2721 = vpop.f32.mrf.mxu0
        %v2722 = vadd.f32 %v2565, %v2721
        %v2723 = vand.u32 %v2627, 4294901760
        %v2724 = vsub.f32 %v2627, %v2723
        %v2725 = vand.u32 %v2724, 4294901760
        %v2726 = vsub.f32 %v2724, %v2725
        %v2727 = vand.u32 %v2726, 4294901760
        %2728 = vmatmul.f32.gmra.mxu0 %v2727
        %v2729 = vpop.f32.mrf.mxu0
        %v2730 = vadd.f32 %v2569, %v2729
        %v2731 = vand.u32 %v2630, 4294901760
        %v2732 = vsub.f32 %v2630, %v2731
        %v2733 = vand.u32 %v2732, 4294901760
        %v2734 = vsub.f32 %v2732, %v2733
        %v2735 = vand.u32 %v2734, 4294901760
        %2736 = vmatmul.f32.gmra.mxu0 %v2735
        %v2737 = vpop.f32.mrf.mxu0
        %v2738 = vadd.f32 %v2573, %v2737
        %v2739 = vand.u32 %v2633, 4294901760
        %v2740 = vsub.f32 %v2633, %v2739
        %v2741 = vand.u32 %v2740, 4294901760
        %v2742 = vsub.f32 %v2740, %v2741
        %v2743 = vand.u32 %v2742, 4294901760
        %2744 = vmatmul.f32.gmra.mxu0 %v2743
        %v2745 = vpop.f32.mrf.mxu0
        %v2746 = vadd.f32 %v2577, %v2745
        %v2747 = vand.u32 %v2636, 4294901760
        %v2748 = vsub.f32 %v2636, %v2747
        %v2749 = vand.u32 %v2748, 4294901760
        %v2750 = vsub.f32 %v2748, %v2749
        %v2751 = vand.u32 %v2750, 4294901760
        %2752 = vmatmul.f32.gmra.mxu0 %v2751
        %v2753 = vpop.f32.mrf.mxu0
        %v2754 = vadd.f32 %v2581, %v2753
        %v2755 = vand.u32 %v2639, 4294901760
        %v2756 = vsub.f32 %v2639, %v2755
        %v2757 = vand.u32 %v2756, 4294901760
        %v2758 = vsub.f32 %v2756, %v2757
        %v2759 = vand.u32 %v2758, 4294901760
        %2760 = vmatmul.f32.gmra.mxu0 %v2759
        %v2761 = vpop.f32.mrf.mxu0
        %v2762 = vadd.f32 %v2585, %v2761
        %v2763 = vand.u32 %v2642, 4294901760
        %v2764 = vsub.f32 %v2642, %v2763
        %v2765 = vand.u32 %v2764, 4294901760
        %v2766 = vsub.f32 %v2764, %v2765
        %v2767 = vand.u32 %v2766, 4294901760
        %2768 = vmatmul.f32.gmra.mxu0 %v2767
        %v2769 = vpop.f32.mrf.mxu0
        %v2770 = vadd.f32 %v2589, %v2769
        %v2771 = vand.u32 %v2645, 4294901760
        %v2772 = vsub.f32 %v2645, %v2771
        %v2773 = vand.u32 %v2772, 4294901760
        %v2774 = vsub.f32 %v2772, %v2773
        %v2775 = vand.u32 %v2774, 4294901760
        %2776 = vmatmul.f32.gmra.mxu0 %v2775
        %v2777 = vpop.f32.mrf.mxu0
        %v2778 = vadd.f32 %v2593, %v2777
        %v2779 = vand.u32 %v2648, 4294901760
        %v2780 = vsub.f32 %v2648, %v2779
        %v2781 = vand.u32 %v2780, 4294901760
        %v2782 = vsub.f32 %v2780, %v2781
        %v2783 = vand.u32 %v2782, 4294901760
        %2784 = vmatmul.f32.gmra.mxu0 %v2783
        %v2785 = vpop.f32.mrf.mxu0
        %v2786 = vadd.f32 %v2597, %v2785
        %v2787 = vand.u32 %v2651, 4294901760
        %v2788 = vsub.f32 %v2651, %v2787
        %v2789 = vand.u32 %v2788, 4294901760
        %v2790 = vsub.f32 %v2788, %v2789
        %v2791 = vand.u32 %v2790, 4294901760
        %2792 = vmatmul.f32.gmra.mxu0 %v2791
        %v2793 = vpop.f32.mrf.mxu0
        %v2794 = vadd.f32 %v2601, %v2793
        %v2795 = vand.u32 %v2654, 4294901760
        %v2796 = vsub.f32 %v2654, %v2795
        %v2797 = vand.u32 %v2796, 4294901760
        %v2798 = vsub.f32 %v2796, %v2797
        %v2799 = vand.u32 %v2798, 4294901760
        %2800 = vmatmul.f32.gmra.mxu0 %v2799
        %v2801 = vpop.f32.mrf.mxu0
        %v2802 = vadd.f32 %v2605, %v2801
        %v2803 = vand.u32 %v2657, 4294901760
        %v2804 = vsub.f32 %v2657, %v2803
        %v2805 = vand.u32 %v2804, 4294901760
        %v2806 = vsub.f32 %v2804, %v2805
        %v2807 = vand.u32 %v2806, 4294901760
        %2808 = vmatmul.f32.gmra.mxu0 %v2807
        %v2809 = vpop.f32.mrf.mxu0
        %v2810 = vadd.f32 %v2609, %v2809
        %2811 = vdwg.mxu0
        %2812 = vmatpush.msra.mxu0 0.0
        %2813 = vmatpush.msra.mxu0 0.0
        %2814 = vmatpush.msra.mxu0 0.0
        %2815 = vmatpush.msra.mxu0 0.0
        %2816 = vmatpush.msra.mxu0 0.0
        %2817 = vmatpush.msra.mxu0 0.0
        %2818 = vmatpush.msra.mxu0 0.0
        %2819 = vmatpush.msra.mxu0 0.0
        %v2820 = vand.u32 %v1835, 4294901760
        %v2821 = vsub.f32 %v1835, %v2820
        %v2822 = vand.u32 %v2821, 4294901760
        %v2823 = vsub.f32 %v2821, %v2822
        %v2824 = vand.u32 %v2823, 4294901760
        %2825 = vmatpush.msra.mxu0 %v2824
        %v2826 = vand.u32 %v1834, 4294901760
        %v2827 = vsub.f32 %v1834, %v2826
        %v2828 = vand.u32 %v2827, 4294901760
        %v2829 = vsub.f32 %v2827, %v2828
        %v2830 = vand.u32 %v2829, 4294901760
        %2831 = vmatpush.msra.mxu0 %v2830
        %v2832 = vand.u32 %v1833, 4294901760
        %v2833 = vsub.f32 %v1833, %v2832
        %v2834 = vand.u32 %v2833, 4294901760
        %v2835 = vsub.f32 %v2833, %v2834
        %v2836 = vand.u32 %v2835, 4294901760
        %2837 = vmatpush.msra.mxu0 %v2836
        %v2838 = vand.u32 %v1832, 4294901760
        %v2839 = vsub.f32 %v1832, %v2838
        %v2840 = vand.u32 %v2839, 4294901760
        %v2841 = vsub.f32 %v2839, %v2840
        %v2842 = vand.u32 %v2841, 4294901760
        %2843 = vmatpush.msra.mxu0 %v2842
        %v2844 = vand.u32 %v1831, 4294901760
        %v2845 = vsub.f32 %v1831, %v2844
        %v2846 = vand.u32 %v2845, 4294901760
        %v2847 = vsub.f32 %v2845, %v2846
        %v2848 = vand.u32 %v2847, 4294901760
        %2849 = vmatpush.msra.mxu0 %v2848
        %v2850 = vand.u32 %v1830, 4294901760
        %v2851 = vsub.f32 %v1830, %v2850
        %v2852 = vand.u32 %v2851, 4294901760
        %v2853 = vsub.f32 %v2851, %v2852
        %v2854 = vand.u32 %v2853, 4294901760
        %2855 = vmatpush.msra.mxu0 %v2854
        %v2856 = vand.u32 %v1829, 4294901760
        %v2857 = vsub.f32 %v1829, %v2856
        %v2858 = vand.u32 %v2857, 4294901760
        %v2859 = vsub.f32 %v2857, %v2858
        %v2860 = vand.u32 %v2859, 4294901760
        %2861 = vmatpush.msra.mxu0 %v2860
        %v2862 = vand.u32 %v1828, 4294901760
        %v2863 = vsub.f32 %v1828, %v2862
        %v2864 = vand.u32 %v2863, 4294901760
        %v2865 = vsub.f32 %v2863, %v2864
        %v2866 = vand.u32 %v2865, 4294901760
        %2867 = vmatpush.msra.mxu0 %v2866
        %v2868 = vand.u32 %v2612, 4294901760
        %2869 = vmatmul.f32.gmra.mxu0 %v2868
        %v2870 = vpop.f32.mrf.mxu0
        %v2871 = vadd.f32 %v2690, %v2870
        %v2872 = vand.u32 %v2615, 4294901760
        %2873 = vmatmul.f32.gmra.mxu0 %v2872
        %v2874 = vpop.f32.mrf.mxu0
        %v2875 = vadd.f32 %v2698, %v2874
        %v2876 = vand.u32 %v2618, 4294901760
        %2877 = vmatmul.f32.gmra.mxu0 %v2876
        %v2878 = vpop.f32.mrf.mxu0
        %v2879 = vadd.f32 %v2706, %v2878
        %v2880 = vand.u32 %v2621, 4294901760
        %2881 = vmatmul.f32.gmra.mxu0 %v2880
        %v2882 = vpop.f32.mrf.mxu0
        %v2883 = vadd.f32 %v2714, %v2882
        %v2884 = vand.u32 %v2624, 4294901760
        %2885 = vmatmul.f32.gmra.mxu0 %v2884
        %v2886 = vpop.f32.mrf.mxu0
        %v2887 = vadd.f32 %v2722, %v2886
        %v2888 = vand.u32 %v2627, 4294901760
        %2889 = vmatmul.f32.gmra.mxu0 %v2888
        %v2890 = vpop.f32.mrf.mxu0
        %v2891 = vadd.f32 %v2730, %v2890
        %v2892 = vand.u32 %v2630, 4294901760
        %2893 = vmatmul.f32.gmra.mxu0 %v2892
        %v2894 = vpop.f32.mrf.mxu0
        %v2895 = vadd.f32 %v2738, %v2894
        %v2896 = vand.u32 %v2633, 4294901760
        %2897 = vmatmul.f32.gmra.mxu0 %v2896
        %v2898 = vpop.f32.mrf.mxu0
        %v2899 = vadd.f32 %v2746, %v2898
        %v2900 = vand.u32 %v2636, 4294901760
        %2901 = vmatmul.f32.gmra.mxu0 %v2900
        %v2902 = vpop.f32.mrf.mxu0
        %v2903 = vadd.f32 %v2754, %v2902
        %v2904 = vand.u32 %v2639, 4294901760
        %2905 = vmatmul.f32.gmra.mxu0 %v2904
        %v2906 = vpop.f32.mrf.mxu0
        %v2907 = vadd.f32 %v2762, %v2906
        %v2908 = vand.u32 %v2642, 4294901760
        %2909 = vmatmul.f32.gmra.mxu0 %v2908
        %v2910 = vpop.f32.mrf.mxu0
        %v2911 = vadd.f32 %v2770, %v2910
        %v2912 = vand.u32 %v2645, 4294901760
        %2913 = vmatmul.f32.gmra.mxu0 %v2912
        %v2914 = vpop.f32.mrf.mxu0
        %v2915 = vadd.f32 %v2778, %v2914
        %v2916 = vand.u32 %v2648, 4294901760
        %2917 = vmatmul.f32.gmra.mxu0 %v2916
        %v2918 = vpop.f32.mrf.mxu0
        %v2919 = vadd.f32 %v2786, %v2918
        %v2920 = vand.u32 %v2651, 4294901760
        %2921 = vmatmul.f32.gmra.mxu0 %v2920
        %v2922 = vpop.f32.mrf.mxu0
        %v2923 = vadd.f32 %v2794, %v2922
        %v2924 = vand.u32 %v2654, 4294901760
        %2925 = vmatmul.f32.gmra.mxu0 %v2924
        %v2926 = vpop.f32.mrf.mxu0
        %v2927 = vadd.f32 %v2802, %v2926
        %v2928 = vand.u32 %v2657, 4294901760
        %2929 = vmatmul.f32.gmra.mxu0 %v2928
        %v2930 = vpop.f32.mrf.mxu0
        %v2931 = vadd.f32 %v2810, %v2930
        %2932 = vdwg.mxu0
        %2933 = vmatpush.msra.mxu0 0.0
        %2934 = vmatpush.msra.mxu0 0.0
        %2935 = vmatpush.msra.mxu0 0.0
        %2936 = vmatpush.msra.mxu0 0.0
        %2937 = vmatpush.msra.mxu0 0.0
        %2938 = vmatpush.msra.mxu0 0.0
        %2939 = vmatpush.msra.mxu0 0.0
        %2940 = vmatpush.msra.mxu0 0.0
        %v2941 = vand.u32 %v1835, 4294901760
        %v2942 = vsub.f32 %v1835, %v2941
        %2943 = vmatpush.msra.mxu0 %v2942
        %v2944 = vand.u32 %v1834, 4294901760
        %v2945 = vsub.f32 %v1834, %v2944
        %2946 = vmatpush.msra.mxu0 %v2945
        %v2947 = vand.u32 %v1833, 4294901760
        %v2948 = vsub.f32 %v1833, %v2947
        %2949 = vmatpush.msra.mxu0 %v2948
        %v2950 = vand.u32 %v1832, 4294901760
        %v2951 = vsub.f32 %v1832, %v2950
        %2952 = vmatpush.msra.mxu0 %v2951
        %v2953 = vand.u32 %v1831, 4294901760
        %v2954 = vsub.f32 %v1831, %v2953
        %2955 = vmatpush.msra.mxu0 %v2954
        %v2956 = vand.u32 %v1830, 4294901760
        %v2957 = vsub.f32 %v1830, %v2956
        %2958 = vmatpush.msra.mxu0 %v2957
        %v2959 = vand.u32 %v1829, 4294901760
        %v2960 = vsub.f32 %v1829, %v2959
        %2961 = vmatpush.msra.mxu0 %v2960
        %v2962 = vand.u32 %v1828, 4294901760
        %v2963 = vsub.f32 %v1828, %v2962
        %2964 = vmatpush.msra.mxu0 %v2963
        %v2965 = vand.u32 %v2612, 4294901760
        %v2966 = vsub.f32 %v2612, %v2965
        %2967 = vmatmul.f32.gmra.mxu0 %v2966
        %v2968 = vpop.f32.mrf.mxu0
        %v2969 = vadd.f32 %v2871, %v2968
        %v2970 = vand.u32 %v2615, 4294901760
        %v2971 = vsub.f32 %v2615, %v2970
        %2972 = vmatmul.f32.gmra.mxu0 %v2971
        %v2973 = vpop.f32.mrf.mxu0
        %v2974 = vadd.f32 %v2875, %v2973
        %v2975 = vand.u32 %v2618, 4294901760
        %v2976 = vsub.f32 %v2618, %v2975
        %2977 = vmatmul.f32.gmra.mxu0 %v2976
        %v2978 = vpop.f32.mrf.mxu0
        %v2979 = vadd.f32 %v2879, %v2978
        %v2980 = vand.u32 %v2621, 4294901760
        %v2981 = vsub.f32 %v2621, %v2980
        %2982 = vmatmul.f32.gmra.mxu0 %v2981
        %v2983 = vpop.f32.mrf.mxu0
        %v2984 = vadd.f32 %v2883, %v2983
        %v2985 = vand.u32 %v2624, 4294901760
        %v2986 = vsub.f32 %v2624, %v2985
        %2987 = vmatmul.f32.gmra.mxu0 %v2986
        %v2988 = vpop.f32.mrf.mxu0
        %v2989 = vadd.f32 %v2887, %v2988
        %v2990 = vand.u32 %v2627, 4294901760
        %v2991 = vsub.f32 %v2627, %v2990
        %2992 = vmatmul.f32.gmra.mxu0 %v2991
        %v2993 = vpop.f32.mrf.mxu0
        %v2994 = vadd.f32 %v2891, %v2993
        %v2995 = vand.u32 %v2630, 4294901760
        %v2996 = vsub.f32 %v2630, %v2995
        %2997 = vmatmul.f32.gmra.mxu0 %v2996
        %v2998 = vpop.f32.mrf.mxu0
        %v2999 = vadd.f32 %v2895, %v2998
        %v3000 = vand.u32 %v2633, 4294901760
        %v3001 = vsub.f32 %v2633, %v3000
        %3002 = vmatmul.f32.gmra.mxu0 %v3001
        %v3003 = vpop.f32.mrf.mxu0
        %v3004 = vadd.f32 %v2899, %v3003
        %v3005 = vand.u32 %v2636, 4294901760
        %v3006 = vsub.f32 %v2636, %v3005
        %3007 = vmatmul.f32.gmra.mxu0 %v3006
        %v3008 = vpop.f32.mrf.mxu0
        %v3009 = vadd.f32 %v2903, %v3008
        %v3010 = vand.u32 %v2639, 4294901760
        %v3011 = vsub.f32 %v2639, %v3010
        %3012 = vmatmul.f32.gmra.mxu0 %v3011
        %v3013 = vpop.f32.mrf.mxu0
        %v3014 = vadd.f32 %v2907, %v3013
        %v3015 = vand.u32 %v2642, 4294901760
        %v3016 = vsub.f32 %v2642, %v3015
        %3017 = vmatmul.f32.gmra.mxu0 %v3016
        %v3018 = vpop.f32.mrf.mxu0
        %v3019 = vadd.f32 %v2911, %v3018
        %v3020 = vand.u32 %v2645, 4294901760
        %v3021 = vsub.f32 %v2645, %v3020
        %3022 = vmatmul.f32.gmra.mxu0 %v3021
        %v3023 = vpop.f32.mrf.mxu0
        %v3024 = vadd.f32 %v2915, %v3023
        %v3025 = vand.u32 %v2648, 4294901760
        %v3026 = vsub.f32 %v2648, %v3025
        %3027 = vmatmul.f32.gmra.mxu0 %v3026
        %v3028 = vpop.f32.mrf.mxu0
        %v3029 = vadd.f32 %v2919, %v3028
        %v3030 = vand.u32 %v2651, 4294901760
        %v3031 = vsub.f32 %v2651, %v3030
        %3032 = vmatmul.f32.gmra.mxu0 %v3031
        %v3033 = vpop.f32.mrf.mxu0
        %v3034 = vadd.f32 %v2923, %v3033
        %v3035 = vand.u32 %v2654, 4294901760
        %v3036 = vsub.f32 %v2654, %v3035
        %3037 = vmatmul.f32.gmra.mxu0 %v3036
        %v3038 = vpop.f32.mrf.mxu0
        %v3039 = vadd.f32 %v2927, %v3038
        %v3040 = vand.u32 %v2657, 4294901760
        %v3041 = vsub.f32 %v2657, %v3040
        %3042 = vmatmul.f32.gmra.mxu0 %v3041
        %v3043 = vpop.f32.mrf.mxu0
        %v3044 = vadd.f32 %v2931, %v3043
        %3045 = vdwg.mxu0
        %3046 = vmatpush.msra.mxu0 0.0
        %3047 = vmatpush.msra.mxu0 0.0
        %3048 = vmatpush.msra.mxu0 0.0
        %3049 = vmatpush.msra.mxu0 0.0
        %3050 = vmatpush.msra.mxu0 0.0
        %3051 = vmatpush.msra.mxu0 0.0
        %3052 = vmatpush.msra.mxu0 0.0
        %3053 = vmatpush.msra.mxu0 0.0
        %v3054 = vand.u32 %v1835, 4294901760
        %3055 = vmatpush.msra.mxu0 %v3054
        %v3056 = vand.u32 %v1834, 4294901760
        %3057 = vmatpush.msra.mxu0 %v3056
        %v3058 = vand.u32 %v1833, 4294901760
        %3059 = vmatpush.msra.mxu0 %v3058
        %v3060 = vand.u32 %v1832, 4294901760
        %3061 = vmatpush.msra.mxu0 %v3060
        %v3062 = vand.u32 %v1831, 4294901760
        %3063 = vmatpush.msra.mxu0 %v3062
        %v3064 = vand.u32 %v1830, 4294901760
        %3065 = vmatpush.msra.mxu0 %v3064
        %v3066 = vand.u32 %v1829, 4294901760
        %3067 = vmatpush.msra.mxu0 %v3066
        %v3068 = vand.u32 %v1828, 4294901760
        %3069 = vmatpush.msra.mxu0 %v3068
        %v3070 = vand.u32 %v2612, 4294901760
        %v3071 = vsub.f32 %v2612, %v3070
        %v3072 = vand.u32 %v3071, 4294901760
        %3073 = vmatmul.f32.gmra.mxu0 %v3072
        %v3074 = vpop.f32.mrf.mxu0
        %v3075 = vadd.f32 %v2969, %v3074
        %v3076 = vand.u32 %v2615, 4294901760
        %v3077 = vsub.f32 %v2615, %v3076
        %v3078 = vand.u32 %v3077, 4294901760
        %3079 = vmatmul.f32.gmra.mxu0 %v3078
        %v3080 = vpop.f32.mrf.mxu0
        %v3081 = vadd.f32 %v2974, %v3080
        %v3082 = vand.u32 %v2618, 4294901760
        %v3083 = vsub.f32 %v2618, %v3082
        %v3084 = vand.u32 %v3083, 4294901760
        %3085 = vmatmul.f32.gmra.mxu0 %v3084
        %v3086 = vpop.f32.mrf.mxu0
        %v3087 = vadd.f32 %v2979, %v3086
        %v3088 = vand.u32 %v2621, 4294901760
        %v3089 = vsub.f32 %v2621, %v3088
        %v3090 = vand.u32 %v3089, 4294901760
        %3091 = vmatmul.f32.gmra.mxu0 %v3090
        %v3092 = vpop.f32.mrf.mxu0
        %v3093 = vadd.f32 %v2984, %v3092
        %v3094 = vand.u32 %v2624, 4294901760
        %v3095 = vsub.f32 %v2624, %v3094
        %v3096 = vand.u32 %v3095, 4294901760
        %3097 = vmatmul.f32.gmra.mxu0 %v3096
        %v3098 = vpop.f32.mrf.mxu0
        %v3099 = vadd.f32 %v2989, %v3098
        %v3100 = vand.u32 %v2627, 4294901760
        %v3101 = vsub.f32 %v2627, %v3100
        %v3102 = vand.u32 %v3101, 4294901760
        %3103 = vmatmul.f32.gmra.mxu0 %v3102
        %v3104 = vpop.f32.mrf.mxu0
        %v3105 = vadd.f32 %v2994, %v3104
        %v3106 = vand.u32 %v2630, 4294901760
        %v3107 = vsub.f32 %v2630, %v3106
        %v3108 = vand.u32 %v3107, 4294901760
        %3109 = vmatmul.f32.gmra.mxu0 %v3108
        %v3110 = vpop.f32.mrf.mxu0
        %v3111 = vadd.f32 %v2999, %v3110
        %v3112 = vand.u32 %v2633, 4294901760
        %v3113 = vsub.f32 %v2633, %v3112
        %v3114 = vand.u32 %v3113, 4294901760
        %3115 = vmatmul.f32.gmra.mxu0 %v3114
        %v3116 = vpop.f32.mrf.mxu0
        %v3117 = vadd.f32 %v3004, %v3116
        %v3118 = vand.u32 %v2636, 4294901760
        %v3119 = vsub.f32 %v2636, %v3118
        %v3120 = vand.u32 %v3119, 4294901760
        %3121 = vmatmul.f32.gmra.mxu0 %v3120
        %v3122 = vpop.f32.mrf.mxu0
        %v3123 = vadd.f32 %v3009, %v3122
        %v3124 = vand.u32 %v2639, 4294901760
        %v3125 = vsub.f32 %v2639, %v3124
        %v3126 = vand.u32 %v3125, 4294901760
        %3127 = vmatmul.f32.gmra.mxu0 %v3126
        %v3128 = vpop.f32.mrf.mxu0
        %v3129 = vadd.f32 %v3014, %v3128
        %v3130 = vand.u32 %v2642, 4294901760
        %v3131 = vsub.f32 %v2642, %v3130
        %v3132 = vand.u32 %v3131, 4294901760
        %3133 = vmatmul.f32.gmra.mxu0 %v3132
        %v3134 = vpop.f32.mrf.mxu0
        %v3135 = vadd.f32 %v3019, %v3134
        %v3136 = vand.u32 %v2645, 4294901760
        %v3137 = vsub.f32 %v2645, %v3136
        %v3138 = vand.u32 %v3137, 4294901760
        %3139 = vmatmul.f32.gmra.mxu0 %v3138
        %v3140 = vpop.f32.mrf.mxu0
        %v3141 = vadd.f32 %v3024, %v3140
        %v3142 = vand.u32 %v2648, 4294901760
        %v3143 = vsub.f32 %v2648, %v3142
        %v3144 = vand.u32 %v3143, 4294901760
        %3145 = vmatmul.f32.gmra.mxu0 %v3144
        %v3146 = vpop.f32.mrf.mxu0
        %v3147 = vadd.f32 %v3029, %v3146
        %v3148 = vand.u32 %v2651, 4294901760
        %v3149 = vsub.f32 %v2651, %v3148
        %v3150 = vand.u32 %v3149, 4294901760
        %3151 = vmatmul.f32.gmra.mxu0 %v3150
        %v3152 = vpop.f32.mrf.mxu0
        %v3153 = vadd.f32 %v3034, %v3152
        %v3154 = vand.u32 %v2654, 4294901760
        %v3155 = vsub.f32 %v2654, %v3154
        %v3156 = vand.u32 %v3155, 4294901760
        %3157 = vmatmul.f32.gmra.mxu0 %v3156
        %v3158 = vpop.f32.mrf.mxu0
        %v3159 = vadd.f32 %v3039, %v3158
        %v3160 = vand.u32 %v2657, 4294901760
        %v3161 = vsub.f32 %v2657, %v3160
        %v3162 = vand.u32 %v3161, 4294901760
        %3163 = vmatmul.f32.gmra.mxu0 %v3162
        %v3164 = vpop.f32.mrf.mxu0
        %v3165 = vadd.f32 %v3044, %v3164
        %3166 = vdwg.mxu0
        %3167 = vmatpush.msra.mxu0 0.0
        %3168 = vmatpush.msra.mxu0 0.0
        %3169 = vmatpush.msra.mxu0 0.0
        %3170 = vmatpush.msra.mxu0 0.0
        %3171 = vmatpush.msra.mxu0 0.0
        %3172 = vmatpush.msra.mxu0 0.0
        %3173 = vmatpush.msra.mxu0 0.0
        %3174 = vmatpush.msra.mxu0 0.0
        %v3175 = vand.u32 %v1835, 4294901760
        %v3176 = vsub.f32 %v1835, %v3175
        %v3177 = vand.u32 %v3176, 4294901760
        %3178 = vmatpush.msra.mxu0 %v3177
        %v3179 = vand.u32 %v1834, 4294901760
        %v3180 = vsub.f32 %v1834, %v3179
        %v3181 = vand.u32 %v3180, 4294901760
        %3182 = vmatpush.msra.mxu0 %v3181
        %v3183 = vand.u32 %v1833, 4294901760
        %v3184 = vsub.f32 %v1833, %v3183
        %v3185 = vand.u32 %v3184, 4294901760
        %3186 = vmatpush.msra.mxu0 %v3185
        %v3187 = vand.u32 %v1832, 4294901760
        %v3188 = vsub.f32 %v1832, %v3187
        %v3189 = vand.u32 %v3188, 4294901760
        %3190 = vmatpush.msra.mxu0 %v3189
        %v3191 = vand.u32 %v1831, 4294901760
        %v3192 = vsub.f32 %v1831, %v3191
        %v3193 = vand.u32 %v3192, 4294901760
        %3194 = vmatpush.msra.mxu0 %v3193
        %v3195 = vand.u32 %v1830, 4294901760
        %v3196 = vsub.f32 %v1830, %v3195
        %v3197 = vand.u32 %v3196, 4294901760
        %3198 = vmatpush.msra.mxu0 %v3197
        %v3199 = vand.u32 %v1829, 4294901760
        %v3200 = vsub.f32 %v1829, %v3199
        %v3201 = vand.u32 %v3200, 4294901760
        %3202 = vmatpush.msra.mxu0 %v3201
        %v3203 = vand.u32 %v1828, 4294901760
        %v3204 = vsub.f32 %v1828, %v3203
        %v3205 = vand.u32 %v3204, 4294901760
        %3206 = vmatpush.msra.mxu0 %v3205
        %v3207 = vand.u32 %v2612, 4294901760
        %3208 = vmatmul.f32.gmra.mxu0 %v3207
        %v3209 = vpop.f32.mrf.mxu0
        %v3210 = vadd.f32 %v3075, %v3209
        %v3211 = vand.u32 %v2615, 4294901760
        %3212 = vmatmul.f32.gmra.mxu0 %v3211
        %v3213 = vpop.f32.mrf.mxu0
        %v3214 = vadd.f32 %v3081, %v3213
        %v3215 = vand.u32 %v2618, 4294901760
        %3216 = vmatmul.f32.gmra.mxu0 %v3215
        %v3217 = vpop.f32.mrf.mxu0
        %v3218 = vadd.f32 %v3087, %v3217
        %v3219 = vand.u32 %v2621, 4294901760
        %3220 = vmatmul.f32.gmra.mxu0 %v3219
        %v3221 = vpop.f32.mrf.mxu0
        %v3222 = vadd.f32 %v3093, %v3221
        %v3223 = vand.u32 %v2624, 4294901760
        %3224 = vmatmul.f32.gmra.mxu0 %v3223
        %v3225 = vpop.f32.mrf.mxu0
        %v3226 = vadd.f32 %v3099, %v3225
        %v3227 = vand.u32 %v2627, 4294901760
        %3228 = vmatmul.f32.gmra.mxu0 %v3227
        %v3229 = vpop.f32.mrf.mxu0
        %v3230 = vadd.f32 %v3105, %v3229
        %v3231 = vand.u32 %v2630, 4294901760
        %3232 = vmatmul.f32.gmra.mxu0 %v3231
        %v3233 = vpop.f32.mrf.mxu0
        %v3234 = vadd.f32 %v3111, %v3233
        %v3235 = vand.u32 %v2633, 4294901760
        %3236 = vmatmul.f32.gmra.mxu0 %v3235
        %v3237 = vpop.f32.mrf.mxu0
        %v3238 = vadd.f32 %v3117, %v3237
        %v3239 = vand.u32 %v2636, 4294901760
        %3240 = vmatmul.f32.gmra.mxu0 %v3239
        %v3241 = vpop.f32.mrf.mxu0
        %v3242 = vadd.f32 %v3123, %v3241
        %v3243 = vand.u32 %v2639, 4294901760
        %3244 = vmatmul.f32.gmra.mxu0 %v3243
        %v3245 = vpop.f32.mrf.mxu0
        %v3246 = vadd.f32 %v3129, %v3245
        %v3247 = vand.u32 %v2642, 4294901760
        %3248 = vmatmul.f32.gmra.mxu0 %v3247
        %v3249 = vpop.f32.mrf.mxu0
        %v3250 = vadd.f32 %v3135, %v3249
        %v3251 = vand.u32 %v2645, 4294901760
        %3252 = vmatmul.f32.gmra.mxu0 %v3251
        %v3253 = vpop.f32.mrf.mxu0
        %v3254 = vadd.f32 %v3141, %v3253
        %v3255 = vand.u32 %v2648, 4294901760
        %3256 = vmatmul.f32.gmra.mxu0 %v3255
        %v3257 = vpop.f32.mrf.mxu0
        %v3258 = vadd.f32 %v3147, %v3257
        %v3259 = vand.u32 %v2651, 4294901760
        %3260 = vmatmul.f32.gmra.mxu0 %v3259
        %v3261 = vpop.f32.mrf.mxu0
        %v3262 = vadd.f32 %v3153, %v3261
        %v3263 = vand.u32 %v2654, 4294901760
        %3264 = vmatmul.f32.gmra.mxu0 %v3263
        %v3265 = vpop.f32.mrf.mxu0
        %v3266 = vadd.f32 %v3159, %v3265
        %v3267 = vand.u32 %v2657, 4294901760
        %3268 = vmatmul.f32.gmra.mxu0 %v3267
        %v3269 = vpop.f32.mrf.mxu0
        %v3270 = vadd.f32 %v3165, %v3269
        %3271 = vdwg.mxu0
        %3272 = vmatpush.msra.mxu0 0.0
        %3273 = vmatpush.msra.mxu0 0.0
        %3274 = vmatpush.msra.mxu0 0.0
        %3275 = vmatpush.msra.mxu0 0.0
        %3276 = vmatpush.msra.mxu0 0.0
        %3277 = vmatpush.msra.mxu0 0.0
        %3278 = vmatpush.msra.mxu0 0.0
        %3279 = vmatpush.msra.mxu0 0.0
        %v3280 = vand.u32 %v1835, 4294901760
        %3281 = vmatpush.msra.mxu0 %v3280
        %v3282 = vand.u32 %v1834, 4294901760
        %3283 = vmatpush.msra.mxu0 %v3282
        %v3284 = vand.u32 %v1833, 4294901760
        %3285 = vmatpush.msra.mxu0 %v3284
        %v3286 = vand.u32 %v1832, 4294901760
        %3287 = vmatpush.msra.mxu0 %v3286
        %v3288 = vand.u32 %v1831, 4294901760
        %3289 = vmatpush.msra.mxu0 %v3288
        %v3290 = vand.u32 %v1830, 4294901760
        %3291 = vmatpush.msra.mxu0 %v3290
        %v3292 = vand.u32 %v1829, 4294901760
        %3293 = vmatpush.msra.mxu0 %v3292
        %v3294 = vand.u32 %v1828, 4294901760
        %3295 = vmatpush.msra.mxu0 %v3294
        %v3296 = vand.u32 %v2612, 4294901760
        %3297 = vmatmul.f32.gmra.mxu0 %v3296
        %v3298 = vpop.f32.mrf.mxu0
        %v3299 = vadd.f32 %v3210, %v3298
        %v3300 = vand.u32 %v2615, 4294901760
        %3301 = vmatmul.f32.gmra.mxu0 %v3300
        %v3302 = vpop.f32.mrf.mxu0
        %v3303 = vadd.f32 %v3214, %v3302
        %v3304 = vand.u32 %v2618, 4294901760
        %3305 = vmatmul.f32.gmra.mxu0 %v3304
        %v3306 = vpop.f32.mrf.mxu0
        %v3307 = vadd.f32 %v3218, %v3306
        %v3308 = vand.u32 %v2621, 4294901760
        %3309 = vmatmul.f32.gmra.mxu0 %v3308
        %v3310 = vpop.f32.mrf.mxu0
        %v3311 = vadd.f32 %v3222, %v3310
        %v3312 = vand.u32 %v2624, 4294901760
        %3313 = vmatmul.f32.gmra.mxu0 %v3312
        %v3314 = vpop.f32.mrf.mxu0
        %v3315 = vadd.f32 %v3226, %v3314
        %v3316 = vand.u32 %v2627, 4294901760
        %3317 = vmatmul.f32.gmra.mxu0 %v3316
        %v3318 = vpop.f32.mrf.mxu0
        %v3319 = vadd.f32 %v3230, %v3318
        %v3320 = vand.u32 %v2630, 4294901760
        %3321 = vmatmul.f32.gmra.mxu0 %v3320
        %v3322 = vpop.f32.mrf.mxu0
        %v3323 = vadd.f32 %v3234, %v3322
        %v3324 = vand.u32 %v2633, 4294901760
        %3325 = vmatmul.f32.gmra.mxu0 %v3324
        %v3326 = vpop.f32.mrf.mxu0
        %v3327 = vadd.f32 %v3238, %v3326
        %v3328 = vand.u32 %v2636, 4294901760
        %3329 = vmatmul.f32.gmra.mxu0 %v3328
        %v3330 = vpop.f32.mrf.mxu0
        %v3331 = vadd.f32 %v3242, %v3330
        %v3332 = vand.u32 %v2639, 4294901760
        %3333 = vmatmul.f32.gmra.mxu0 %v3332
        %v3334 = vpop.f32.mrf.mxu0
        %v3335 = vadd.f32 %v3246, %v3334
        %v3336 = vand.u32 %v2642, 4294901760
        %3337 = vmatmul.f32.gmra.mxu0 %v3336
        %v3338 = vpop.f32.mrf.mxu0
        %v3339 = vadd.f32 %v3250, %v3338
        %v3340 = vand.u32 %v2645, 4294901760
        %3341 = vmatmul.f32.gmra.mxu0 %v3340
        %v3342 = vpop.f32.mrf.mxu0
        %v3343 = vadd.f32 %v3254, %v3342
        %v3344 = vand.u32 %v2648, 4294901760
        %3345 = vmatmul.f32.gmra.mxu0 %v3344
        %v3346 = vpop.f32.mrf.mxu0
        %v3347 = vadd.f32 %v3258, %v3346
        %v3348 = vand.u32 %v2651, 4294901760
        %3349 = vmatmul.f32.gmra.mxu0 %v3348
        %v3350 = vpop.f32.mrf.mxu0
        %v3351 = vadd.f32 %v3262, %v3350
        %v3352 = vand.u32 %v2654, 4294901760
        %3353 = vmatmul.f32.gmra.mxu0 %v3352
        %v3354 = vpop.f32.mrf.mxu0
        %v3355 = vadd.f32 %v3266, %v3354
        %v3356 = vand.u32 %v2657, 4294901760
        %3357 = vmatmul.f32.gmra.mxu0 %v3356
        %v3358 = vpop.f32.mrf.mxu0
        %v3359 = vadd.f32 %v3270, %v3358
        %3360 = vdwg.mxu0
        %3361 = vst [vmem:[%s238 + $0x8] sm:$0xff] %v3299
        %3362 = vst [vmem:[%s238 + $0x18] sm:$0xff] %v3303
        %3363 = vst [vmem:[%s238 + $0x28] sm:$0xff] %v3307
        %3364 = vst [vmem:[%s238 + $0x38] sm:$0xff] %v3311
        %3365 = vst [vmem:[%s238 + $0x48] sm:$0xff] %v3315
        %3366 = vst [vmem:[%s238 + $0x58] sm:$0xff] %v3319
        %3367 = vst [vmem:[%s238 + $0x68] sm:$0xff] %v3323
        %3368 = vst [vmem:[%s238 + $0x78] sm:$0xff] %v3327
        %3369 = vst [vmem:[%s238 + $0x88] sm:$0xff] %v3331
        %3370 = vst [vmem:[%s238 + $0x98] sm:$0xff] %v3335
        %3371 = vst [vmem:[%s238 + $0xa8] sm:$0xff] %v3339
        %3372 = vst [vmem:[%s238 + $0xb8] sm:$0xff] %v3343
        %3373 = vst [vmem:[%s238 + $0xc8] sm:$0xff] %v3347
        %3374 = vst [vmem:[%s238 + $0xd8] sm:$0xff] %v3351
        %3375 = vst [vmem:[%s238 + $0xe8] sm:$0xff] %v3355
        %3376 = vst [vmem:[%s238 + $0xf8] sm:$0xff] %v3359
        %s3377 = sand.u32 %s102, 1
        %s3378 = scalar_lea.sflag [#allocation4], %s3377
        %s3379 = sand.u32 %s102, 1
        %s3380 = smul.addr %s3379, 256
        %s3381 = scalar_lea.vmem [#allocation7], %s3380
        // Predicated region
        $region37: #{tpu_custom_call.1} parent=27 // pred_check
          %p3382 = pneg %p112
        $region38: #{tpu_custom_call.1} parent=27 // pred_check_branch
          %3384 = sbr.rel (%p3382) target = $region40
        $region39: #{tpu_custom_call.1} parent=27 // pred_region
          %s3385 = smul.u32 4, %s25
          %s3386 = smul.u32 4, %s26
          %3388 = vsyncadd %s3378, 0
          %s3389 = smul.addr %s27, 2
          %s3390 = smul.addr %s3386, 4
          %s3391 = sadd.s32 %s3389, %s3390
          %s3392 = smul.addr %s3385, 16
          %s3393 = sadd.s32 %s3391, %s3392
          %s3394 = smul.addr %s3393, 8
          %s3395 = scalar_lea.hbm %s2, %s3394
          %s3396 = sshll.u32 %s3381, 4
          %s3397 = int_to_ptr.vmem [resolvable:$true] %s3396
          %s3398 = sshll.u32 %s3395, 4
          %s3399 = int_to_ptr.hbm [resolvable:$true] %s3398
          %3404 = dma.vmem_to_hbm [thread:$0]  %s3397, 4096, %s3399, %s3378, 256, 512, 16
        $region40: #{tpu_custom_call.1} parent=27 // pred_fallthru
          _
      $region28: #{tpu_custom_call.1} parent=5 // pred_fallthru
        _
      %p3405 = scmp.le.s32.totalorder 2, %s15
      // Predicated region
      $region41: #{tpu_custom_call.1} parent=5 // pred_check
        %p3406 = pneg %p3405
      $region42: #{tpu_custom_call.1} parent=5 // pred_check_branch
        %3408 = sbr.rel (%p3406) target = $region44
      $region43: #{tpu_custom_call.1} parent=5 // pred_region
        %s3409 = ssub.s32 %s15, 2
        // Predicated region
        $region45: #{tpu_custom_call.1} parent=43 // pred_check
          %p3410 = pneg %p118
        $region46: #{tpu_custom_call.1} parent=43 // pred_check_branch
          %3412 = sbr.rel (%p3410) target = $region48
        $region47: #{tpu_custom_call.1} parent=43 // pred_region
          %s3413 = sand.u32 %s103, 1
          %s3414 = scalar_lea.sflag [#allocation4], %s3413
          %s3415 = sand.u32 %s103, 1
          %s3416 = smul.addr %s3415, 256
          %s3417 = scalar_lea.vmem [#allocation7], %s3416
          %3419 = dma.done %s3414, 4096
        $region48: #{tpu_custom_call.1} parent=43 // pred_fallthru
          _
      $region44: #{tpu_custom_call.1} parent=5 // pred_fallthru
        _
    $region6: #{tpu_custom_call.1} parent=1 // loop_footer
      %s19 = sadd.s32 1, %s15
    $region7: #{tpu_custom_call.1} parent=1 // loop_footer_branch
      %14 = sbr.rel target = $region3
    $region8: #{tpu_custom_call.1} parent=1 // loop_exit
      _
    %3420 = vsyncpa [#allocation3], 1
    %s3421 = scalar_lea.sflag [#allocation3], 1
    %3422 = vsyncpa %s3421, 1
    %3423 = vsyncpa [#allocation6], 1
    %3424 = vsyncpa [#allocation4], 1
    %s3425 = scalar_lea.sflag [#allocation4], 1
    %3426 = vsyncpa %s3425, 1

</llo_original>
